<compile_context>
chip_gen: v5e
topology: v5e:2x2
jax: 0.10.0
libtpu: 0.0.40
codegen_flags: <defaults>
</compile_context>

<pallas_src>
import jax
import jax.numpy as jnp
from jax.experimental import pallas as pl
from jax.experimental.pallas import tpu as pltpu


def _round_up(x, m):
    return (x + m - 1) // m * m


# ----------------------------------------------------------------------------
# Pallas matmul kernel: out = act(x @ w + b), tiled (M, N, K) with f32 acc.
#   x: (M, K) f32 activations (tiny at B=2; cast to bf16 in-kernel for the MXU)
#   w: (K, N) bf16 pre-transposed weights (the dominant HBM traffic)
#   b: (N,)  f32 bias
# ----------------------------------------------------------------------------
def matmul_bias_act(x, w, b, act="none"):
    M, K = x.shape
    N = w.shape[1]

    # --- tile selection (weight-streaming oriented: deep K, wide N, small M) ---
    tm = _round_up(M, 8) if M <= 256 else 256
    Mp = _round_up(M, tm)

    tk = min(1024, _round_up(K, 128))          # deep reduction tile (>=256 when K allows)
    Kp = _round_up(K, tk)

    if N >= 512 and N % 512 == 0:
        tn = 512                               # >=2 parallel N blocks for fc1/fc2 (megacore)
    elif N >= 256 and N % 256 == 0:
        tn = 256
    else:
        tn = 128
    Np = _round_up(N, tn)

    xp = jnp.pad(x.astype(jnp.float32), ((0, Mp - M), (0, Kp - K)))
    wp = jnp.pad(w, ((0, Kp - K), (0, Np - N))).astype(jnp.bfloat16)
    bp = jnp.pad(b.astype(jnp.float32), (0, Np - N)).reshape(1, Np)

    grid = (Mp // tm, Np // tn, Kp // tk)

    def kernel(x_ref, w_ref, b_ref, o_ref, acc_ref):
        @pl.when(pl.program_id(2) == 0)
        def _():
            acc_ref[...] = jnp.zeros_like(acc_ref)

        acc_ref[...] += jnp.dot(x_ref[...].astype(jnp.bfloat16), w_ref[...],
                                preferred_element_type=jnp.float32)

        @pl.when(pl.program_id(2) == pl.num_programs(2) - 1)
        def _():
            y = acc_ref[...] + b_ref[...]
            if act == "relu":
                y = jnp.maximum(y, 0.0)
            o_ref[...] = y.astype(o_ref.dtype)

    out = pl.pallas_call(
        kernel,
        out_shape=jax.ShapeDtypeStruct((Mp, Np), jnp.float32),
        grid_spec=pltpu.PrefetchScalarGridSpec(
            num_scalar_prefetch=0,
            grid=grid,
            in_specs=[
                pl.BlockSpec((tm, tk), lambda i, j, k: (i, k)),
                pl.BlockSpec((tk, tn), lambda i, j, k: (k, j)),
                pl.BlockSpec((1, tn), lambda i, j, k: (0, j)),
            ],
            out_specs=pl.BlockSpec((tm, tn), lambda i, j, k: (i, j)),
            scratch_shapes=[pltpu.VMEM((tm, tn), jnp.float32)],
        ),
        compiler_params=pltpu.CompilerParams(
            dimension_semantics=("parallel", "parallel", "arbitrary"),
            vmem_limit_bytes=32 * 1024 * 1024),
    )(xp, wp, bp)
    return out[:M, :N]


# ----------------------------------------------------------------------------
# Parameter init (PyTorch-default-like uniform(-1/sqrt(fan_in), 1/sqrt(fan_in))).
# Weights stored pre-transposed (in, out) and in bf16; biases in f32.
# ----------------------------------------------------------------------------
def init_params(key, input_size):
    def uni(k, shape, fan_in):
        bound = 1.0 / jnp.sqrt(float(fan_in))
        return jax.random.uniform(k, shape, jnp.float32, -bound, bound)

    dims = [(input_size, 4096), (4096, 1024), (1024, 128), (128, 6)]
    keys = jax.random.split(key, 2 * len(dims))
    fc = []
    for li, (fan_in, fan_out) in enumerate(dims):
        w = uni(keys[2 * li], (fan_in, fan_out), fan_in).astype(jnp.bfloat16)
        b = uni(keys[2 * li + 1], (fan_out,), fan_in)
        fc.append((w, b))
    return {"fc": fc}


# ----------------------------------------------------------------------------
# Forward pass (matches CameraParamRegressor_6.forward, inference semantics).
# ----------------------------------------------------------------------------
def camera_param_regressor_forward(params, x):
    B = x.shape[0]
    # nn.Flatten(): row-major flatten of all trailing dims, same as x.view(B, -1).
    x = x.reshape(B, -1).astype(jnp.float32)

    # TODO(synk): nn.Dropout(p=0.5) layers not applied (eval-mode identity; no RNG masking).
    (w1, b1), (w2, b2), (w3, b3), (w4, b4) = params["fc"]
    x = matmul_bias_act(x, w1, b1, act="relu")   # (B, 4096)
    x = matmul_bias_act(x, w2, b2, act="relu")   # (B, 1024)
    x = matmul_bias_act(x, w3, b3, act="relu")   # (B, 128)
    x = matmul_bias_act(x, w4, b4, act="none")   # (B, 6)   final Linear, no activation
    return x


if __name__ == "__main__":
    key = jax.random.PRNGKey(0)
    pkey, xkey = jax.random.split(key)

    # Intended use case: AlexNet 6x6x256 feature map -> input_size = 9216.
    input_size = 256 * 6 * 6
    params = init_params(pkey, input_size)

    x = jax.random.normal(xkey, (2, 256, 6, 6), dtype=jnp.float32)

    fwd = jax.jit(camera_param_regressor_forward)
    out = jax.block_until_ready(fwd(params, x))

    assert out.shape == (2, 6), out.shape
    assert bool(jnp.all(jnp.isfinite(out)))
    print("KERNEL_OK")
</pallas_src>

<mosaic_0001>
module attributes {stable_mosaic.version = 11 : i64} {
  func.func @kernel(%arg0: i32, %arg1: i32, %arg2: i32, %arg3: memref<8x1024xf32, #tpu.memory_space<vmem>>, %arg4: memref<1024x512xbf16, #tpu.memory_space<vmem>>, %arg5: memref<1x512xf32, #tpu.memory_space<vmem>>, %arg6: memref<8x512xf32, #tpu.memory_space<vmem>>, %arg7: memref<8x512xf32, #tpu.memory_space<vmem>>) attributes {dimension_semantics = [#tpu.dimension_semantics<parallel>, #tpu.dimension_semantics<parallel>, #tpu.dimension_semantics<arbitrary>], iteration_bounds = array<i64: 1, 8, 9>, scalar_prefetch = 0 : i64, scratch_operands = 1 : i64, tpu.core_type = #tpu.core_type<tc>, window_params = [{transform_indices = @transform_0, window_bounds = array<i64: 8, 1024>}, {transform_indices = @transform_1, window_bounds = array<i64: 1024, 512>}, {transform_indices = @transform_2, window_bounds = array<i64: 1, 512>}, {transform_indices = @transform_3, window_bounds = array<i64: 8, 512>}]} {
    %c0_i32 = arith.constant 0 : i32
    %0 = arith.cmpi eq, %arg2, %c0_i32 : i32
    %1 = arith.extui %0 : i1 to i32
    %c0_i32_0 = arith.constant 0 : i32
    %2 = arith.cmpi ne, %1, %c0_i32_0 : i32
    scf.if %2 {
      %cst_9 = arith.constant 0.000000e+00 : f32
      %13 = vector.broadcast %cst_9 : f32 to vector<8x512xf32>
      %c0_10 = arith.constant 0 : index
      %c0_11 = arith.constant 0 : index
      %14 = vector.load %arg7[%c0_10, %c0_11] : memref<8x512xf32, #tpu.memory_space<vmem>>, vector<8x512xf32>
      tpu.vector_store %arg7[%c0_10, %c0_11], %13 {strides = array<i32>} : memref<8x512xf32, #tpu.memory_space<vmem>>, vector<8x512xf32>,
    } else {
    }
    %c0 = arith.constant 0 : index
    %c0_1 = arith.constant 0 : index
    %3 = vector.load %arg7[%c0, %c0_1] : memref<8x512xf32, #tpu.memory_space<vmem>>, vector<8x512xf32>
    %c0_2 = arith.constant 0 : index
    %c0_3 = arith.constant 0 : index
    %4 = vector.load %arg3[%c0_2, %c0_3] : memref<8x1024xf32, #tpu.memory_space<vmem>>, vector<8x1024xf32>
    %5 = arith.truncf %4 : vector<8x1024xf32> to vector<8x1024xbf16>
    %c0_4 = arith.constant 0 : index
    %c0_5 = arith.constant 0 : index
    %6 = vector.load %arg4[%c0_4, %c0_5] : memref<1024x512xbf16, #tpu.memory_space<vmem>>, vector<1024x512xbf16>
    %cst = arith.constant dense<0.000000e+00> : vector<8x512xf32>
    %7 = tpu.matmul %5, %6, %cst {dimension_numbers = #tpu.dot_dimension_numbers<[1], [0], [0], [1], [0, 0, 1, 1], [], []>} : vector<8x1024xbf16>, vector<1024x512xbf16>, vector<8x512xf32> -> vector<8x512xf32>
    %8 = arith.addf %3, %7 : vector<8x512xf32>
    %c0_6 = arith.constant 0 : index
    %c0_7 = arith.constant 0 : index
    %9 = vector.load %arg7[%c0_6, %c0_7] : memref<8x512xf32, #tpu.memory_space<vmem>>, vector<8x512xf32>
    tpu.vector_store %arg7[%c0_6, %c0_7], %8 {strides = array<i32>} : memref<8x512xf32, #tpu.memory_space<vmem>>, vector<8x512xf32>,
    %c8_i32 = arith.constant 8 : i32
    %10 = arith.cmpi eq, %arg2, %c8_i32 : i32
    %11 = arith.extui %10 : i1 to i32
    %c0_i32_8 = arith.constant 0 : i32
    %12 = arith.cmpi ne, %11, %c0_i32_8 : i32
    scf.if %12 {
      %c0_9 = arith.constant 0 : index
      %c0_10 = arith.constant 0 : index
      %13 = vector.load %arg7[%c0_9, %c0_10] : memref<8x512xf32, #tpu.memory_space<vmem>>, vector<8x512xf32>
      %c0_11 = arith.constant 0 : index
      %c0_12 = arith.constant 0 : index
      %14 = vector.load %arg5[%c0_11, %c0_12] : memref<1x512xf32, #tpu.memory_space<vmem>>, vector<1x512xf32>
      %15 = vector.broadcast %14 : vector<1x512xf32> to vector<8x512xf32>
      %16 = arith.addf %13, %15 : vector<8x512xf32>
      %cst_13 = arith.constant 0.000000e+00 : f32
      %17 = vector.broadcast %cst_13 : f32 to vector<8x512xf32>
      %18 = arith.maximumf %16, %17 : vector<8x512xf32>
      %c0_14 = arith.constant 0 : index
      %c0_15 = arith.constant 0 : index
      %19 = vector.load %arg6[%c0_14, %c0_15] : memref<8x512xf32, #tpu.memory_space<vmem>>, vector<8x512xf32>
      tpu.vector_store %arg6[%c0_14, %c0_15], %18 {strides = array<i32>} : memref<8x512xf32, #tpu.memory_space<vmem>>, vector<8x512xf32>,
    } else {
    }
    return
  }
  func.func @transform_0(%arg0: i32, %arg1: i32, %arg2: i32) -> (i32, i32) {
    %c0_i32 = arith.constant 0 : i32
    return %arg0, %arg2 : i32, i32
  }
  func.func @transform_1(%arg0: i32, %arg1: i32, %arg2: i32) -> (i32, i32) {
    %c0_i32 = arith.constant 0 : i32
    return %arg2, %arg1 : i32, i32
  }
  func.func @transform_2(%arg0: i32, %arg1: i32, %arg2: i32) -> (i32, i32) {
    %c0_i32 = arith.constant 0 : i32
    %c0_i32_0 = arith.constant 0 : i32
    return %c0_i32, %arg1 : i32, i32
  }
  func.func @transform_3(%arg0: i32, %arg1: i32, %arg2: i32) -> (i32, i32) {
    %c0_i32 = arith.constant 0 : i32
    return %arg0, %arg1 : i32, i32
  }
}

module attributes {stable_mosaic.version = 11 : i64} {
  func.func @kernel(%arg0: i32, %arg1: i32, %arg2: i32, %arg3: memref<8x1024xf32, #tpu.memory_space<vmem>>, %arg4: memref<1024x512xbf16, #tpu.memory_space<vmem>>, %arg5: memref<1x512xf32, #tpu.memory_space<vmem>>, %arg6: memref<8x512xf32, #tpu.memory_space<vmem>>, %arg7: memref<8x512xf32, #tpu.memory_space<vmem>>) attributes {dimension_semantics = [#tpu.dimension_semantics<parallel>, #tpu.dimension_semantics<parallel>, #tpu.dimension_semantics<arbitrary>], iteration_bounds = array<i64: 1, 2, 4>, scalar_prefetch = 0 : i64, scratch_operands = 1 : i64, tpu.core_type = #tpu.core_type<tc>, window_params = [{transform_indices = @transform_0, window_bounds = array<i64: 8, 1024>}, {transform_indices = @transform_1, window_bounds = array<i64: 1024, 512>}, {transform_indices = @transform_2, window_bounds = array<i64: 1, 512>}, {transform_indices = @transform_3, window_bounds = array<i64: 8, 512>}]} {
    %c0_i32 = arith.constant 0 : i32
    %0 = arith.cmpi eq, %arg2, %c0_i32 : i32
    %1 = arith.extui %0 : i1 to i32
    %c0_i32_0 = arith.constant 0 : i32
    %2 = arith.cmpi ne, %1, %c0_i32_0 : i32
    scf.if %2 {
      %cst_9 = arith.constant 0.000000e+00 : f32
      %13 = vector.broadcast %cst_9 : f32 to vector<8x512xf32>
      %c0_10 = arith.constant 0 : index
      %c0_11 = arith.constant 0 : index
      %14 = vector.load %arg7[%c0_10, %c0_11] : memref<8x512xf32, #tpu.memory_space<vmem>>, vector<8x512xf32>
      tpu.vector_store %arg7[%c0_10, %c0_11], %13 {strides = array<i32>} : memref<8x512xf32, #tpu.memory_space<vmem>>, vector<8x512xf32>,
    } else {
    }
    %c0 = arith.constant 0 : index
    %c0_1 = arith.constant 0 : index
    %3 = vector.load %arg7[%c0, %c0_1] : memref<8x512xf32, #tpu.memory_space<vmem>>, vector<8x512xf32>
    %c0_2 = arith.constant 0 : index
    %c0_3 = arith.constant 0 : index
    %4 = vector.load %arg3[%c0_2, %c0_3] : memref<8x1024xf32, #tpu.memory_space<vmem>>, vector<8x1024xf32>
    %5 = arith.truncf %4 : vector<8x1024xf32> to vector<8x1024xbf16>
    %c0_4 = arith.constant 0 : index
    %c0_5 = arith.constant 0 : index
    %6 = vector.load %arg4[%c0_4, %c0_5] : memref<1024x512xbf16, #tpu.memory_space<vmem>>, vector<1024x512xbf16>
    %cst = arith.constant dense<0.000000e+00> : vector<8x512xf32>
    %7 = tpu.matmul %5, %6, %cst {dimension_numbers = #tpu.dot_dimension_numbers<[1], [0], [0], [1], [0, 0, 1, 1], [], []>} : vector<8x1024xbf16>, vector<1024x512xbf16>, vector<8x512xf32> -> vector<8x512xf32>
    %8 = arith.addf %3, %7 : vector<8x512xf32>
    %c0_6 = arith.constant 0 : index
    %c0_7 = arith.constant 0 : index
    %9 = vector.load %arg7[%c0_6, %c0_7] : memref<8x512xf32, #tpu.memory_space<vmem>>, vector<8x512xf32>
    tpu.vector_store %arg7[%c0_6, %c0_7], %8 {strides = array<i32>} : memref<8x512xf32, #tpu.memory_space<vmem>>, vector<8x512xf32>,
    %c3_i32 = arith.constant 3 : i32
    %10 = arith.cmpi eq, %arg2, %c3_i32 : i32
    %11 = arith.extui %10 : i1 to i32
    %c0_i32_8 = arith.constant 0 : i32
    %12 = arith.cmpi ne, %11, %c0_i32_8 : i32
    scf.if %12 {
      %c0_9 = arith.constant 0 : index
      %c0_10 = arith.constant 0 : index
      %13 = vector.load %arg7[%c0_9, %c0_10] : memref<8x512xf32, #tpu.memory_space<vmem>>, vector<8x512xf32>
      %c0_11 = arith.constant 0 : index
      %c0_12 = arith.constant 0 : index
      %14 = vector.load %arg5[%c0_11, %c0_12] : memref<1x512xf32, #tpu.memory_space<vmem>>, vector<1x512xf32>
      %15 = vector.broadcast %14 : vector<1x512xf32> to vector<8x512xf32>
      %16 = arith.addf %13, %15 : vector<8x512xf32>
      %cst_13 = arith.constant 0.000000e+00 : f32
      %17 = vector.broadcast %cst_13 : f32 to vector<8x512xf32>
      %18 = arith.maximumf %16, %17 : vector<8x512xf32>
      %c0_14 = arith.constant 0 : index
      %c0_15 = arith.constant 0 : index
      %19 = vector.load %arg6[%c0_14, %c0_15] : memref<8x512xf32, #tpu.memory_space<vmem>>, vector<8x512xf32>
      tpu.vector_store %arg6[%c0_14, %c0_15], %18 {strides = array<i32>} : memref<8x512xf32, #tpu.memory_space<vmem>>, vector<8x512xf32>,
    } else {
    }
    return
  }
  func.func @transform_0(%arg0: i32, %arg1: i32, %arg2: i32) -> (i32, i32) {
    %c0_i32 = arith.constant 0 : i32
    return %arg0, %arg2 : i32, i32
  }
  func.func @transform_1(%arg0: i32, %arg1: i32, %arg2: i32) -> (i32, i32) {
    %c0_i32 = arith.constant 0 : i32
    return %arg2, %arg1 : i32, i32
  }
  func.func @transform_2(%arg0: i32, %arg1: i32, %arg2: i32) -> (i32, i32) {
    %c0_i32 = arith.constant 0 : i32
    %c0_i32_0 = arith.constant 0 : i32
    return %c0_i32, %arg1 : i32, i32
  }
  func.func @transform_3(%arg0: i32, %arg1: i32, %arg2: i32) -> (i32, i32) {
    %c0_i32 = arith.constant 0 : i32
    return %arg0, %arg1 : i32, i32
  }
}

module attributes {stable_mosaic.version = 11 : i64} {
  func.func @kernel(%arg0: i32, %arg1: i32, %arg2: i32, %arg3: memref<8x1024xf32, #tpu.memory_space<vmem>>, %arg4: memref<1024x128xbf16, #tpu.memory_space<vmem>>, %arg5: memref<1x128xf32, #tpu.memory_space<vmem>>, %arg6: memref<8x128xf32, #tpu.memory_space<vmem>>, %arg7: memref<8x128xf32, #tpu.memory_space<vmem>>) attributes {dimension_semantics = [#tpu.dimension_semantics<parallel>, #tpu.dimension_semantics<parallel>, #tpu.dimension_semantics<arbitrary>], iteration_bounds = array<i64: 1, 1, 1>, scalar_prefetch = 0 : i64, scratch_operands = 1 : i64, tpu.core_type = #tpu.core_type<tc>, window_params = [{transform_indices = @transform_0, window_bounds = array<i64: 8, 1024>}, {transform_indices = @transform_1, window_bounds = array<i64: 1024, 128>}, {transform_indices = @transform_2, window_bounds = array<i64: 1, 128>}, {transform_indices = @transform_3, window_bounds = array<i64: 8, 128>}]} {
    %c0_i32 = arith.constant 0 : i32
    %0 = arith.cmpi eq, %arg2, %c0_i32 : i32
    %1 = arith.extui %0 : i1 to i32
    %c0_i32_0 = arith.constant 0 : i32
    %2 = arith.cmpi ne, %1, %c0_i32_0 : i32
    scf.if %2 {
      %cst_10 = arith.constant 0.000000e+00 : f32
      %13 = vector.broadcast %cst_10 : f32 to vector<8x128xf32>
      %c0_11 = arith.constant 0 : index
      %c0_12 = arith.constant 0 : index
      %14 = vector.load %arg7[%c0_11, %c0_12] : memref<8x128xf32, #tpu.memory_space<vmem>>, vector<8x128xf32>
      tpu.vector_store %arg7[%c0_11, %c0_12], %13 {strides = array<i32>} : memref<8x128xf32, #tpu.memory_space<vmem>>, vector<8x128xf32>,
    } else {
    }
    %c0 = arith.constant 0 : index
    %c0_1 = arith.constant 0 : index
    %3 = vector.load %arg7[%c0, %c0_1] : memref<8x128xf32, #tpu.memory_space<vmem>>, vector<8x128xf32>
    %c0_2 = arith.constant 0 : index
    %c0_3 = arith.constant 0 : index
    %4 = vector.load %arg3[%c0_2, %c0_3] : memref<8x1024xf32, #tpu.memory_space<vmem>>, vector<8x1024xf32>
    %5 = arith.truncf %4 : vector<8x1024xf32> to vector<8x1024xbf16>
    %c0_4 = arith.constant 0 : index
    %c0_5 = arith.constant 0 : index
    %6 = vector.load %arg4[%c0_4, %c0_5] : memref<1024x128xbf16, #tpu.memory_space<vmem>>, vector<1024x128xbf16>
    %cst = arith.constant dense<0.000000e+00> : vector<8x128xf32>
    %7 = tpu.matmul %5, %6, %cst {dimension_numbers = #tpu.dot_dimension_numbers<[1], [0], [0], [1], [0, 0, 1, 1], [], []>} : vector<8x1024xbf16>, vector<1024x128xbf16>, vector<8x128xf32> -> vector<8x128xf32>
    %8 = arith.addf %3, %7 : vector<8x128xf32>
    %c0_6 = arith.constant 0 : index
    %c0_7 = arith.constant 0 : index
    %9 = vector.load %arg7[%c0_6, %c0_7] : memref<8x128xf32, #tpu.memory_space<vmem>>, vector<8x128xf32>
    tpu.vector_store %arg7[%c0_6, %c0_7], %8 {strides = array<i32>} : memref<8x128xf32, #tpu.memory_space<vmem>>, vector<8x128xf32>,
    %c0_i32_8 = arith.constant 0 : i32
    %10 = arith.cmpi eq, %arg2, %c0_i32_8 : i32
    %11 = arith.extui %10 : i1 to i32
    %c0_i32_9 = arith.constant 0 : i32
    %12 = arith.cmpi ne, %11, %c0_i32_9 : i32
    scf.if %12 {
      %c0_10 = arith.constant 0 : index
      %c0_11 = arith.constant 0 : index
      %13 = vector.load %arg7[%c0_10, %c0_11] : memref<8x128xf32, #tpu.memory_space<vmem>>, vector<8x128xf32>
      %c0_12 = arith.constant 0 : index
      %c0_13 = arith.constant 0 : index
      %14 = vector.load %arg5[%c0_12, %c0_13] : memref<1x128xf32, #tpu.memory_space<vmem>>, vector<1x128xf32>
      %15 = vector.broadcast %14 : vector<1x128xf32> to vector<8x128xf32>
      %16 = arith.addf %13, %15 : vector<8x128xf32>
      %cst_14 = arith.constant 0.000000e+00 : f32
      %17 = vector.broadcast %cst_14 : f32 to vector<8x128xf32>
      %18 = arith.maximumf %16, %17 : vector<8x128xf32>
      %c0_15 = arith.constant 0 : index
      %c0_16 = arith.constant 0 : index
      %19 = vector.load %arg6[%c0_15, %c0_16] : memref<8x128xf32, #tpu.memory_space<vmem>>, vector<8x128xf32>
      tpu.vector_store %arg6[%c0_15, %c0_16], %18 {strides = array<i32>} : memref<8x128xf32, #tpu.memory_space<vmem>>, vector<8x128xf32>,
    } else {
    }
    return
  }
  func.func @transform_0(%arg0: i32, %arg1: i32, %arg2: i32) -> (i32, i32) {
    %c0_i32 = arith.constant 0 : i32
    return %arg0, %arg2 : i32, i32
  }
  func.func @transform_1(%arg0: i32, %arg1: i32, %arg2: i32) -> (i32, i32) {
    %c0_i32 = arith.constant 0 : i32
    return %arg2, %arg1 : i32, i32
  }
  func.func @transform_2(%arg0: i32, %arg1: i32, %arg2: i32) -> (i32, i32) {
    %c0_i32 = arith.constant 0 : i32
    %c0_i32_0 = arith.constant 0 : i32
    return %c0_i32, %arg1 : i32, i32
  }
  func.func @transform_3(%arg0: i32, %arg1: i32, %arg2: i32) -> (i32, i32) {
    %c0_i32 = arith.constant 0 : i32
    return %arg0, %arg1 : i32, i32
  }
}

module attributes {stable_mosaic.version = 11 : i64} {
  func.func @kernel(%arg0: i32, %arg1: i32, %arg2: i32, %arg3: memref<8x128xf32, #tpu.memory_space<vmem>>, %arg4: memref<128x128xbf16, #tpu.memory_space<vmem>>, %arg5: memref<1x128xf32, #tpu.memory_space<vmem>>, %arg6: memref<8x128xf32, #tpu.memory_space<vmem>>, %arg7: memref<8x128xf32, #tpu.memory_space<vmem>>) attributes {dimension_semantics = [#tpu.dimension_semantics<parallel>, #tpu.dimension_semantics<parallel>, #tpu.dimension_semantics<arbitrary>], iteration_bounds = array<i64: 1, 1, 1>, scalar_prefetch = 0 : i64, scratch_operands = 1 : i64, tpu.core_type = #tpu.core_type<tc>, window_params = [{transform_indices = @transform_0, window_bounds = array<i64: 8, 128>}, {transform_indices = @transform_1, window_bounds = array<i64: 128, 128>}, {transform_indices = @transform_2, window_bounds = array<i64: 1, 128>}, {transform_indices = @transform_3, window_bounds = array<i64: 8, 128>}]} {
    %c0_i32 = arith.constant 0 : i32
    %0 = arith.cmpi eq, %arg2, %c0_i32 : i32
    %1 = arith.extui %0 : i1 to i32
    %c0_i32_0 = arith.constant 0 : i32
    %2 = arith.cmpi ne, %1, %c0_i32_0 : i32
    scf.if %2 {
      %cst_10 = arith.constant 0.000000e+00 : f32
      %13 = vector.broadcast %cst_10 : f32 to vector<8x128xf32>
      %c0_11 = arith.constant 0 : index
      %c0_12 = arith.constant 0 : index
      %14 = vector.load %arg7[%c0_11, %c0_12] : memref<8x128xf32, #tpu.memory_space<vmem>>, vector<8x128xf32>
      tpu.vector_store %arg7[%c0_11, %c0_12], %13 {strides = array<i32>} : memref<8x128xf32, #tpu.memory_space<vmem>>, vector<8x128xf32>,
    } else {
    }
    %c0 = arith.constant 0 : index
    %c0_1 = arith.constant 0 : index
    %3 = vector.load %arg7[%c0, %c0_1] : memref<8x128xf32, #tpu.memory_space<vmem>>, vector<8x128xf32>
    %c0_2 = arith.constant 0 : index
    %c0_3 = arith.constant 0 : index
    %4 = vector.load %arg3[%c0_2, %c0_3] : memref<8x128xf32, #tpu.memory_space<vmem>>, vector<8x128xf32>
    %5 = arith.truncf %4 : vector<8x128xf32> to vector<8x128xbf16>
    %c0_4 = arith.constant 0 : index
    %c0_5 = arith.constant 0 : index
    %6 = vector.load %arg4[%c0_4, %c0_5] : memref<128x128xbf16, #tpu.memory_space<vmem>>, vector<128x128xbf16>
    %cst = arith.constant dense<0.000000e+00> : vector<8x128xf32>
    %7 = tpu.matmul %5, %6, %cst {dimension_numbers = #tpu.dot_dimension_numbers<[1], [0], [0], [1], [0, 0, 1, 1], [], []>} : vector<8x128xbf16>, vector<128x128xbf16>, vector<8x128xf32> -> vector<8x128xf32>
    %8 = arith.addf %3, %7 : vector<8x128xf32>
    %c0_6 = arith.constant 0 : index
    %c0_7 = arith.constant 0 : index
    %9 = vector.load %arg7[%c0_6, %c0_7] : memref<8x128xf32, #tpu.memory_space<vmem>>, vector<8x128xf32>
    tpu.vector_store %arg7[%c0_6, %c0_7], %8 {strides = array<i32>} : memref<8x128xf32, #tpu.memory_space<vmem>>, vector<8x128xf32>,
    %c0_i32_8 = arith.constant 0 : i32
    %10 = arith.cmpi eq, %arg2, %c0_i32_8 : i32
    %11 = arith.extui %10 : i1 to i32
    %c0_i32_9 = arith.constant 0 : i32
    %12 = arith.cmpi ne, %11, %c0_i32_9 : i32
    scf.if %12 {
      %c0_10 = arith.constant 0 : index
      %c0_11 = arith.constant 0 : index
      %13 = vector.load %arg7[%c0_10, %c0_11] : memref<8x128xf32, #tpu.memory_space<vmem>>, vector<8x128xf32>
      %c0_12 = arith.constant 0 : index
      %c0_13 = arith.constant 0 : index
      %14 = vector.load %arg5[%c0_12, %c0_13] : memref<1x128xf32, #tpu.memory_space<vmem>>, vector<1x128xf32>
      %15 = vector.broadcast %14 : vector<1x128xf32> to vector<8x128xf32>
      %16 = arith.addf %13, %15 : vector<8x128xf32>
      %c0_14 = arith.constant 0 : index
      %c0_15 = arith.constant 0 : index
      %17 = vector.load %arg6[%c0_14, %c0_15] : memref<8x128xf32, #tpu.memory_space<vmem>>, vector<8x128xf32>
      tpu.vector_store %arg6[%c0_14, %c0_15], %16 {strides = array<i32>} : memref<8x128xf32, #tpu.memory_space<vmem>>, vector<8x128xf32>,
    } else {
    }
    return
  }
  func.func @transform_0(%arg0: i32, %arg1: i32, %arg2: i32) -> (i32, i32) {
    %c0_i32 = arith.constant 0 : i32
    return %arg0, %arg2 : i32, i32
  }
  func.func @transform_1(%arg0: i32, %arg1: i32, %arg2: i32) -> (i32, i32) {
    %c0_i32 = arith.constant 0 : i32
    return %arg2, %arg1 : i32, i32
  }
  func.func @transform_2(%arg0: i32, %arg1: i32, %arg2: i32) -> (i32, i32) {
    %c0_i32 = arith.constant 0 : i32
    %c0_i32_0 = arith.constant 0 : i32
    return %c0_i32, %arg1 : i32, i32
  }
  func.func @transform_3(%arg0: i32, %arg1: i32, %arg2: i32) -> (i32, i32) {
    %c0_i32 = arith.constant 0 : i32
    return %arg0, %arg1 : i32, i32
  }
}

</mosaic_0001>

<llo_original>
// kernel: camera_param_regressor_forward.4
$region0: #{camera_param_regressor_forward.4}
  #allocation0 [shape = 'u32[]', space=smem, size = 0x4, offset = 0x4, fixed_abs, tag = 'smem constant byte address 0x4 - core index']
  #allocation1 [shape = 'u32[72,128]{1,0:T(1,128)}', space=vmem, size = 0x9000, scoped, tag = 'internal scratch']
  #allocation2 [shape = 'f32[8,512]{1,0:T(8,128)}', space=vmem, size = 0x4000, scoped, tag = 'scratch operand']
  %s0 = inlined_call_operand.vmem [shape: f32[8,9216], index: 0, kind: input, shape index: {}]
  %s1 = inlined_call_operand.hbm [shape: bf16[9216,4096], index: 1, kind: input, shape index: {}]
  %s2 = inlined_call_operand.hbm [shape: f32[1,4096], index: 2, kind: input, shape index: {}]
  %s3 = inlined_call_operand.vmem [shape: f32[8,4096], index: 3, kind: output, shape index: {}]
  %s4 = sld [smem:[#allocation0]]
  $region61: #{camera_param_regressor_forward.4} parent=0
    _
  %s6 = ssub.s32 1, %s4
  %s7 = scalar_select 0, %s6, %s4
  $region1: #{camera_param_regressor_forward.4} parent=0
    #allocation3 [shape = 'u8[2097152]{0}', space=vmem, size = 0x200000, scoped, tag = 'input window, operand 1']
    #allocation4 [shape = 's32[2]{0}', space=sflag, size = 0x8, scoped, tag = 'scoped memory for camera_param_regressor_forward.4']
    #allocation5 [shape = 'u8[4096]{0}', space=vmem, size = 0x1000, scoped, tag = 'input window, operand 2']
    #allocation6 [shape = 's32[2]{0}', space=sflag, size = 0x8, scoped, tag = 'scoped memory for camera_param_regressor_forward.4']
    %8 = vsyncpa [#allocation4], 0
    %s9 = scalar_lea.sflag [#allocation4], 1
    %10 = vsyncpa %s9, 0
    %11 = vsyncpa [#allocation6], 0
    %s12 = scalar_lea.sflag [#allocation6], 1
    %13 = vsyncpa %s12, 0
    loop: start=0, step=1, limit=74
    $region2: #{camera_param_regressor_forward.4} parent=1 // loop_pre_header
      _
    $region3: #{camera_param_regressor_forward.4} parent=1 // loop_header
      %s15 = sphi 0, %s19
      %p16 = scmp.ge.s32.totalorder %s15, 74
      %s22 = sphi 0, %s41
      %s23 = sphi 0, %s37
      %s24 = sphi 0, %s33
      %s25 = sphi 0, %s22
      %s26 = sphi 0, %s23
      %s27 = sphi 0, %s24
      %s28 = sphi 0, %s25
      %s29 = sphi 0, %s26
      %s30 = sphi 0, %s27
      %s46 = sphi 0, %s48
      %s49 = sphi 0, %s46
      %s50 = sphi 0, %s49
      %s66 = sphi 0, %s50
      %s74 = sphi 0, %s76
      %s77 = sphi 0, %s74
      %s78 = sphi 0, %s77
      %s94 = sphi 0, %s78
      %s100 = sphi 0, %s102
      %s103 = sphi 0, %s100
      %s104 = sphi 0, %s103
      %s120 = sphi 0, %s104
      %s128 = sphi 0, %s130
      %s131 = sphi 0, %s128
      %s132 = sphi 0, %s131
      %s148 = sphi 0, %s132
    $region4: #{camera_param_regressor_forward.4} parent=1 // loop_header_branch
      %18 = sbr.rel (%p16) target = $region8
    $region5: #{camera_param_regressor_forward.4} parent=1 // loop_body
      %s20 = ssub.s32 %s15, 1
      %s21 = ssub.s32 %s15, 2
      %s31 = sadd.s32 1, %s24
      %p32 = scmp.ge.s32.totalorder %s31, 9
      %s33 = scalar_select %p32, 0, %s31
      %s34 = sadd.s32 1, %s23
      %s35 = scalar_select %p32, %s34, %s23
      %p36 = scmp.ge.s32.totalorder %s35, 8
      %s37 = scalar_select %p36, 0, %s35
      %s38 = sadd.s32 1, %s22
      %s39 = scalar_select %p36, %s38, %s22
      %p40 = scmp.ge.s32.totalorder %s39, 1
      %s41 = scalar_select %p40, 0, %s39
      %s42 = ssub.s32 %s22, %s41
      %s43 = ssub.s32 %s24, %s33
      %s44 = sor.u32 %s42, %s43
      %p45 = scmp.eq.s32.totalorder %s44, 0
      %s47 = sadd.s32 %s46, 1
      %s48 = scalar_select %p45, %s46, %s47
      %p51 = pneg %p45
      %p52 = scmp.eq.s32.totalorder %s15, 71
      %p53 = por %p51, %p52
      %p54 = scmp.ne.s32.totalorder %s46, %s49
      %p55 = scmp.eq.s32.totalorder %s15, 0
      %p56 = por %p54, %p55
      %p57 = scmp.ne.s32.totalorder %s46, %s49
      %p58 = scmp.eq.s32.totalorder %s20, 71
      %p59 = por %p57, %p58
      %p60 = scmp.ne.s32.totalorder %s49, %s50
      %p61 = scmp.eq.s32.totalorder %s20, 0
      %p62 = por %p60, %p61
      %p63 = scmp.ne.s32.totalorder %s49, %s50
      %p64 = scmp.eq.s32.totalorder %s21, 71
      %p65 = por %p63, %p64
      %p67 = scmp.ne.s32.totalorder %s50, %s66
      %p68 = scmp.eq.s32.totalorder %s21, 0
      %p69 = por %p67, %p68
      %s70 = ssub.s32 %s24, %s33
      %s71 = ssub.s32 %s23, %s37
      %s72 = sor.u32 %s70, %s71
      %p73 = scmp.eq.s32.totalorder %s72, 0
      %s75 = sadd.s32 %s74, 1
      %s76 = scalar_select %p73, %s74, %s75
      %p79 = pneg %p73
      %p80 = scmp.eq.s32.totalorder %s15, 71
      %p81 = por %p79, %p80
      %p82 = scmp.ne.s32.totalorder %s74, %s77
      %p83 = scmp.eq.s32.totalorder %s15, 0
      %p84 = por %p82, %p83
      %p85 = scmp.ne.s32.totalorder %s74, %s77
      %p86 = scmp.eq.s32.totalorder %s20, 71
      %p87 = por %p85, %p86
      %p88 = scmp.ne.s32.totalorder %s77, %s78
      %p89 = scmp.eq.s32.totalorder %s20, 0
      %p90 = por %p88, %p89
      %p91 = scmp.ne.s32.totalorder %s77, %s78
      %p92 = scmp.eq.s32.totalorder %s21, 71
      %p93 = por %p91, %p92
      %p95 = scmp.ne.s32.totalorder %s78, %s94
      %p96 = scmp.eq.s32.totalorder %s21, 0
      %p97 = por %p95, %p96
      %s98 = ssub.s32 %s23, %s37
      %p99 = scmp.eq.s32.totalorder %s98, 0
      %s101 = sadd.s32 %s100, 1
      %s102 = scalar_select %p99, %s100, %s101
      %p105 = pneg %p99
      %p106 = scmp.eq.s32.totalorder %s15, 71
      %p107 = por %p105, %p106
      %p108 = scmp.ne.s32.totalorder %s100, %s103
      %p109 = scmp.eq.s32.totalorder %s15, 0
      %p110 = por %p108, %p109
      %p111 = scmp.ne.s32.totalorder %s100, %s103
      %p112 = scmp.eq.s32.totalorder %s20, 71
      %p113 = por %p111, %p112
      %p114 = scmp.ne.s32.totalorder %s103, %s104
      %p115 = scmp.eq.s32.totalorder %s20, 0
      %p116 = por %p114, %p115
      %p117 = scmp.ne.s32.totalorder %s103, %s104
      %p118 = scmp.eq.s32.totalorder %s21, 71
      %p119 = por %p117, %p118
      %p121 = scmp.ne.s32.totalorder %s104, %s120
      %p122 = scmp.eq.s32.totalorder %s21, 0
      %p123 = por %p121, %p122
      %s124 = ssub.s32 %s22, %s41
      %s125 = ssub.s32 %s23, %s37
      %s126 = sor.u32 %s124, %s125
      %p127 = scmp.eq.s32.totalorder %s126, 0
      %s129 = sadd.s32 %s128, 1
      %s130 = scalar_select %p127, %s128, %s129
      %p133 = pneg %p127
      %p134 = scmp.eq.s32.totalorder %s15, 71
      %p135 = por %p133, %p134
      %p136 = scmp.ne.s32.totalorder %s128, %s131
      %p137 = scmp.eq.s32.totalorder %s15, 0
      %p138 = por %p136, %p137
      %p139 = scmp.ne.s32.totalorder %s128, %s131
      %p140 = scmp.eq.s32.totalorder %s20, 71
      %p141 = por %p139, %p140
      %p142 = scmp.ne.s32.totalorder %s131, %s132
      %p143 = scmp.eq.s32.totalorder %s20, 0
      %p144 = por %p142, %p143
      %p145 = scmp.ne.s32.totalorder %s131, %s132
      %p146 = scmp.eq.s32.totalorder %s21, 71
      %p147 = por %p145, %p146
      %p149 = scmp.ne.s32.totalorder %s132, %s148
      %p150 = scmp.eq.s32.totalorder %s21, 0
      %p151 = por %p149, %p150
      %p152 = scmp.le.s32.totalorder 1, %s15
      %p153 = scmp.lt.s32.totalorder %s15, 73
      %p154 = pnand %p152, %p153
      %p155 = pneg %p154
      // Predicated region
      $region9: #{camera_param_regressor_forward.4} parent=5 // pred_check
        _
      $region10: #{camera_param_regressor_forward.4} parent=5 // pred_check_branch
        %157 = sbr.rel (%p154) target = $region12
      $region11: #{camera_param_regressor_forward.4} parent=5 // pred_region
        %s158 = ssub.s32 %s15, 1
      $region12: #{camera_param_regressor_forward.4} parent=5 // pred_fallthru
        _
      %p159 = scmp.lt.s32.totalorder %s15, 72
      // Predicated region
      $region13: #{camera_param_regressor_forward.4} parent=5 // pred_check
        %p160 = pneg %p159
      $region14: #{camera_param_regressor_forward.4} parent=5 // pred_check_branch
        %162 = sbr.rel (%p160) target = $region16
      $region15: #{camera_param_regressor_forward.4} parent=5 // pred_region
        // Predicated region
        $region17: #{camera_param_regressor_forward.4} parent=15 // pred_check
          %p163 = pneg %p56
        $region18: #{camera_param_regressor_forward.4} parent=15 // pred_check_branch
          %165 = sbr.rel (%p163) target = $region20
        $region19: #{camera_param_regressor_forward.4} parent=15 // pred_region
          %s166 = smul.u32 8, %s24
          %p167 = scmp.lt.s32.totalorder %s22, 0
          %s168 = scalar_select %p167, %s22, 0
          %p169 = scmp.lt.s32.totalorder %s166, 71
          %s170 = scalar_select %p169, %s166, 71
          %s171 = smul.addr %s168, 72
          %s172 = sadd.s32 %s170, %s171
          %s173 = smul.addr %s172, 8
          %s174 = scalar_lea.vmem %s0, %s173
          %s175 = smul.u32 8, %s24
        $region20: #{camera_param_regressor_forward.4} parent=15 // pred_fallthru
          _
        // Predicated region
        $region21: #{camera_param_regressor_forward.4} parent=15 // pred_check
          %p176 = pneg %p84
        $region22: #{camera_param_regressor_forward.4} parent=15 // pred_check_branch
          %178 = sbr.rel (%p176) target = $region24
        $region23: #{camera_param_regressor_forward.4} parent=15 // pred_region
          %s179 = sand.u32 %s74, 1
          %s180 = scalar_lea.sflag [#allocation4], %s179
          %s181 = sand.u32 %s74, 1
          %s182 = smul.addr %s181, 2048
          %s183 = scalar_lea.vmem [#allocation3], %s182
          %s184 = smul.u32 128, %s24
          %s185 = smul.u32 4, %s23
          %187 = vsyncadd %s180, 0
          %s188 = smul.addr %s184, 32
          %s189 = sadd.s32 %s185, %s188
          %s190 = smul.addr %s189, 4
          %s191 = scalar_lea.hbm %s1, %s190
          %s192 = sshll.u32 %s191, 4
          %s193 = int_to_ptr.hbm [resolvable:$true] %s192
          %s194 = sshll.u32 %s183, 4
          %s195 = int_to_ptr.vmem [resolvable:$true] %s194
          %200 = dma.hbm_to_vmem [thread:$0]  %s193, 32768, %s195, %s180, 2048, 256, 16
        $region24: #{camera_param_regressor_forward.4} parent=15 // pred_fallthru
          _
        // Predicated region
        $region25: #{camera_param_regressor_forward.4} parent=15 // pred_check
          %p201 = pneg %p110
        $region26: #{camera_param_regressor_forward.4} parent=15 // pred_check_branch
          %203 = sbr.rel (%p201) target = $region28
        $region27: #{camera_param_regressor_forward.4} parent=15 // pred_region
          %s204 = sand.u32 %s100, 1
          %s205 = scalar_lea.sflag [#allocation6], %s204
          %s206 = sand.u32 %s100, 1
          %s207 = smul.addr %s206, 4
          %s208 = scalar_lea.vmem [#allocation5], %s207
          %s209 = smul.u32 4, %s23
          %211 = vsyncadd %s205, 0
          %s212 = scalar_lea.hbm %s2, %s209
          %s214 = sshll.u32 %s212, 4
          %s215 = int_to_ptr.hbm [resolvable:$true] %s214
          %s216 = sshll.u32 %s208, 4
          %s217 = int_to_ptr.vmem [resolvable:$true] %s216
          %219 = dma.hbm_to_vmem [thread:$0]  %s215, 64, %s217, %s205
        $region28: #{camera_param_regressor_forward.4} parent=15 // pred_fallthru
          _
      $region16: #{camera_param_regressor_forward.4} parent=5 // pred_fallthru
        _
      %p220 = scmp.le.s32.totalorder 1, %s15
      %p221 = scmp.lt.s32.totalorder %s15, 73
      %p222 = pnand %p220, %p221
      %p223 = pneg %p222
      // Predicated region
      $region29: #{camera_param_regressor_forward.4} parent=5 // pred_check
        _
      $region30: #{camera_param_regressor_forward.4} parent=5 // pred_check_branch
        %225 = sbr.rel (%p222) target = $region32
      $region31: #{camera_param_regressor_forward.4} parent=5 // pred_region
        %s226 = ssub.s32 %s15, 1
        %s227 = sand.u32 %s77, 1
        %s228 = scalar_lea.sflag [#allocation4], %s227
        %s229 = sand.u32 %s77, 1
        %s230 = smul.addr %s229, 2048
        %s231 = scalar_lea.vmem [#allocation3], %s230
        // Predicated region
        $region33: #{camera_param_regressor_forward.4} parent=31 // pred_check
          %p232 = pneg %p90
        $region34: #{camera_param_regressor_forward.4} parent=31 // pred_check_branch
          %234 = sbr.rel (%p232) target = $region36
        $region35: #{camera_param_regressor_forward.4} parent=31 // pred_region
          %236 = dma.done %s228, 32768
        $region36: #{camera_param_regressor_forward.4} parent=31 // pred_fallthru
          _
        %s237 = sand.u32 %s103, 1
        %s238 = scalar_lea.sflag [#allocation6], %s237
        %s239 = sand.u32 %s103, 1
        %s240 = smul.addr %s239, 4
        %s241 = scalar_lea.vmem [#allocation5], %s240
        // Predicated region
        $region37: #{camera_param_regressor_forward.4} parent=31 // pred_check
          %p242 = pneg %p116
        $region38: #{camera_param_regressor_forward.4} parent=31 // pred_check_branch
          %244 = sbr.rel (%p242) target = $region40
        $region39: #{camera_param_regressor_forward.4} parent=31 // pred_region
          %246 = dma.done %s238, 64
        $region40: #{camera_param_regressor_forward.4} parent=31 // pred_fallthru
          _
        %s247 = smul.u32 8, %s27
        %p248 = scmp.lt.s32.totalorder %s25, 0
        %s249 = scalar_select %p248, %s25, 0
        %p250 = scmp.lt.s32.totalorder %s247, 71
        %s251 = scalar_select %p250, %s247, 71
        %s252 = smul.addr %s249, 72
        %s253 = sadd.s32 %s251, %s252
        %s254 = smul.addr %s253, 8
        %s255 = scalar_lea.vmem %s0, %s254
        %p256 = pneg %p62
        %p257 = pneg %p59
        %s258 = sand.u32 %s77, 1
        %s259 = scalar_lea.sflag [#allocation4], %s258
        %s260 = sand.u32 %s77, 1
        %s261 = smul.addr %s260, 2048
        %s262 = scalar_lea.vmem [#allocation3], %s261
        %p263 = pneg %p90
        %p264 = pneg %p87
        %s265 = sand.u32 %s103, 1
        %s266 = scalar_lea.sflag [#allocation6], %s265
        %s267 = sand.u32 %s103, 1
        %s268 = smul.addr %s267, 4
        %s269 = scalar_lea.vmem [#allocation5], %s268
        %p270 = pneg %p116
        %p271 = pneg %p113
        %p272 = pneg %p144
        %p273 = pneg %p141
        %s274 = smul.u32 4, %s26
        %p275 = scmp.lt.s32.totalorder %s25, 0
        %s276 = scalar_select %p275, %s25, 0
        %p277 = scmp.lt.s32.totalorder %s274, 31
        %s278 = scalar_select %p277, %s274, 31
        %s279 = smul.addr %s276, 32
        %s280 = sadd.s32 %s278, %s279
        %s281 = smul.addr %s280, 8
        %s282 = scalar_lea.vmem %s3, %s281
        %s283 = smul.u32 8, %s27
        %p284 = scmp.lt.s32.totalorder %s25, 0
        %s285 = scalar_select %p284, %s25, 0
        %p286 = scmp.lt.s32.totalorder %s283, 71
        %s287 = scalar_select %p286, %s283, 71
        %s288 = smul.addr %s285, 72
        %s289 = sadd.s32 %s287, %s288
        %s290 = smul.addr %s289, 8
        %s291 = scalar_lea.vmem %s0, %s290
        %s292 = smul.u32 8, %s27
        %s293 = smul.u32 128, %s27
        %s294 = smul.u32 4, %s26
        %s295 = smul.u32 4, %s26
        %s296 = smul.u32 4, %s26
        %p297 = scmp.lt.s32.totalorder %s25, 0
        %s298 = scalar_select %p297, %s25, 0
        %p299 = scmp.lt.s32.totalorder %s296, 31
        %s300 = scalar_select %p299, %s296, 31
        %s301 = smul.addr %s298, 32
        %s302 = sadd.s32 %s300, %s301
        %s303 = smul.addr %s302, 8
        %s304 = scalar_lea.vmem %s3, %s303
        %s305 = smul.u32 4, %s26
        %p306 = scmp.eq.s32.totalorder %s27, 0
        // Predicated region
        $region41: #{camera_param_regressor_forward.4} parent=31 // pred_check
          %p307 = pneg %p306
        $region42: #{camera_param_regressor_forward.4} parent=31 // pred_check_branch
          %309 = sbr.rel (%p307) target = $region44
        $region43: #{camera_param_regressor_forward.4} parent=31 // pred_region
          %310 = vst [vmem:[#allocation2] sm:$0xff] 0.0
          %311 = vst [vmem:[#allocation2 + $0x8] sm:$0xff] 0.0
          %312 = vst [vmem:[#allocation2 + $0x10] sm:$0xff] 0.0
          %313 = vst [vmem:[#allocation2 + $0x18] sm:$0xff] 0.0
        $region44: #{camera_param_regressor_forward.4} parent=31 // pred_fallthru
          _
        %v314 = vld [vmem:[#allocation2] sm:$0xff]
        %v315 = vld [vmem:[#allocation2 + $0x8] sm:$0xff]
        %v316 = vld [vmem:[#allocation2 + $0x10] sm:$0xff]
        %v317 = vld [vmem:[#allocation2 + $0x18] sm:$0xff]
        %v318 = vld [vmem:[%s291] sm:$0xff]
        %v319 = vld [vmem:[%s291 + $0x8] sm:$0xff]
        %v320 = vld [vmem:[%s291 + $0x10] sm:$0xff]
        %v321 = vld [vmem:[%s291 + $0x18] sm:$0xff]
        %v322 = vld [vmem:[%s291 + $0x20] sm:$0xff]
        %v323 = vld [vmem:[%s291 + $0x28] sm:$0xff]
        %v324 = vld [vmem:[%s291 + $0x30] sm:$0xff]
        %v325 = vld [vmem:[%s291 + $0x38] sm:$0xff]
        %v326 = vpack.c.bf16 %v318, %v318
        %v327 = vpack.c.bf16 %v319, %v319
        %v328 = vpack.c.bf16 %v320, %v320
        %v329 = vpack.c.bf16 %v321, %v321
        %v330 = vpack.c.bf16 %v322, %v322
        %v331 = vpack.c.bf16 %v323, %v323
        %v332 = vpack.c.bf16 %v324, %v324
        %v333 = vpack.c.bf16 %v325, %v325
        %v334 = vld [vmem:[%s231] sm:$0xff]
        %v335 = vld [vmem:[%s231 + $0x8] sm:$0xff]
        %v336 = vld [vmem:[%s231 + $0x10] sm:$0xff]
        %v337 = vld [vmem:[%s231 + $0x18] sm:$0xff]
        %v338 = vld [vmem:[%s231 + $0x20] sm:$0xff]
        %v339 = vld [vmem:[%s231 + $0x28] sm:$0xff]
        %v340 = vld [vmem:[%s231 + $0x30] sm:$0xff]
        %v341 = vld [vmem:[%s231 + $0x38] sm:$0xff]
        %v342 = vld [vmem:[%s231 + $0x40] sm:$0xff]
        %v343 = vld [vmem:[%s231 + $0x48] sm:$0xff]
        %v344 = vld [vmem:[%s231 + $0x50] sm:$0xff]
        %v345 = vld [vmem:[%s231 + $0x58] sm:$0xff]
        %v346 = vld [vmem:[%s231 + $0x60] sm:$0xff]
        %v347 = vld [vmem:[%s231 + $0x68] sm:$0xff]
        %v348 = vld [vmem:[%s231 + $0x70] sm:$0xff]
        %v349 = vld [vmem:[%s231 + $0x78] sm:$0xff]
        %v350 = vld [vmem:[%s231 + $0x80] sm:$0xff]
        %v351 = vld [vmem:[%s231 + $0x88] sm:$0xff]
        %v352 = vld [vmem:[%s231 + $0x90] sm:$0xff]
        %v353 = vld [vmem:[%s231 + $0x98] sm:$0xff]
        %v354 = vld [vmem:[%s231 + $0xa0] sm:$0xff]
        %v355 = vld [vmem:[%s231 + $0xa8] sm:$0xff]
        %v356 = vld [vmem:[%s231 + $0xb0] sm:$0xff]
        %v357 = vld [vmem:[%s231 + $0xb8] sm:$0xff]
        %v358 = vld [vmem:[%s231 + $0xc0] sm:$0xff]
        %v359 = vld [vmem:[%s231 + $0xc8] sm:$0xff]
        %v360 = vld [vmem:[%s231 + $0xd0] sm:$0xff]
        %v361 = vld [vmem:[%s231 + $0xd8] sm:$0xff]
        %v362 = vld [vmem:[%s231 + $0xe0] sm:$0xff]
        %v363 = vld [vmem:[%s231 + $0xe8] sm:$0xff]
        %v364 = vld [vmem:[%s231 + $0xf0] sm:$0xff]
        %v365 = vld [vmem:[%s231 + $0xf8] sm:$0xff]
        %v366 = vld [vmem:[%s231 + $0x100] sm:$0xff]
        %v367 = vld [vmem:[%s231 + $0x108] sm:$0xff]
        %v368 = vld [vmem:[%s231 + $0x110] sm:$0xff]
        %v369 = vld [vmem:[%s231 + $0x118] sm:$0xff]
        %v370 = vld [vmem:[%s231 + $0x120] sm:$0xff]
        %v371 = vld [vmem:[%s231 + $0x128] sm:$0xff]
        %v372 = vld [vmem:[%s231 + $0x130] sm:$0xff]
        %v373 = vld [vmem:[%s231 + $0x138] sm:$0xff]
        %v374 = vld [vmem:[%s231 + $0x140] sm:$0xff]
        %v375 = vld [vmem:[%s231 + $0x148] sm:$0xff]
        %v376 = vld [vmem:[%s231 + $0x150] sm:$0xff]
        %v377 = vld [vmem:[%s231 + $0x158] sm:$0xff]
        %v378 = vld [vmem:[%s231 + $0x160] sm:$0xff]
        %v379 = vld [vmem:[%s231 + $0x168] sm:$0xff]
        %v380 = vld [vmem:[%s231 + $0x170] sm:$0xff]
        %v381 = vld [vmem:[%s231 + $0x178] sm:$0xff]
        %v382 = vld [vmem:[%s231 + $0x180] sm:$0xff]
        %v383 = vld [vmem:[%s231 + $0x188] sm:$0xff]
        %v384 = vld [vmem:[%s231 + $0x190] sm:$0xff]
        %v385 = vld [vmem:[%s231 + $0x198] sm:$0xff]
        %v386 = vld [vmem:[%s231 + $0x1a0] sm:$0xff]
        %v387 = vld [vmem:[%s231 + $0x1a8] sm:$0xff]
        %v388 = vld [vmem:[%s231 + $0x1b0] sm:$0xff]
        %v389 = vld [vmem:[%s231 + $0x1b8] sm:$0xff]
        %v390 = vld [vmem:[%s231 + $0x1c0] sm:$0xff]
        %v391 = vld [vmem:[%s231 + $0x1c8] sm:$0xff]
        %v392 = vld [vmem:[%s231 + $0x1d0] sm:$0xff]
        %v393 = vld [vmem:[%s231 + $0x1d8] sm:$0xff]
        %v394 = vld [vmem:[%s231 + $0x1e0] sm:$0xff]
        %v395 = vld [vmem:[%s231 + $0x1e8] sm:$0xff]
        %v396 = vld [vmem:[%s231 + $0x1f0] sm:$0xff]
        %v397 = vld [vmem:[%s231 + $0x1f8] sm:$0xff]
        %v398 = vld [vmem:[%s231 + $0x200] sm:$0xff]
        %v399 = vld [vmem:[%s231 + $0x208] sm:$0xff]
        %v400 = vld [vmem:[%s231 + $0x210] sm:$0xff]
        %v401 = vld [vmem:[%s231 + $0x218] sm:$0xff]
        %v402 = vld [vmem:[%s231 + $0x220] sm:$0xff]
        %v403 = vld [vmem:[%s231 + $0x228] sm:$0xff]
        %v404 = vld [vmem:[%s231 + $0x230] sm:$0xff]
        %v405 = vld [vmem:[%s231 + $0x238] sm:$0xff]
        %v406 = vld [vmem:[%s231 + $0x240] sm:$0xff]
        %v407 = vld [vmem:[%s231 + $0x248] sm:$0xff]
        %v408 = vld [vmem:[%s231 + $0x250] sm:$0xff]
        %v409 = vld [vmem:[%s231 + $0x258] sm:$0xff]
        %v410 = vld [vmem:[%s231 + $0x260] sm:$0xff]
        %v411 = vld [vmem:[%s231 + $0x268] sm:$0xff]
        %v412 = vld [vmem:[%s231 + $0x270] sm:$0xff]
        %v413 = vld [vmem:[%s231 + $0x278] sm:$0xff]
        %v414 = vld [vmem:[%s231 + $0x280] sm:$0xff]
        %v415 = vld [vmem:[%s231 + $0x288] sm:$0xff]
        %v416 = vld [vmem:[%s231 + $0x290] sm:$0xff]
        %v417 = vld [vmem:[%s231 + $0x298] sm:$0xff]
        %v418 = vld [vmem:[%s231 + $0x2a0] sm:$0xff]
        %v419 = vld [vmem:[%s231 + $0x2a8] sm:$0xff]
        %v420 = vld [vmem:[%s231 + $0x2b0] sm:$0xff]
        %v421 = vld [vmem:[%s231 + $0x2b8] sm:$0xff]
        %v422 = vld [vmem:[%s231 + $0x2c0] sm:$0xff]
        %v423 = vld [vmem:[%s231 + $0x2c8] sm:$0xff]
        %v424 = vld [vmem:[%s231 + $0x2d0] sm:$0xff]
        %v425 = vld [vmem:[%s231 + $0x2d8] sm:$0xff]
        %v426 = vld [vmem:[%s231 + $0x2e0] sm:$0xff]
        %v427 = vld [vmem:[%s231 + $0x2e8] sm:$0xff]
        %v428 = vld [vmem:[%s231 + $0x2f0] sm:$0xff]
        %v429 = vld [vmem:[%s231 + $0x2f8] sm:$0xff]
        %v430 = vld [vmem:[%s231 + $0x300] sm:$0xff]
        %v431 = vld [vmem:[%s231 + $0x308] sm:$0xff]
        %v432 = vld [vmem:[%s231 + $0x310] sm:$0xff]
        %v433 = vld [vmem:[%s231 + $0x318] sm:$0xff]
        %v434 = vld [vmem:[%s231 + $0x320] sm:$0xff]
        %v435 = vld [vmem:[%s231 + $0x328] sm:$0xff]
        %v436 = vld [vmem:[%s231 + $0x330] sm:$0xff]
        %v437 = vld [vmem:[%s231 + $0x338] sm:$0xff]
        %v438 = vld [vmem:[%s231 + $0x340] sm:$0xff]
        %v439 = vld [vmem:[%s231 + $0x348] sm:$0xff]
        %v440 = vld [vmem:[%s231 + $0x350] sm:$0xff]
        %v441 = vld [vmem:[%s231 + $0x358] sm:$0xff]
        %v442 = vld [vmem:[%s231 + $0x360] sm:$0xff]
        %v443 = vld [vmem:[%s231 + $0x368] sm:$0xff]
        %v444 = vld [vmem:[%s231 + $0x370] sm:$0xff]
        %v445 = vld [vmem:[%s231 + $0x378] sm:$0xff]
        %v446 = vld [vmem:[%s231 + $0x380] sm:$0xff]
        %v447 = vld [vmem:[%s231 + $0x388] sm:$0xff]
        %v448 = vld [vmem:[%s231 + $0x390] sm:$0xff]
        %v449 = vld [vmem:[%s231 + $0x398] sm:$0xff]
        %v450 = vld [vmem:[%s231 + $0x3a0] sm:$0xff]
        %v451 = vld [vmem:[%s231 + $0x3a8] sm:$0xff]
        %v452 = vld [vmem:[%s231 + $0x3b0] sm:$0xff]
        %v453 = vld [vmem:[%s231 + $0x3b8] sm:$0xff]
        %v454 = vld [vmem:[%s231 + $0x3c0] sm:$0xff]
        %v455 = vld [vmem:[%s231 + $0x3c8] sm:$0xff]
        %v456 = vld [vmem:[%s231 + $0x3d0] sm:$0xff]
        %v457 = vld [vmem:[%s231 + $0x3d8] sm:$0xff]
        %v458 = vld [vmem:[%s231 + $0x3e0] sm:$0xff]
        %v459 = vld [vmem:[%s231 + $0x3e8] sm:$0xff]
        %v460 = vld [vmem:[%s231 + $0x3f0] sm:$0xff]
        %v461 = vld [vmem:[%s231 + $0x3f8] sm:$0xff]
        %v462 = vld [vmem:[%s231 + $0x400] sm:$0xff]
        %v463 = vld [vmem:[%s231 + $0x408] sm:$0xff]
        %v464 = vld [vmem:[%s231 + $0x410] sm:$0xff]
        %v465 = vld [vmem:[%s231 + $0x418] sm:$0xff]
        %v466 = vld [vmem:[%s231 + $0x420] sm:$0xff]
        %v467 = vld [vmem:[%s231 + $0x428] sm:$0xff]
        %v468 = vld [vmem:[%s231 + $0x430] sm:$0xff]
        %v469 = vld [vmem:[%s231 + $0x438] sm:$0xff]
        %v470 = vld [vmem:[%s231 + $0x440] sm:$0xff]
        %v471 = vld [vmem:[%s231 + $0x448] sm:$0xff]
        %v472 = vld [vmem:[%s231 + $0x450] sm:$0xff]
        %v473 = vld [vmem:[%s231 + $0x458] sm:$0xff]
        %v474 = vld [vmem:[%s231 + $0x460] sm:$0xff]
        %v475 = vld [vmem:[%s231 + $0x468] sm:$0xff]
        %v476 = vld [vmem:[%s231 + $0x470] sm:$0xff]
        %v477 = vld [vmem:[%s231 + $0x478] sm:$0xff]
        %v478 = vld [vmem:[%s231 + $0x480] sm:$0xff]
        %v479 = vld [vmem:[%s231 + $0x488] sm:$0xff]
        %v480 = vld [vmem:[%s231 + $0x490] sm:$0xff]
        %v481 = vld [vmem:[%s231 + $0x498] sm:$0xff]
        %v482 = vld [vmem:[%s231 + $0x4a0] sm:$0xff]
        %v483 = vld [vmem:[%s231 + $0x4a8] sm:$0xff]
        %v484 = vld [vmem:[%s231 + $0x4b0] sm:$0xff]
        %v485 = vld [vmem:[%s231 + $0x4b8] sm:$0xff]
        %v486 = vld [vmem:[%s231 + $0x4c0] sm:$0xff]
        %v487 = vld [vmem:[%s231 + $0x4c8] sm:$0xff]
        %v488 = vld [vmem:[%s231 + $0x4d0] sm:$0xff]
        %v489 = vld [vmem:[%s231 + $0x4d8] sm:$0xff]
        %v490 = vld [vmem:[%s231 + $0x4e0] sm:$0xff]
        %v491 = vld [vmem:[%s231 + $0x4e8] sm:$0xff]
        %v492 = vld [vmem:[%s231 + $0x4f0] sm:$0xff]
        %v493 = vld [vmem:[%s231 + $0x4f8] sm:$0xff]
        %v494 = vld [vmem:[%s231 + $0x500] sm:$0xff]
        %v495 = vld [vmem:[%s231 + $0x508] sm:$0xff]
        %v496 = vld [vmem:[%s231 + $0x510] sm:$0xff]
        %v497 = vld [vmem:[%s231 + $0x518] sm:$0xff]
        %v498 = vld [vmem:[%s231 + $0x520] sm:$0xff]
        %v499 = vld [vmem:[%s231 + $0x528] sm:$0xff]
        %v500 = vld [vmem:[%s231 + $0x530] sm:$0xff]
        %v501 = vld [vmem:[%s231 + $0x538] sm:$0xff]
        %v502 = vld [vmem:[%s231 + $0x540] sm:$0xff]
        %v503 = vld [vmem:[%s231 + $0x548] sm:$0xff]
        %v504 = vld [vmem:[%s231 + $0x550] sm:$0xff]
        %v505 = vld [vmem:[%s231 + $0x558] sm:$0xff]
        %v506 = vld [vmem:[%s231 + $0x560] sm:$0xff]
        %v507 = vld [vmem:[%s231 + $0x568] sm:$0xff]
        %v508 = vld [vmem:[%s231 + $0x570] sm:$0xff]
        %v509 = vld [vmem:[%s231 + $0x578] sm:$0xff]
        %v510 = vld [vmem:[%s231 + $0x580] sm:$0xff]
        %v511 = vld [vmem:[%s231 + $0x588] sm:$0xff]
        %v512 = vld [vmem:[%s231 + $0x590] sm:$0xff]
        %v513 = vld [vmem:[%s231 + $0x598] sm:$0xff]
        %v514 = vld [vmem:[%s231 + $0x5a0] sm:$0xff]
        %v515 = vld [vmem:[%s231 + $0x5a8] sm:$0xff]
        %v516 = vld [vmem:[%s231 + $0x5b0] sm:$0xff]
        %v517 = vld [vmem:[%s231 + $0x5b8] sm:$0xff]
        %v518 = vld [vmem:[%s231 + $0x5c0] sm:$0xff]
        %v519 = vld [vmem:[%s231 + $0x5c8] sm:$0xff]
        %v520 = vld [vmem:[%s231 + $0x5d0] sm:$0xff]
        %v521 = vld [vmem:[%s231 + $0x5d8] sm:$0xff]
        %v522 = vld [vmem:[%s231 + $0x5e0] sm:$0xff]
        %v523 = vld [vmem:[%s231 + $0x5e8] sm:$0xff]
        %v524 = vld [vmem:[%s231 + $0x5f0] sm:$0xff]
        %v525 = vld [vmem:[%s231 + $0x5f8] sm:$0xff]
        %v526 = vld [vmem:[%s231 + $0x600] sm:$0xff]
        %v527 = vld [vmem:[%s231 + $0x608] sm:$0xff]
        %v528 = vld [vmem:[%s231 + $0x610] sm:$0xff]
        %v529 = vld [vmem:[%s231 + $0x618] sm:$0xff]
        %v530 = vld [vmem:[%s231 + $0x620] sm:$0xff]
        %v531 = vld [vmem:[%s231 + $0x628] sm:$0xff]
        %v532 = vld [vmem:[%s231 + $0x630] sm:$0xff]
        %v533 = vld [vmem:[%s231 + $0x638] sm:$0xff]
        %v534 = vld [vmem:[%s231 + $0x640] sm:$0xff]
        %v535 = vld [vmem:[%s231 + $0x648] sm:$0xff]
        %v536 = vld [vmem:[%s231 + $0x650] sm:$0xff]
        %v537 = vld [vmem:[%s231 + $0x658] sm:$0xff]
        %v538 = vld [vmem:[%s231 + $0x660] sm:$0xff]
        %v539 = vld [vmem:[%s231 + $0x668] sm:$0xff]
        %v540 = vld [vmem:[%s231 + $0x670] sm:$0xff]
        %v541 = vld [vmem:[%s231 + $0x678] sm:$0xff]
        %v542 = vld [vmem:[%s231 + $0x680] sm:$0xff]
        %v543 = vld [vmem:[%s231 + $0x688] sm:$0xff]
        %v544 = vld [vmem:[%s231 + $0x690] sm:$0xff]
        %v545 = vld [vmem:[%s231 + $0x698] sm:$0xff]
        %v546 = vld [vmem:[%s231 + $0x6a0] sm:$0xff]
        %v547 = vld [vmem:[%s231 + $0x6a8] sm:$0xff]
        %v548 = vld [vmem:[%s231 + $0x6b0] sm:$0xff]
        %v549 = vld [vmem:[%s231 + $0x6b8] sm:$0xff]
        %v550 = vld [vmem:[%s231 + $0x6c0] sm:$0xff]
        %v551 = vld [vmem:[%s231 + $0x6c8] sm:$0xff]
        %v552 = vld [vmem:[%s231 + $0x6d0] sm:$0xff]
        %v553 = vld [vmem:[%s231 + $0x6d8] sm:$0xff]
        %v554 = vld [vmem:[%s231 + $0x6e0] sm:$0xff]
        %v555 = vld [vmem:[%s231 + $0x6e8] sm:$0xff]
        %v556 = vld [vmem:[%s231 + $0x6f0] sm:$0xff]
        %v557 = vld [vmem:[%s231 + $0x6f8] sm:$0xff]
        %v558 = vld [vmem:[%s231 + $0x700] sm:$0xff]
        %v559 = vld [vmem:[%s231 + $0x708] sm:$0xff]
        %v560 = vld [vmem:[%s231 + $0x710] sm:$0xff]
        %v561 = vld [vmem:[%s231 + $0x718] sm:$0xff]
        %v562 = vld [vmem:[%s231 + $0x720] sm:$0xff]
        %v563 = vld [vmem:[%s231 + $0x728] sm:$0xff]
        %v564 = vld [vmem:[%s231 + $0x730] sm:$0xff]
        %v565 = vld [vmem:[%s231 + $0x738] sm:$0xff]
        %v566 = vld [vmem:[%s231 + $0x740] sm:$0xff]
        %v567 = vld [vmem:[%s231 + $0x748] sm:$0xff]
        %v568 = vld [vmem:[%s231 + $0x750] sm:$0xff]
        %v569 = vld [vmem:[%s231 + $0x758] sm:$0xff]
        %v570 = vld [vmem:[%s231 + $0x760] sm:$0xff]
        %v571 = vld [vmem:[%s231 + $0x768] sm:$0xff]
        %v572 = vld [vmem:[%s231 + $0x770] sm:$0xff]
        %v573 = vld [vmem:[%s231 + $0x778] sm:$0xff]
        %v574 = vld [vmem:[%s231 + $0x780] sm:$0xff]
        %v575 = vld [vmem:[%s231 + $0x788] sm:$0xff]
        %v576 = vld [vmem:[%s231 + $0x790] sm:$0xff]
        %v577 = vld [vmem:[%s231 + $0x798] sm:$0xff]
        %v578 = vld [vmem:[%s231 + $0x7a0] sm:$0xff]
        %v579 = vld [vmem:[%s231 + $0x7a8] sm:$0xff]
        %v580 = vld [vmem:[%s231 + $0x7b0] sm:$0xff]
        %v581 = vld [vmem:[%s231 + $0x7b8] sm:$0xff]
        %v582 = vld [vmem:[%s231 + $0x7c0] sm:$0xff]
        %v583 = vld [vmem:[%s231 + $0x7c8] sm:$0xff]
        %v584 = vld [vmem:[%s231 + $0x7d0] sm:$0xff]
        %v585 = vld [vmem:[%s231 + $0x7d8] sm:$0xff]
        %v586 = vld [vmem:[%s231 + $0x7e0] sm:$0xff]
        %v587 = vld [vmem:[%s231 + $0x7e8] sm:$0xff]
        %v588 = vld [vmem:[%s231 + $0x7f0] sm:$0xff]
        %v589 = vld [vmem:[%s231 + $0x7f8] sm:$0xff]
        %v846 = vunpack.c.l.b16 %v334
        %v847 = vunpack.c.h.b16 %v334
        %v848 = vunpack.c.l.b16 %v335
        %v849 = vunpack.c.h.b16 %v335
        %v850 = vunpack.c.l.b16 %v336
        %v851 = vunpack.c.h.b16 %v336
        %v852 = vunpack.c.l.b16 %v337
        %v853 = vunpack.c.h.b16 %v337
        %v854 = vunpack.c.l.b16 %v338
        %v855 = vunpack.c.h.b16 %v338
        %v856 = vunpack.c.l.b16 %v339
        %v857 = vunpack.c.h.b16 %v339
        %v858 = vunpack.c.l.b16 %v340
        %v859 = vunpack.c.h.b16 %v340
        %v860 = vunpack.c.l.b16 %v341
        %v861 = vunpack.c.h.b16 %v341
        %v862 = vunpack.c.l.b16 %v342
        %v863 = vunpack.c.h.b16 %v342
        %v864 = vunpack.c.l.b16 %v343
        %v865 = vunpack.c.h.b16 %v343
        %v866 = vunpack.c.l.b16 %v344
        %v867 = vunpack.c.h.b16 %v344
        %v868 = vunpack.c.l.b16 %v345
        %v869 = vunpack.c.h.b16 %v345
        %v870 = vunpack.c.l.b16 %v346
        %v871 = vunpack.c.h.b16 %v346
        %v872 = vunpack.c.l.b16 %v347
        %v873 = vunpack.c.h.b16 %v347
        %v874 = vunpack.c.l.b16 %v348
        %v875 = vunpack.c.h.b16 %v348
        %v876 = vunpack.c.l.b16 %v349
        %v877 = vunpack.c.h.b16 %v349
        %v878 = vunpack.c.l.b16 %v350
        %v879 = vunpack.c.h.b16 %v350
        %v880 = vunpack.c.l.b16 %v351
        %v881 = vunpack.c.h.b16 %v351
        %v882 = vunpack.c.l.b16 %v352
        %v883 = vunpack.c.h.b16 %v352
        %v884 = vunpack.c.l.b16 %v353
        %v885 = vunpack.c.h.b16 %v353
        %v886 = vunpack.c.l.b16 %v354
        %v887 = vunpack.c.h.b16 %v354
        %v888 = vunpack.c.l.b16 %v355
        %v889 = vunpack.c.h.b16 %v355
        %v890 = vunpack.c.l.b16 %v356
        %v891 = vunpack.c.h.b16 %v356
        %v892 = vunpack.c.l.b16 %v357
        %v893 = vunpack.c.h.b16 %v357
        %v894 = vunpack.c.l.b16 %v358
        %v895 = vunpack.c.h.b16 %v358
        %v896 = vunpack.c.l.b16 %v359
        %v897 = vunpack.c.h.b16 %v359
        %v898 = vunpack.c.l.b16 %v360
        %v899 = vunpack.c.h.b16 %v360
        %v900 = vunpack.c.l.b16 %v361
        %v901 = vunpack.c.h.b16 %v361
        %v902 = vunpack.c.l.b16 %v362
        %v903 = vunpack.c.h.b16 %v362
        %v904 = vunpack.c.l.b16 %v363
        %v905 = vunpack.c.h.b16 %v363
        %v906 = vunpack.c.l.b16 %v364
        %v907 = vunpack.c.h.b16 %v364
        %v908 = vunpack.c.l.b16 %v365
        %v909 = vunpack.c.h.b16 %v365
        %v910 = vunpack.c.l.b16 %v366
        %v911 = vunpack.c.h.b16 %v366
        %v912 = vunpack.c.l.b16 %v367
        %v913 = vunpack.c.h.b16 %v367
        %v914 = vunpack.c.l.b16 %v368
        %v915 = vunpack.c.h.b16 %v368
        %v916 = vunpack.c.l.b16 %v369
        %v917 = vunpack.c.h.b16 %v369
        %v918 = vunpack.c.l.b16 %v370
        %v919 = vunpack.c.h.b16 %v370
        %v920 = vunpack.c.l.b16 %v371
        %v921 = vunpack.c.h.b16 %v371
        %v922 = vunpack.c.l.b16 %v372
        %v923 = vunpack.c.h.b16 %v372
        %v924 = vunpack.c.l.b16 %v373
        %v925 = vunpack.c.h.b16 %v373
        %v926 = vunpack.c.l.b16 %v374
        %v927 = vunpack.c.h.b16 %v374
        %v928 = vunpack.c.l.b16 %v375
        %v929 = vunpack.c.h.b16 %v375
        %v930 = vunpack.c.l.b16 %v376
        %v931 = vunpack.c.h.b16 %v376
        %v932 = vunpack.c.l.b16 %v377
        %v933 = vunpack.c.h.b16 %v377
        %v934 = vunpack.c.l.b16 %v378
        %v935 = vunpack.c.h.b16 %v378
        %v936 = vunpack.c.l.b16 %v379
        %v937 = vunpack.c.h.b16 %v379
        %v938 = vunpack.c.l.b16 %v380
        %v939 = vunpack.c.h.b16 %v380
        %v940 = vunpack.c.l.b16 %v381
        %v941 = vunpack.c.h.b16 %v381
        %v942 = vunpack.c.l.b16 %v382
        %v943 = vunpack.c.h.b16 %v382
        %v944 = vunpack.c.l.b16 %v383
        %v945 = vunpack.c.h.b16 %v383
        %v946 = vunpack.c.l.b16 %v384
        %v947 = vunpack.c.h.b16 %v384
        %v948 = vunpack.c.l.b16 %v385
        %v949 = vunpack.c.h.b16 %v385
        %v950 = vunpack.c.l.b16 %v386
        %v951 = vunpack.c.h.b16 %v386
        %v952 = vunpack.c.l.b16 %v387
        %v953 = vunpack.c.h.b16 %v387
        %v954 = vunpack.c.l.b16 %v388
        %v955 = vunpack.c.h.b16 %v388
        %v956 = vunpack.c.l.b16 %v389
        %v957 = vunpack.c.h.b16 %v389
        %v958 = vunpack.c.l.b16 %v390
        %v959 = vunpack.c.h.b16 %v390
        %v960 = vunpack.c.l.b16 %v391
        %v961 = vunpack.c.h.b16 %v391
        %v962 = vunpack.c.l.b16 %v392
        %v963 = vunpack.c.h.b16 %v392
        %v964 = vunpack.c.l.b16 %v393
        %v965 = vunpack.c.h.b16 %v393
        %v966 = vunpack.c.l.b16 %v394
        %v967 = vunpack.c.h.b16 %v394
        %v968 = vunpack.c.l.b16 %v395
        %v969 = vunpack.c.h.b16 %v395
        %v970 = vunpack.c.l.b16 %v396
        %v971 = vunpack.c.h.b16 %v396
        %v972 = vunpack.c.l.b16 %v397
        %v973 = vunpack.c.h.b16 %v397
        %v974 = vunpack.c.l.b16 %v398
        %v975 = vunpack.c.h.b16 %v398
        %v976 = vunpack.c.l.b16 %v399
        %v977 = vunpack.c.h.b16 %v399
        %v978 = vunpack.c.l.b16 %v400
        %v979 = vunpack.c.h.b16 %v400
        %v980 = vunpack.c.l.b16 %v401
        %v981 = vunpack.c.h.b16 %v401
        %v982 = vunpack.c.l.b16 %v402
        %v983 = vunpack.c.h.b16 %v402
        %v984 = vunpack.c.l.b16 %v403
        %v985 = vunpack.c.h.b16 %v403
        %v986 = vunpack.c.l.b16 %v404
        %v987 = vunpack.c.h.b16 %v404
        %v988 = vunpack.c.l.b16 %v405
        %v989 = vunpack.c.h.b16 %v405
        %v990 = vunpack.c.l.b16 %v406
        %v991 = vunpack.c.h.b16 %v406
        %v992 = vunpack.c.l.b16 %v407
        %v993 = vunpack.c.h.b16 %v407
        %v994 = vunpack.c.l.b16 %v408
        %v995 = vunpack.c.h.b16 %v408
        %v996 = vunpack.c.l.b16 %v409
        %v997 = vunpack.c.h.b16 %v409
        %v998 = vunpack.c.l.b16 %v410
        %v999 = vunpack.c.h.b16 %v410
        %v1000 = vunpack.c.l.b16 %v411
        %v1001 = vunpack.c.h.b16 %v411
        %v1002 = vunpack.c.l.b16 %v412
        %v1003 = vunpack.c.h.b16 %v412
        %v1004 = vunpack.c.l.b16 %v413
        %v1005 = vunpack.c.h.b16 %v413
        %v1006 = vunpack.c.l.b16 %v414
        %v1007 = vunpack.c.h.b16 %v414
        %v1008 = vunpack.c.l.b16 %v415
        %v1009 = vunpack.c.h.b16 %v415
        %v1010 = vunpack.c.l.b16 %v416
        %v1011 = vunpack.c.h.b16 %v416
        %v1012 = vunpack.c.l.b16 %v417
        %v1013 = vunpack.c.h.b16 %v417
        %v1014 = vunpack.c.l.b16 %v418
        %v1015 = vunpack.c.h.b16 %v418
        %v1016 = vunpack.c.l.b16 %v419
        %v1017 = vunpack.c.h.b16 %v419
        %v1018 = vunpack.c.l.b16 %v420
        %v1019 = vunpack.c.h.b16 %v420
        %v1020 = vunpack.c.l.b16 %v421
        %v1021 = vunpack.c.h.b16 %v421
        %v1022 = vunpack.c.l.b16 %v422
        %v1023 = vunpack.c.h.b16 %v422
        %v1024 = vunpack.c.l.b16 %v423
        %v1025 = vunpack.c.h.b16 %v423
        %v1026 = vunpack.c.l.b16 %v424
        %v1027 = vunpack.c.h.b16 %v424
        %v1028 = vunpack.c.l.b16 %v425
        %v1029 = vunpack.c.h.b16 %v425
        %v1030 = vunpack.c.l.b16 %v426
        %v1031 = vunpack.c.h.b16 %v426
        %v1032 = vunpack.c.l.b16 %v427
        %v1033 = vunpack.c.h.b16 %v427
        %v1034 = vunpack.c.l.b16 %v428
        %v1035 = vunpack.c.h.b16 %v428
        %v1036 = vunpack.c.l.b16 %v429
        %v1037 = vunpack.c.h.b16 %v429
        %v1038 = vunpack.c.l.b16 %v430
        %v1039 = vunpack.c.h.b16 %v430
        %v1040 = vunpack.c.l.b16 %v431
        %v1041 = vunpack.c.h.b16 %v431
        %v1042 = vunpack.c.l.b16 %v432
        %v1043 = vunpack.c.h.b16 %v432
        %v1044 = vunpack.c.l.b16 %v433
        %v1045 = vunpack.c.h.b16 %v433
        %v1046 = vunpack.c.l.b16 %v434
        %v1047 = vunpack.c.h.b16 %v434
        %v1048 = vunpack.c.l.b16 %v435
        %v1049 = vunpack.c.h.b16 %v435
        %v1050 = vunpack.c.l.b16 %v436
        %v1051 = vunpack.c.h.b16 %v436
        %v1052 = vunpack.c.l.b16 %v437
        %v1053 = vunpack.c.h.b16 %v437
        %v1054 = vunpack.c.l.b16 %v438
        %v1055 = vunpack.c.h.b16 %v438
        %v1056 = vunpack.c.l.b16 %v439
        %v1057 = vunpack.c.h.b16 %v439
        %v1058 = vunpack.c.l.b16 %v440
        %v1059 = vunpack.c.h.b16 %v440
        %v1060 = vunpack.c.l.b16 %v441
        %v1061 = vunpack.c.h.b16 %v441
        %v1062 = vunpack.c.l.b16 %v442
        %v1063 = vunpack.c.h.b16 %v442
        %v1064 = vunpack.c.l.b16 %v443
        %v1065 = vunpack.c.h.b16 %v443
        %v1066 = vunpack.c.l.b16 %v444
        %v1067 = vunpack.c.h.b16 %v444
        %v1068 = vunpack.c.l.b16 %v445
        %v1069 = vunpack.c.h.b16 %v445
        %v1070 = vunpack.c.l.b16 %v446
        %v1071 = vunpack.c.h.b16 %v446
        %v1072 = vunpack.c.l.b16 %v447
        %v1073 = vunpack.c.h.b16 %v447
        %v1074 = vunpack.c.l.b16 %v448
        %v1075 = vunpack.c.h.b16 %v448
        %v1076 = vunpack.c.l.b16 %v449
        %v1077 = vunpack.c.h.b16 %v449
        %v1078 = vunpack.c.l.b16 %v450
        %v1079 = vunpack.c.h.b16 %v450
        %v1080 = vunpack.c.l.b16 %v451
        %v1081 = vunpack.c.h.b16 %v451
        %v1082 = vunpack.c.l.b16 %v452
        %v1083 = vunpack.c.h.b16 %v452
        %v1084 = vunpack.c.l.b16 %v453
        %v1085 = vunpack.c.h.b16 %v453
        %v1086 = vunpack.c.l.b16 %v454
        %v1087 = vunpack.c.h.b16 %v454
        %v1088 = vunpack.c.l.b16 %v455
        %v1089 = vunpack.c.h.b16 %v455
        %v1090 = vunpack.c.l.b16 %v456
        %v1091 = vunpack.c.h.b16 %v456
        %v1092 = vunpack.c.l.b16 %v457
        %v1093 = vunpack.c.h.b16 %v457
        %v1094 = vunpack.c.l.b16 %v458
        %v1095 = vunpack.c.h.b16 %v458
        %v1096 = vunpack.c.l.b16 %v459
        %v1097 = vunpack.c.h.b16 %v459
        %v1098 = vunpack.c.l.b16 %v460
        %v1099 = vunpack.c.h.b16 %v460
        %v1100 = vunpack.c.l.b16 %v461
        %v1101 = vunpack.c.h.b16 %v461
        %v1102 = vunpack.c.l.b16 %v462
        %v1103 = vunpack.c.h.b16 %v462
        %v1104 = vunpack.c.l.b16 %v463
        %v1105 = vunpack.c.h.b16 %v463
        %v1106 = vunpack.c.l.b16 %v464
        %v1107 = vunpack.c.h.b16 %v464
        %v1108 = vunpack.c.l.b16 %v465
        %v1109 = vunpack.c.h.b16 %v465
        %v1110 = vunpack.c.l.b16 %v466
        %v1111 = vunpack.c.h.b16 %v466
        %v1112 = vunpack.c.l.b16 %v467
        %v1113 = vunpack.c.h.b16 %v467
        %v1114 = vunpack.c.l.b16 %v468
        %v1115 = vunpack.c.h.b16 %v468
        %v1116 = vunpack.c.l.b16 %v469
        %v1117 = vunpack.c.h.b16 %v469
        %v1118 = vunpack.c.l.b16 %v470
        %v1119 = vunpack.c.h.b16 %v470
        %v1120 = vunpack.c.l.b16 %v471
        %v1121 = vunpack.c.h.b16 %v471
        %v1122 = vunpack.c.l.b16 %v472
        %v1123 = vunpack.c.h.b16 %v472
        %v1124 = vunpack.c.l.b16 %v473
        %v1125 = vunpack.c.h.b16 %v473
        %v1126 = vunpack.c.l.b16 %v474
        %v1127 = vunpack.c.h.b16 %v474
        %v1128 = vunpack.c.l.b16 %v475
        %v1129 = vunpack.c.h.b16 %v475
        %v1130 = vunpack.c.l.b16 %v476
        %v1131 = vunpack.c.h.b16 %v476
        %v1132 = vunpack.c.l.b16 %v477
        %v1133 = vunpack.c.h.b16 %v477
        %v1134 = vunpack.c.l.b16 %v478
        %v1135 = vunpack.c.h.b16 %v478
        %v1136 = vunpack.c.l.b16 %v479
        %v1137 = vunpack.c.h.b16 %v479
        %v1138 = vunpack.c.l.b16 %v480
        %v1139 = vunpack.c.h.b16 %v480
        %v1140 = vunpack.c.l.b16 %v481
        %v1141 = vunpack.c.h.b16 %v481
        %v1142 = vunpack.c.l.b16 %v482
        %v1143 = vunpack.c.h.b16 %v482
        %v1144 = vunpack.c.l.b16 %v483
        %v1145 = vunpack.c.h.b16 %v483
        %v1146 = vunpack.c.l.b16 %v484
        %v1147 = vunpack.c.h.b16 %v484
        %v1148 = vunpack.c.l.b16 %v485
        %v1149 = vunpack.c.h.b16 %v485
        %v1150 = vunpack.c.l.b16 %v486
        %v1151 = vunpack.c.h.b16 %v486
        %v1152 = vunpack.c.l.b16 %v487
        %v1153 = vunpack.c.h.b16 %v487
        %v1154 = vunpack.c.l.b16 %v488
        %v1155 = vunpack.c.h.b16 %v488
        %v1156 = vunpack.c.l.b16 %v489
        %v1157 = vunpack.c.h.b16 %v489
        %v1158 = vunpack.c.l.b16 %v490
        %v1159 = vunpack.c.h.b16 %v490
        %v1160 = vunpack.c.l.b16 %v491
        %v1161 = vunpack.c.h.b16 %v491
        %v1162 = vunpack.c.l.b16 %v492
        %v1163 = vunpack.c.h.b16 %v492
        %v1164 = vunpack.c.l.b16 %v493
        %v1165 = vunpack.c.h.b16 %v493
        %v1166 = vunpack.c.l.b16 %v494
        %v1167 = vunpack.c.h.b16 %v494
        %v1168 = vunpack.c.l.b16 %v495
        %v1169 = vunpack.c.h.b16 %v495
        %v1170 = vunpack.c.l.b16 %v496
        %v1171 = vunpack.c.h.b16 %v496
        %v1172 = vunpack.c.l.b16 %v497
        %v1173 = vunpack.c.h.b16 %v497
        %v1174 = vunpack.c.l.b16 %v498
        %v1175 = vunpack.c.h.b16 %v498
        %v1176 = vunpack.c.l.b16 %v499
        %v1177 = vunpack.c.h.b16 %v499
        %v1178 = vunpack.c.l.b16 %v500
        %v1179 = vunpack.c.h.b16 %v500
        %v1180 = vunpack.c.l.b16 %v501
        %v1181 = vunpack.c.h.b16 %v501
        %v1182 = vunpack.c.l.b16 %v502
        %v1183 = vunpack.c.h.b16 %v502
        %v1184 = vunpack.c.l.b16 %v503
        %v1185 = vunpack.c.h.b16 %v503
        %v1186 = vunpack.c.l.b16 %v504
        %v1187 = vunpack.c.h.b16 %v504
        %v1188 = vunpack.c.l.b16 %v505
        %v1189 = vunpack.c.h.b16 %v505
        %v1190 = vunpack.c.l.b16 %v506
        %v1191 = vunpack.c.h.b16 %v506
        %v1192 = vunpack.c.l.b16 %v507
        %v1193 = vunpack.c.h.b16 %v507
        %v1194 = vunpack.c.l.b16 %v508
        %v1195 = vunpack.c.h.b16 %v508
        %v1196 = vunpack.c.l.b16 %v509
        %v1197 = vunpack.c.h.b16 %v509
        %v1198 = vunpack.c.l.b16 %v510
        %v1199 = vunpack.c.h.b16 %v510
        %v1200 = vunpack.c.l.b16 %v511
        %v1201 = vunpack.c.h.b16 %v511
        %v1202 = vunpack.c.l.b16 %v512
        %v1203 = vunpack.c.h.b16 %v512
        %v1204 = vunpack.c.l.b16 %v513
        %v1205 = vunpack.c.h.b16 %v513
        %v1206 = vunpack.c.l.b16 %v514
        %v1207 = vunpack.c.h.b16 %v514
        %v1208 = vunpack.c.l.b16 %v515
        %v1209 = vunpack.c.h.b16 %v515
        %v1210 = vunpack.c.l.b16 %v516
        %v1211 = vunpack.c.h.b16 %v516
        %v1212 = vunpack.c.l.b16 %v517
        %v1213 = vunpack.c.h.b16 %v517
        %v1214 = vunpack.c.l.b16 %v518
        %v1215 = vunpack.c.h.b16 %v518
        %v1216 = vunpack.c.l.b16 %v519
        %v1217 = vunpack.c.h.b16 %v519
        %v1218 = vunpack.c.l.b16 %v520
        %v1219 = vunpack.c.h.b16 %v520
        %v1220 = vunpack.c.l.b16 %v521
        %v1221 = vunpack.c.h.b16 %v521
        %v1222 = vunpack.c.l.b16 %v522
        %v1223 = vunpack.c.h.b16 %v522
        %v1224 = vunpack.c.l.b16 %v523
        %v1225 = vunpack.c.h.b16 %v523
        %v1226 = vunpack.c.l.b16 %v524
        %v1227 = vunpack.c.h.b16 %v524
        %v1228 = vunpack.c.l.b16 %v525
        %v1229 = vunpack.c.h.b16 %v525
        %v1230 = vunpack.c.l.b16 %v526
        %v1231 = vunpack.c.h.b16 %v526
        %v1232 = vunpack.c.l.b16 %v527
        %v1233 = vunpack.c.h.b16 %v527
        %v1234 = vunpack.c.l.b16 %v528
        %v1235 = vunpack.c.h.b16 %v528
        %v1236 = vunpack.c.l.b16 %v529
        %v1237 = vunpack.c.h.b16 %v529
        %v1238 = vunpack.c.l.b16 %v530
        %v1239 = vunpack.c.h.b16 %v530
        %v1240 = vunpack.c.l.b16 %v531
        %v1241 = vunpack.c.h.b16 %v531
        %v1242 = vunpack.c.l.b16 %v532
        %v1243 = vunpack.c.h.b16 %v532
        %v1244 = vunpack.c.l.b16 %v533
        %v1245 = vunpack.c.h.b16 %v533
        %v1246 = vunpack.c.l.b16 %v534
        %v1247 = vunpack.c.h.b16 %v534
        %v1248 = vunpack.c.l.b16 %v535
        %v1249 = vunpack.c.h.b16 %v535
        %v1250 = vunpack.c.l.b16 %v536
        %v1251 = vunpack.c.h.b16 %v536
        %v1252 = vunpack.c.l.b16 %v537
        %v1253 = vunpack.c.h.b16 %v537
        %v1254 = vunpack.c.l.b16 %v538
        %v1255 = vunpack.c.h.b16 %v538
        %v1256 = vunpack.c.l.b16 %v539
        %v1257 = vunpack.c.h.b16 %v539
        %v1258 = vunpack.c.l.b16 %v540
        %v1259 = vunpack.c.h.b16 %v540
        %v1260 = vunpack.c.l.b16 %v541
        %v1261 = vunpack.c.h.b16 %v541
        %v1262 = vunpack.c.l.b16 %v542
        %v1263 = vunpack.c.h.b16 %v542
        %v1264 = vunpack.c.l.b16 %v543
        %v1265 = vunpack.c.h.b16 %v543
        %v1266 = vunpack.c.l.b16 %v544
        %v1267 = vunpack.c.h.b16 %v544
        %v1268 = vunpack.c.l.b16 %v545
        %v1269 = vunpack.c.h.b16 %v545
        %v1270 = vunpack.c.l.b16 %v546
        %v1271 = vunpack.c.h.b16 %v546
        %v1272 = vunpack.c.l.b16 %v547
        %v1273 = vunpack.c.h.b16 %v547
        %v1274 = vunpack.c.l.b16 %v548
        %v1275 = vunpack.c.h.b16 %v548
        %v1276 = vunpack.c.l.b16 %v549
        %v1277 = vunpack.c.h.b16 %v549
        %v1278 = vunpack.c.l.b16 %v550
        %v1279 = vunpack.c.h.b16 %v550
        %v1280 = vunpack.c.l.b16 %v551
        %v1281 = vunpack.c.h.b16 %v551
        %v1282 = vunpack.c.l.b16 %v552
        %v1283 = vunpack.c.h.b16 %v552
        %v1284 = vunpack.c.l.b16 %v553
        %v1285 = vunpack.c.h.b16 %v553
        %v1286 = vunpack.c.l.b16 %v554
        %v1287 = vunpack.c.h.b16 %v554
        %v1288 = vunpack.c.l.b16 %v555
        %v1289 = vunpack.c.h.b16 %v555
        %v1290 = vunpack.c.l.b16 %v556
        %v1291 = vunpack.c.h.b16 %v556
        %v1292 = vunpack.c.l.b16 %v557
        %v1293 = vunpack.c.h.b16 %v557
        %v1294 = vunpack.c.l.b16 %v558
        %v1295 = vunpack.c.h.b16 %v558
        %v1296 = vunpack.c.l.b16 %v559
        %v1297 = vunpack.c.h.b16 %v559
        %v1298 = vunpack.c.l.b16 %v560
        %v1299 = vunpack.c.h.b16 %v560
        %v1300 = vunpack.c.l.b16 %v561
        %v1301 = vunpack.c.h.b16 %v561
        %v1302 = vunpack.c.l.b16 %v562
        %v1303 = vunpack.c.h.b16 %v562
        %v1304 = vunpack.c.l.b16 %v563
        %v1305 = vunpack.c.h.b16 %v563
        %v1306 = vunpack.c.l.b16 %v564
        %v1307 = vunpack.c.h.b16 %v564
        %v1308 = vunpack.c.l.b16 %v565
        %v1309 = vunpack.c.h.b16 %v565
        %v1310 = vunpack.c.l.b16 %v566
        %v1311 = vunpack.c.h.b16 %v566
        %v1312 = vunpack.c.l.b16 %v567
        %v1313 = vunpack.c.h.b16 %v567
        %v1314 = vunpack.c.l.b16 %v568
        %v1315 = vunpack.c.h.b16 %v568
        %v1316 = vunpack.c.l.b16 %v569
        %v1317 = vunpack.c.h.b16 %v569
        %v1318 = vunpack.c.l.b16 %v570
        %v1319 = vunpack.c.h.b16 %v570
        %v1320 = vunpack.c.l.b16 %v571
        %v1321 = vunpack.c.h.b16 %v571
        %v1322 = vunpack.c.l.b16 %v572
        %v1323 = vunpack.c.h.b16 %v572
        %v1324 = vunpack.c.l.b16 %v573
        %v1325 = vunpack.c.h.b16 %v573
        %v1326 = vunpack.c.l.b16 %v574
        %v1327 = vunpack.c.h.b16 %v574
        %v1328 = vunpack.c.l.b16 %v575
        %v1329 = vunpack.c.h.b16 %v575
        %v1330 = vunpack.c.l.b16 %v576
        %v1331 = vunpack.c.h.b16 %v576
        %v1332 = vunpack.c.l.b16 %v577
        %v1333 = vunpack.c.h.b16 %v577
        %v1334 = vunpack.c.l.b16 %v578
        %v1335 = vunpack.c.h.b16 %v578
        %v1336 = vunpack.c.l.b16 %v579
        %v1337 = vunpack.c.h.b16 %v579
        %v1338 = vunpack.c.l.b16 %v580
        %v1339 = vunpack.c.h.b16 %v580
        %v1340 = vunpack.c.l.b16 %v581
        %v1341 = vunpack.c.h.b16 %v581
        %v1342 = vunpack.c.l.b16 %v582
        %v1343 = vunpack.c.h.b16 %v582
        %v1344 = vunpack.c.l.b16 %v583
        %v1345 = vunpack.c.h.b16 %v583
        %v1346 = vunpack.c.l.b16 %v584
        %v1347 = vunpack.c.h.b16 %v584
        %v1348 = vunpack.c.l.b16 %v585
        %v1349 = vunpack.c.h.b16 %v585
        %v1350 = vunpack.c.l.b16 %v586
        %v1351 = vunpack.c.h.b16 %v586
        %v1352 = vunpack.c.l.b16 %v587
        %v1353 = vunpack.c.h.b16 %v587
        %v1354 = vunpack.c.l.b16 %v588
        %v1355 = vunpack.c.h.b16 %v588
        %v1356 = vunpack.c.l.b16 %v589
        %v1357 = vunpack.c.h.b16 %v589
        %v1358 = vpack.c.b16 %v850, %v846
        %v1359 = vpack.c.b16 %v851, %v847
        %v1360 = vpack.c.b16 %v852, %v848
        %v1361 = vpack.c.b16 %v853, %v849
        %v1362 = vpack.c.b16 %v858, %v854
        %v1363 = vpack.c.b16 %v859, %v855
        %v1364 = vpack.c.b16 %v860, %v856
        %v1365 = vpack.c.b16 %v861, %v857
        %v1366 = vpack.c.b16 %v866, %v862
        %v1367 = vpack.c.b16 %v867, %v863
        %v1368 = vpack.c.b16 %v868, %v864
        %v1369 = vpack.c.b16 %v869, %v865
        %v1370 = vpack.c.b16 %v874, %v870
        %v1371 = vpack.c.b16 %v875, %v871
        %v1372 = vpack.c.b16 %v876, %v872
        %v1373 = vpack.c.b16 %v877, %v873
        %v1374 = vpack.c.b16 %v882, %v878
        %v1375 = vpack.c.b16 %v883, %v879
        %v1376 = vpack.c.b16 %v884, %v880
        %v1377 = vpack.c.b16 %v885, %v881
        %v1378 = vpack.c.b16 %v890, %v886
        %v1379 = vpack.c.b16 %v891, %v887
        %v1380 = vpack.c.b16 %v892, %v888
        %v1381 = vpack.c.b16 %v893, %v889
        %v1382 = vpack.c.b16 %v898, %v894
        %v1383 = vpack.c.b16 %v899, %v895
        %v1384 = vpack.c.b16 %v900, %v896
        %v1385 = vpack.c.b16 %v901, %v897
        %v1386 = vpack.c.b16 %v906, %v902
        %v1387 = vpack.c.b16 %v907, %v903
        %v1388 = vpack.c.b16 %v908, %v904
        %v1389 = vpack.c.b16 %v909, %v905
        %v1390 = vpack.c.b16 %v914, %v910
        %v1391 = vpack.c.b16 %v915, %v911
        %v1392 = vpack.c.b16 %v916, %v912
        %v1393 = vpack.c.b16 %v917, %v913
        %v1394 = vpack.c.b16 %v922, %v918
        %v1395 = vpack.c.b16 %v923, %v919
        %v1396 = vpack.c.b16 %v924, %v920
        %v1397 = vpack.c.b16 %v925, %v921
        %v1398 = vpack.c.b16 %v930, %v926
        %v1399 = vpack.c.b16 %v931, %v927
        %v1400 = vpack.c.b16 %v932, %v928
        %v1401 = vpack.c.b16 %v933, %v929
        %v1402 = vpack.c.b16 %v938, %v934
        %v1403 = vpack.c.b16 %v939, %v935
        %v1404 = vpack.c.b16 %v940, %v936
        %v1405 = vpack.c.b16 %v941, %v937
        %v1406 = vpack.c.b16 %v946, %v942
        %v1407 = vpack.c.b16 %v947, %v943
        %v1408 = vpack.c.b16 %v948, %v944
        %v1409 = vpack.c.b16 %v949, %v945
        %v1410 = vpack.c.b16 %v954, %v950
        %v1411 = vpack.c.b16 %v955, %v951
        %v1412 = vpack.c.b16 %v956, %v952
        %v1413 = vpack.c.b16 %v957, %v953
        %v1414 = vpack.c.b16 %v962, %v958
        %v1415 = vpack.c.b16 %v963, %v959
        %v1416 = vpack.c.b16 %v964, %v960
        %v1417 = vpack.c.b16 %v965, %v961
        %v1418 = vpack.c.b16 %v970, %v966
        %v1419 = vpack.c.b16 %v971, %v967
        %v1420 = vpack.c.b16 %v972, %v968
        %v1421 = vpack.c.b16 %v973, %v969
        %v1422 = vpack.c.b16 %v978, %v974
        %v1423 = vpack.c.b16 %v979, %v975
        %v1424 = vpack.c.b16 %v980, %v976
        %v1425 = vpack.c.b16 %v981, %v977
        %v1426 = vpack.c.b16 %v986, %v982
        %v1427 = vpack.c.b16 %v987, %v983
        %v1428 = vpack.c.b16 %v988, %v984
        %v1429 = vpack.c.b16 %v989, %v985
        %v1430 = vpack.c.b16 %v994, %v990
        %v1431 = vpack.c.b16 %v995, %v991
        %v1432 = vpack.c.b16 %v996, %v992
        %v1433 = vpack.c.b16 %v997, %v993
        %v1434 = vpack.c.b16 %v1002, %v998
        %v1435 = vpack.c.b16 %v1003, %v999
        %v1436 = vpack.c.b16 %v1004, %v1000
        %v1437 = vpack.c.b16 %v1005, %v1001
        %v1438 = vpack.c.b16 %v1010, %v1006
        %v1439 = vpack.c.b16 %v1011, %v1007
        %v1440 = vpack.c.b16 %v1012, %v1008
        %v1441 = vpack.c.b16 %v1013, %v1009
        %v1442 = vpack.c.b16 %v1018, %v1014
        %v1443 = vpack.c.b16 %v1019, %v1015
        %v1444 = vpack.c.b16 %v1020, %v1016
        %v1445 = vpack.c.b16 %v1021, %v1017
        %v1446 = vpack.c.b16 %v1026, %v1022
        %v1447 = vpack.c.b16 %v1027, %v1023
        %v1448 = vpack.c.b16 %v1028, %v1024
        %v1449 = vpack.c.b16 %v1029, %v1025
        %v1450 = vpack.c.b16 %v1034, %v1030
        %v1451 = vpack.c.b16 %v1035, %v1031
        %v1452 = vpack.c.b16 %v1036, %v1032
        %v1453 = vpack.c.b16 %v1037, %v1033
        %v1454 = vpack.c.b16 %v1042, %v1038
        %v1455 = vpack.c.b16 %v1043, %v1039
        %v1456 = vpack.c.b16 %v1044, %v1040
        %v1457 = vpack.c.b16 %v1045, %v1041
        %v1458 = vpack.c.b16 %v1050, %v1046
        %v1459 = vpack.c.b16 %v1051, %v1047
        %v1460 = vpack.c.b16 %v1052, %v1048
        %v1461 = vpack.c.b16 %v1053, %v1049
        %v1462 = vpack.c.b16 %v1058, %v1054
        %v1463 = vpack.c.b16 %v1059, %v1055
        %v1464 = vpack.c.b16 %v1060, %v1056
        %v1465 = vpack.c.b16 %v1061, %v1057
        %v1466 = vpack.c.b16 %v1066, %v1062
        %v1467 = vpack.c.b16 %v1067, %v1063
        %v1468 = vpack.c.b16 %v1068, %v1064
        %v1469 = vpack.c.b16 %v1069, %v1065
        %v1470 = vpack.c.b16 %v1074, %v1070
        %v1471 = vpack.c.b16 %v1075, %v1071
        %v1472 = vpack.c.b16 %v1076, %v1072
        %v1473 = vpack.c.b16 %v1077, %v1073
        %v1474 = vpack.c.b16 %v1082, %v1078
        %v1475 = vpack.c.b16 %v1083, %v1079
        %v1476 = vpack.c.b16 %v1084, %v1080
        %v1477 = vpack.c.b16 %v1085, %v1081
        %v1478 = vpack.c.b16 %v1090, %v1086
        %v1479 = vpack.c.b16 %v1091, %v1087
        %v1480 = vpack.c.b16 %v1092, %v1088
        %v1481 = vpack.c.b16 %v1093, %v1089
        %v1482 = vpack.c.b16 %v1098, %v1094
        %v1483 = vpack.c.b16 %v1099, %v1095
        %v1484 = vpack.c.b16 %v1100, %v1096
        %v1485 = vpack.c.b16 %v1101, %v1097
        %v1486 = vpack.c.b16 %v1106, %v1102
        %v1487 = vpack.c.b16 %v1107, %v1103
        %v1488 = vpack.c.b16 %v1108, %v1104
        %v1489 = vpack.c.b16 %v1109, %v1105
        %v1490 = vpack.c.b16 %v1114, %v1110
        %v1491 = vpack.c.b16 %v1115, %v1111
        %v1492 = vpack.c.b16 %v1116, %v1112
        %v1493 = vpack.c.b16 %v1117, %v1113
        %v1494 = vpack.c.b16 %v1122, %v1118
        %v1495 = vpack.c.b16 %v1123, %v1119
        %v1496 = vpack.c.b16 %v1124, %v1120
        %v1497 = vpack.c.b16 %v1125, %v1121
        %v1498 = vpack.c.b16 %v1130, %v1126
        %v1499 = vpack.c.b16 %v1131, %v1127
        %v1500 = vpack.c.b16 %v1132, %v1128
        %v1501 = vpack.c.b16 %v1133, %v1129
        %v1502 = vpack.c.b16 %v1138, %v1134
        %v1503 = vpack.c.b16 %v1139, %v1135
        %v1504 = vpack.c.b16 %v1140, %v1136
        %v1505 = vpack.c.b16 %v1141, %v1137
        %v1506 = vpack.c.b16 %v1146, %v1142
        %v1507 = vpack.c.b16 %v1147, %v1143
        %v1508 = vpack.c.b16 %v1148, %v1144
        %v1509 = vpack.c.b16 %v1149, %v1145
        %v1510 = vpack.c.b16 %v1154, %v1150
        %v1511 = vpack.c.b16 %v1155, %v1151
        %v1512 = vpack.c.b16 %v1156, %v1152
        %v1513 = vpack.c.b16 %v1157, %v1153
        %v1514 = vpack.c.b16 %v1162, %v1158
        %v1515 = vpack.c.b16 %v1163, %v1159
        %v1516 = vpack.c.b16 %v1164, %v1160
        %v1517 = vpack.c.b16 %v1165, %v1161
        %v1518 = vpack.c.b16 %v1170, %v1166
        %v1519 = vpack.c.b16 %v1171, %v1167
        %v1520 = vpack.c.b16 %v1172, %v1168
        %v1521 = vpack.c.b16 %v1173, %v1169
        %v1522 = vpack.c.b16 %v1178, %v1174
        %v1523 = vpack.c.b16 %v1179, %v1175
        %v1524 = vpack.c.b16 %v1180, %v1176
        %v1525 = vpack.c.b16 %v1181, %v1177
        %v1526 = vpack.c.b16 %v1186, %v1182
        %v1527 = vpack.c.b16 %v1187, %v1183
        %v1528 = vpack.c.b16 %v1188, %v1184
        %v1529 = vpack.c.b16 %v1189, %v1185
        %v1530 = vpack.c.b16 %v1194, %v1190
        %v1531 = vpack.c.b16 %v1195, %v1191
        %v1532 = vpack.c.b16 %v1196, %v1192
        %v1533 = vpack.c.b16 %v1197, %v1193
        %v1534 = vpack.c.b16 %v1202, %v1198
        %v1535 = vpack.c.b16 %v1203, %v1199
        %v1536 = vpack.c.b16 %v1204, %v1200
        %v1537 = vpack.c.b16 %v1205, %v1201
        %v1538 = vpack.c.b16 %v1210, %v1206
        %v1539 = vpack.c.b16 %v1211, %v1207
        %v1540 = vpack.c.b16 %v1212, %v1208
        %v1541 = vpack.c.b16 %v1213, %v1209
        %v1542 = vpack.c.b16 %v1218, %v1214
        %v1543 = vpack.c.b16 %v1219, %v1215
        %v1544 = vpack.c.b16 %v1220, %v1216
        %v1545 = vpack.c.b16 %v1221, %v1217
        %v1546 = vpack.c.b16 %v1226, %v1222
        %v1547 = vpack.c.b16 %v1227, %v1223
        %v1548 = vpack.c.b16 %v1228, %v1224
        %v1549 = vpack.c.b16 %v1229, %v1225
        %v1550 = vpack.c.b16 %v1234, %v1230
        %v1551 = vpack.c.b16 %v1235, %v1231
        %v1552 = vpack.c.b16 %v1236, %v1232
        %v1553 = vpack.c.b16 %v1237, %v1233
        %v1554 = vpack.c.b16 %v1242, %v1238
        %v1555 = vpack.c.b16 %v1243, %v1239
        %v1556 = vpack.c.b16 %v1244, %v1240
        %v1557 = vpack.c.b16 %v1245, %v1241
        %v1558 = vpack.c.b16 %v1250, %v1246
        %v1559 = vpack.c.b16 %v1251, %v1247
        %v1560 = vpack.c.b16 %v1252, %v1248
        %v1561 = vpack.c.b16 %v1253, %v1249
        %v1562 = vpack.c.b16 %v1258, %v1254
        %v1563 = vpack.c.b16 %v1259, %v1255
        %v1564 = vpack.c.b16 %v1260, %v1256
        %v1565 = vpack.c.b16 %v1261, %v1257
        %v1566 = vpack.c.b16 %v1266, %v1262
        %v1567 = vpack.c.b16 %v1267, %v1263
        %v1568 = vpack.c.b16 %v1268, %v1264
        %v1569 = vpack.c.b16 %v1269, %v1265
        %v1570 = vpack.c.b16 %v1274, %v1270
        %v1571 = vpack.c.b16 %v1275, %v1271
        %v1572 = vpack.c.b16 %v1276, %v1272
        %v1573 = vpack.c.b16 %v1277, %v1273
        %v1574 = vpack.c.b16 %v1282, %v1278
        %v1575 = vpack.c.b16 %v1283, %v1279
        %v1576 = vpack.c.b16 %v1284, %v1280
        %v1577 = vpack.c.b16 %v1285, %v1281
        %v1578 = vpack.c.b16 %v1290, %v1286
        %v1579 = vpack.c.b16 %v1291, %v1287
        %v1580 = vpack.c.b16 %v1292, %v1288
        %v1581 = vpack.c.b16 %v1293, %v1289
        %v1582 = vpack.c.b16 %v1298, %v1294
        %v1583 = vpack.c.b16 %v1299, %v1295
        %v1584 = vpack.c.b16 %v1300, %v1296
        %v1585 = vpack.c.b16 %v1301, %v1297
        %v1586 = vpack.c.b16 %v1306, %v1302
        %v1587 = vpack.c.b16 %v1307, %v1303
        %v1588 = vpack.c.b16 %v1308, %v1304
        %v1589 = vpack.c.b16 %v1309, %v1305
        %v1590 = vpack.c.b16 %v1314, %v1310
        %v1591 = vpack.c.b16 %v1315, %v1311
        %v1592 = vpack.c.b16 %v1316, %v1312
        %v1593 = vpack.c.b16 %v1317, %v1313
        %v1594 = vpack.c.b16 %v1322, %v1318
        %v1595 = vpack.c.b16 %v1323, %v1319
        %v1596 = vpack.c.b16 %v1324, %v1320
        %v1597 = vpack.c.b16 %v1325, %v1321
        %v1598 = vpack.c.b16 %v1330, %v1326
        %v1599 = vpack.c.b16 %v1331, %v1327
        %v1600 = vpack.c.b16 %v1332, %v1328
        %v1601 = vpack.c.b16 %v1333, %v1329
        %v1602 = vpack.c.b16 %v1338, %v1334
        %v1603 = vpack.c.b16 %v1339, %v1335
        %v1604 = vpack.c.b16 %v1340, %v1336
        %v1605 = vpack.c.b16 %v1341, %v1337
        %v1606 = vpack.c.b16 %v1346, %v1342
        %v1607 = vpack.c.b16 %v1347, %v1343
        %v1608 = vpack.c.b16 %v1348, %v1344
        %v1609 = vpack.c.b16 %v1349, %v1345
        %v1610 = vpack.c.b16 %v1354, %v1350
        %v1611 = vpack.c.b16 %v1355, %v1351
        %v1612 = vpack.c.b16 %v1356, %v1352
        %v1613 = vpack.c.b16 %v1357, %v1353
        %1870 = vmatpush.bf16.msra.mxu0 %v1386
        %1871 = vmatpush.bf16.msra.mxu0 %v1382
        %1872 = vmatpush.bf16.msra.mxu0 %v1378
        %1873 = vmatpush.bf16.msra.mxu0 %v1374
        %1874 = vmatpush.bf16.msra.mxu0 %v1370
        %1875 = vmatpush.bf16.msra.mxu0 %v1366
        %1876 = vmatpush.bf16.msra.mxu0 %v1362
        %1877 = vmatpush.bf16.msra.mxu0 %v1358
        %1878 = vmatmul.bf16.gmra.mxu0 %v326
        %v1879 = vpop.f32.mrf.mxu0
        %v1880 = vadd.f32 0.0, %v1879
        %v1881 = vpop.f32.mrf.mxu0
        %1882 = vdwg.mxu0
        %1883 = vmatpush.bf16.msra.mxu0 %v1418
        %1884 = vmatpush.bf16.msra.mxu0 %v1414
        %1885 = vmatpush.bf16.msra.mxu0 %v1410
        %1886 = vmatpush.bf16.msra.mxu0 %v1406
        %1887 = vmatpush.bf16.msra.mxu0 %v1402
        %1888 = vmatpush.bf16.msra.mxu0 %v1398
        %1889 = vmatpush.bf16.msra.mxu0 %v1394
        %1890 = vmatpush.bf16.msra.mxu0 %v1390
        %1891 = vmatmul.bf16.gmra.mxu0 %v327
        %v1892 = vpop.f32.mrf.mxu0
        %v1893 = vadd.f32 %v1880, %v1892
        %v1894 = vpop.f32.mrf.mxu0
        %1895 = vdwg.mxu0
        %1896 = vmatpush.bf16.msra.mxu0 %v1450
        %1897 = vmatpush.bf16.msra.mxu0 %v1446
        %1898 = vmatpush.bf16.msra.mxu0 %v1442
        %1899 = vmatpush.bf16.msra.mxu0 %v1438
        %1900 = vmatpush.bf16.msra.mxu0 %v1434
        %1901 = vmatpush.bf16.msra.mxu0 %v1430
        %1902 = vmatpush.bf16.msra.mxu0 %v1426
        %1903 = vmatpush.bf16.msra.mxu0 %v1422
        %1904 = vmatmul.bf16.gmra.mxu0 %v328
        %v1905 = vpop.f32.mrf.mxu0
        %v1906 = vadd.f32 %v1893, %v1905
        %v1907 = vpop.f32.mrf.mxu0
        %1908 = vdwg.mxu0
        %1909 = vmatpush.bf16.msra.mxu0 %v1482
        %1910 = vmatpush.bf16.msra.mxu0 %v1478
        %1911 = vmatpush.bf16.msra.mxu0 %v1474
        %1912 = vmatpush.bf16.msra.mxu0 %v1470
        %1913 = vmatpush.bf16.msra.mxu0 %v1466
        %1914 = vmatpush.bf16.msra.mxu0 %v1462
        %1915 = vmatpush.bf16.msra.mxu0 %v1458
        %1916 = vmatpush.bf16.msra.mxu0 %v1454
        %1917 = vmatmul.bf16.gmra.mxu0 %v329
        %v1918 = vpop.f32.mrf.mxu0
        %v1919 = vadd.f32 %v1906, %v1918
        %v1920 = vpop.f32.mrf.mxu0
        %1921 = vdwg.mxu0
        %1922 = vmatpush.bf16.msra.mxu0 %v1514
        %1923 = vmatpush.bf16.msra.mxu0 %v1510
        %1924 = vmatpush.bf16.msra.mxu0 %v1506
        %1925 = vmatpush.bf16.msra.mxu0 %v1502
        %1926 = vmatpush.bf16.msra.mxu0 %v1498
        %1927 = vmatpush.bf16.msra.mxu0 %v1494
        %1928 = vmatpush.bf16.msra.mxu0 %v1490
        %1929 = vmatpush.bf16.msra.mxu0 %v1486
        %1930 = vmatmul.bf16.gmra.mxu0 %v330
        %v1931 = vpop.f32.mrf.mxu0
        %v1932 = vadd.f32 %v1919, %v1931
        %v1933 = vpop.f32.mrf.mxu0
        %1934 = vdwg.mxu0
        %1935 = vmatpush.bf16.msra.mxu0 %v1546
        %1936 = vmatpush.bf16.msra.mxu0 %v1542
        %1937 = vmatpush.bf16.msra.mxu0 %v1538
        %1938 = vmatpush.bf16.msra.mxu0 %v1534
        %1939 = vmatpush.bf16.msra.mxu0 %v1530
        %1940 = vmatpush.bf16.msra.mxu0 %v1526
        %1941 = vmatpush.bf16.msra.mxu0 %v1522
        %1942 = vmatpush.bf16.msra.mxu0 %v1518
        %1943 = vmatmul.bf16.gmra.mxu0 %v331
        %v1944 = vpop.f32.mrf.mxu0
        %v1945 = vadd.f32 %v1932, %v1944
        %v1946 = vpop.f32.mrf.mxu0
        %1947 = vdwg.mxu0
        %1948 = vmatpush.bf16.msra.mxu0 %v1578
        %1949 = vmatpush.bf16.msra.mxu0 %v1574
        %1950 = vmatpush.bf16.msra.mxu0 %v1570
        %1951 = vmatpush.bf16.msra.mxu0 %v1566
        %1952 = vmatpush.bf16.msra.mxu0 %v1562
        %1953 = vmatpush.bf16.msra.mxu0 %v1558
        %1954 = vmatpush.bf16.msra.mxu0 %v1554
        %1955 = vmatpush.bf16.msra.mxu0 %v1550
        %1956 = vmatmul.bf16.gmra.mxu0 %v332
        %v1957 = vpop.f32.mrf.mxu0
        %v1958 = vadd.f32 %v1945, %v1957
        %v1959 = vpop.f32.mrf.mxu0
        %1960 = vdwg.mxu0
        %1961 = vmatpush.bf16.msra.mxu0 %v1610
        %1962 = vmatpush.bf16.msra.mxu0 %v1606
        %1963 = vmatpush.bf16.msra.mxu0 %v1602
        %1964 = vmatpush.bf16.msra.mxu0 %v1598
        %1965 = vmatpush.bf16.msra.mxu0 %v1594
        %1966 = vmatpush.bf16.msra.mxu0 %v1590
        %1967 = vmatpush.bf16.msra.mxu0 %v1586
        %1968 = vmatpush.bf16.msra.mxu0 %v1582
        %1969 = vmatmul.bf16.gmra.mxu0 %v333
        %v1970 = vpop.f32.mrf.mxu0
        %v1971 = vadd.f32 %v1958, %v1970
        %v1972 = vpop.f32.mrf.mxu0
        %1973 = vdwg.mxu0
        %1974 = vmatpush.bf16.msra.mxu0 %v1387
        %1975 = vmatpush.bf16.msra.mxu0 %v1383
        %1976 = vmatpush.bf16.msra.mxu0 %v1379
        %1977 = vmatpush.bf16.msra.mxu0 %v1375
        %1978 = vmatpush.bf16.msra.mxu0 %v1371
        %1979 = vmatpush.bf16.msra.mxu0 %v1367
        %1980 = vmatpush.bf16.msra.mxu0 %v1363
        %1981 = vmatpush.bf16.msra.mxu0 %v1359
        %1982 = vmatmul.bf16.gmra.mxu0 %v326
        %v1983 = vpop.f32.mrf.mxu0
        %v1984 = vadd.f32 0.0, %v1983
        %v1985 = vpop.f32.mrf.mxu0
        %1986 = vdwg.mxu0
        %1987 = vmatpush.bf16.msra.mxu0 %v1419
        %1988 = vmatpush.bf16.msra.mxu0 %v1415
        %1989 = vmatpush.bf16.msra.mxu0 %v1411
        %1990 = vmatpush.bf16.msra.mxu0 %v1407
        %1991 = vmatpush.bf16.msra.mxu0 %v1403
        %1992 = vmatpush.bf16.msra.mxu0 %v1399
        %1993 = vmatpush.bf16.msra.mxu0 %v1395
        %1994 = vmatpush.bf16.msra.mxu0 %v1391
        %1995 = vmatmul.bf16.gmra.mxu0 %v327
        %v1996 = vpop.f32.mrf.mxu0
        %v1997 = vadd.f32 %v1984, %v1996
        %v1998 = vpop.f32.mrf.mxu0
        %1999 = vdwg.mxu0
        %2000 = vmatpush.bf16.msra.mxu0 %v1451
        %2001 = vmatpush.bf16.msra.mxu0 %v1447
        %2002 = vmatpush.bf16.msra.mxu0 %v1443
        %2003 = vmatpush.bf16.msra.mxu0 %v1439
        %2004 = vmatpush.bf16.msra.mxu0 %v1435
        %2005 = vmatpush.bf16.msra.mxu0 %v1431
        %2006 = vmatpush.bf16.msra.mxu0 %v1427
        %2007 = vmatpush.bf16.msra.mxu0 %v1423
        %2008 = vmatmul.bf16.gmra.mxu0 %v328
        %v2009 = vpop.f32.mrf.mxu0
        %v2010 = vadd.f32 %v1997, %v2009
        %v2011 = vpop.f32.mrf.mxu0
        %2012 = vdwg.mxu0
        %2013 = vmatpush.bf16.msra.mxu0 %v1483
        %2014 = vmatpush.bf16.msra.mxu0 %v1479
        %2015 = vmatpush.bf16.msra.mxu0 %v1475
        %2016 = vmatpush.bf16.msra.mxu0 %v1471
        %2017 = vmatpush.bf16.msra.mxu0 %v1467
        %2018 = vmatpush.bf16.msra.mxu0 %v1463
        %2019 = vmatpush.bf16.msra.mxu0 %v1459
        %2020 = vmatpush.bf16.msra.mxu0 %v1455
        %2021 = vmatmul.bf16.gmra.mxu0 %v329
        %v2022 = vpop.f32.mrf.mxu0
        %v2023 = vadd.f32 %v2010, %v2022
        %v2024 = vpop.f32.mrf.mxu0
        %2025 = vdwg.mxu0
        %2026 = vmatpush.bf16.msra.mxu0 %v1515
        %2027 = vmatpush.bf16.msra.mxu0 %v1511
        %2028 = vmatpush.bf16.msra.mxu0 %v1507
        %2029 = vmatpush.bf16.msra.mxu0 %v1503
        %2030 = vmatpush.bf16.msra.mxu0 %v1499
        %2031 = vmatpush.bf16.msra.mxu0 %v1495
        %2032 = vmatpush.bf16.msra.mxu0 %v1491
        %2033 = vmatpush.bf16.msra.mxu0 %v1487
        %2034 = vmatmul.bf16.gmra.mxu0 %v330
        %v2035 = vpop.f32.mrf.mxu0
        %v2036 = vadd.f32 %v2023, %v2035
        %v2037 = vpop.f32.mrf.mxu0
        %2038 = vdwg.mxu0
        %2039 = vmatpush.bf16.msra.mxu0 %v1547
        %2040 = vmatpush.bf16.msra.mxu0 %v1543
        %2041 = vmatpush.bf16.msra.mxu0 %v1539
        %2042 = vmatpush.bf16.msra.mxu0 %v1535
        %2043 = vmatpush.bf16.msra.mxu0 %v1531
        %2044 = vmatpush.bf16.msra.mxu0 %v1527
        %2045 = vmatpush.bf16.msra.mxu0 %v1523
        %2046 = vmatpush.bf16.msra.mxu0 %v1519
        %2047 = vmatmul.bf16.gmra.mxu0 %v331
        %v2048 = vpop.f32.mrf.mxu0
        %v2049 = vadd.f32 %v2036, %v2048
        %v2050 = vpop.f32.mrf.mxu0
        %2051 = vdwg.mxu0
        %2052 = vmatpush.bf16.msra.mxu0 %v1579
        %2053 = vmatpush.bf16.msra.mxu0 %v1575
        %2054 = vmatpush.bf16.msra.mxu0 %v1571
        %2055 = vmatpush.bf16.msra.mxu0 %v1567
        %2056 = vmatpush.bf16.msra.mxu0 %v1563
        %2057 = vmatpush.bf16.msra.mxu0 %v1559
        %2058 = vmatpush.bf16.msra.mxu0 %v1555
        %2059 = vmatpush.bf16.msra.mxu0 %v1551
        %2060 = vmatmul.bf16.gmra.mxu0 %v332
        %v2061 = vpop.f32.mrf.mxu0
        %v2062 = vadd.f32 %v2049, %v2061
        %v2063 = vpop.f32.mrf.mxu0
        %2064 = vdwg.mxu0
        %2065 = vmatpush.bf16.msra.mxu0 %v1611
        %2066 = vmatpush.bf16.msra.mxu0 %v1607
        %2067 = vmatpush.bf16.msra.mxu0 %v1603
        %2068 = vmatpush.bf16.msra.mxu0 %v1599
        %2069 = vmatpush.bf16.msra.mxu0 %v1595
        %2070 = vmatpush.bf16.msra.mxu0 %v1591
        %2071 = vmatpush.bf16.msra.mxu0 %v1587
        %2072 = vmatpush.bf16.msra.mxu0 %v1583
        %2073 = vmatmul.bf16.gmra.mxu0 %v333
        %v2074 = vpop.f32.mrf.mxu0
        %v2075 = vadd.f32 %v2062, %v2074
        %v2076 = vpop.f32.mrf.mxu0
        %2077 = vdwg.mxu0
        %2078 = vmatpush.bf16.msra.mxu0 %v1388
        %2079 = vmatpush.bf16.msra.mxu0 %v1384
        %2080 = vmatpush.bf16.msra.mxu0 %v1380
        %2081 = vmatpush.bf16.msra.mxu0 %v1376
        %2082 = vmatpush.bf16.msra.mxu0 %v1372
        %2083 = vmatpush.bf16.msra.mxu0 %v1368
        %2084 = vmatpush.bf16.msra.mxu0 %v1364
        %2085 = vmatpush.bf16.msra.mxu0 %v1360
        %2086 = vmatmul.bf16.gmra.mxu0 %v326
        %v2087 = vpop.f32.mrf.mxu0
        %v2088 = vadd.f32 0.0, %v2087
        %v2089 = vpop.f32.mrf.mxu0
        %2090 = vdwg.mxu0
        %2091 = vmatpush.bf16.msra.mxu0 %v1420
        %2092 = vmatpush.bf16.msra.mxu0 %v1416
        %2093 = vmatpush.bf16.msra.mxu0 %v1412
        %2094 = vmatpush.bf16.msra.mxu0 %v1408
        %2095 = vmatpush.bf16.msra.mxu0 %v1404
        %2096 = vmatpush.bf16.msra.mxu0 %v1400
        %2097 = vmatpush.bf16.msra.mxu0 %v1396
        %2098 = vmatpush.bf16.msra.mxu0 %v1392
        %2099 = vmatmul.bf16.gmra.mxu0 %v327
        %v2100 = vpop.f32.mrf.mxu0
        %v2101 = vadd.f32 %v2088, %v2100
        %v2102 = vpop.f32.mrf.mxu0
        %2103 = vdwg.mxu0
        %2104 = vmatpush.bf16.msra.mxu0 %v1452
        %2105 = vmatpush.bf16.msra.mxu0 %v1448
        %2106 = vmatpush.bf16.msra.mxu0 %v1444
        %2107 = vmatpush.bf16.msra.mxu0 %v1440
        %2108 = vmatpush.bf16.msra.mxu0 %v1436
        %2109 = vmatpush.bf16.msra.mxu0 %v1432
        %2110 = vmatpush.bf16.msra.mxu0 %v1428
        %2111 = vmatpush.bf16.msra.mxu0 %v1424
        %2112 = vmatmul.bf16.gmra.mxu0 %v328
        %v2113 = vpop.f32.mrf.mxu0
        %v2114 = vadd.f32 %v2101, %v2113
        %v2115 = vpop.f32.mrf.mxu0
        %2116 = vdwg.mxu0
        %2117 = vmatpush.bf16.msra.mxu0 %v1484
        %2118 = vmatpush.bf16.msra.mxu0 %v1480
        %2119 = vmatpush.bf16.msra.mxu0 %v1476
        %2120 = vmatpush.bf16.msra.mxu0 %v1472
        %2121 = vmatpush.bf16.msra.mxu0 %v1468
        %2122 = vmatpush.bf16.msra.mxu0 %v1464
        %2123 = vmatpush.bf16.msra.mxu0 %v1460
        %2124 = vmatpush.bf16.msra.mxu0 %v1456
        %2125 = vmatmul.bf16.gmra.mxu0 %v329
        %v2126 = vpop.f32.mrf.mxu0
        %v2127 = vadd.f32 %v2114, %v2126
        %v2128 = vpop.f32.mrf.mxu0
        %2129 = vdwg.mxu0
        %2130 = vmatpush.bf16.msra.mxu0 %v1516
        %2131 = vmatpush.bf16.msra.mxu0 %v1512
        %2132 = vmatpush.bf16.msra.mxu0 %v1508
        %2133 = vmatpush.bf16.msra.mxu0 %v1504
        %2134 = vmatpush.bf16.msra.mxu0 %v1500
        %2135 = vmatpush.bf16.msra.mxu0 %v1496
        %2136 = vmatpush.bf16.msra.mxu0 %v1492
        %2137 = vmatpush.bf16.msra.mxu0 %v1488
        %2138 = vmatmul.bf16.gmra.mxu0 %v330
        %v2139 = vpop.f32.mrf.mxu0
        %v2140 = vadd.f32 %v2127, %v2139
        %v2141 = vpop.f32.mrf.mxu0
        %2142 = vdwg.mxu0
        %2143 = vmatpush.bf16.msra.mxu0 %v1548
        %2144 = vmatpush.bf16.msra.mxu0 %v1544
        %2145 = vmatpush.bf16.msra.mxu0 %v1540
        %2146 = vmatpush.bf16.msra.mxu0 %v1536
        %2147 = vmatpush.bf16.msra.mxu0 %v1532
        %2148 = vmatpush.bf16.msra.mxu0 %v1528
        %2149 = vmatpush.bf16.msra.mxu0 %v1524
        %2150 = vmatpush.bf16.msra.mxu0 %v1520
        %2151 = vmatmul.bf16.gmra.mxu0 %v331
        %v2152 = vpop.f32.mrf.mxu0
        %v2153 = vadd.f32 %v2140, %v2152
        %v2154 = vpop.f32.mrf.mxu0
        %2155 = vdwg.mxu0
        %2156 = vmatpush.bf16.msra.mxu0 %v1580
        %2157 = vmatpush.bf16.msra.mxu0 %v1576
        %2158 = vmatpush.bf16.msra.mxu0 %v1572
        %2159 = vmatpush.bf16.msra.mxu0 %v1568
        %2160 = vmatpush.bf16.msra.mxu0 %v1564
        %2161 = vmatpush.bf16.msra.mxu0 %v1560
        %2162 = vmatpush.bf16.msra.mxu0 %v1556
        %2163 = vmatpush.bf16.msra.mxu0 %v1552
        %2164 = vmatmul.bf16.gmra.mxu0 %v332
        %v2165 = vpop.f32.mrf.mxu0
        %v2166 = vadd.f32 %v2153, %v2165
        %v2167 = vpop.f32.mrf.mxu0
        %2168 = vdwg.mxu0
        %2169 = vmatpush.bf16.msra.mxu0 %v1612
        %2170 = vmatpush.bf16.msra.mxu0 %v1608
        %2171 = vmatpush.bf16.msra.mxu0 %v1604
        %2172 = vmatpush.bf16.msra.mxu0 %v1600
        %2173 = vmatpush.bf16.msra.mxu0 %v1596
        %2174 = vmatpush.bf16.msra.mxu0 %v1592
        %2175 = vmatpush.bf16.msra.mxu0 %v1588
        %2176 = vmatpush.bf16.msra.mxu0 %v1584
        %2177 = vmatmul.bf16.gmra.mxu0 %v333
        %v2178 = vpop.f32.mrf.mxu0
        %v2179 = vadd.f32 %v2166, %v2178
        %v2180 = vpop.f32.mrf.mxu0
        %2181 = vdwg.mxu0
        %2182 = vmatpush.bf16.msra.mxu0 %v1389
        %2183 = vmatpush.bf16.msra.mxu0 %v1385
        %2184 = vmatpush.bf16.msra.mxu0 %v1381
        %2185 = vmatpush.bf16.msra.mxu0 %v1377
        %2186 = vmatpush.bf16.msra.mxu0 %v1373
        %2187 = vmatpush.bf16.msra.mxu0 %v1369
        %2188 = vmatpush.bf16.msra.mxu0 %v1365
        %2189 = vmatpush.bf16.msra.mxu0 %v1361
        %2190 = vmatmul.bf16.gmra.mxu0 %v326
        %v2191 = vpop.f32.mrf.mxu0
        %v2192 = vadd.f32 0.0, %v2191
        %v2193 = vpop.f32.mrf.mxu0
        %2194 = vdwg.mxu0
        %2195 = vmatpush.bf16.msra.mxu0 %v1421
        %2196 = vmatpush.bf16.msra.mxu0 %v1417
        %2197 = vmatpush.bf16.msra.mxu0 %v1413
        %2198 = vmatpush.bf16.msra.mxu0 %v1409
        %2199 = vmatpush.bf16.msra.mxu0 %v1405
        %2200 = vmatpush.bf16.msra.mxu0 %v1401
        %2201 = vmatpush.bf16.msra.mxu0 %v1397
        %2202 = vmatpush.bf16.msra.mxu0 %v1393
        %2203 = vmatmul.bf16.gmra.mxu0 %v327
        %v2204 = vpop.f32.mrf.mxu0
        %v2205 = vadd.f32 %v2192, %v2204
        %v2206 = vpop.f32.mrf.mxu0
        %2207 = vdwg.mxu0
        %2208 = vmatpush.bf16.msra.mxu0 %v1453
        %2209 = vmatpush.bf16.msra.mxu0 %v1449
        %2210 = vmatpush.bf16.msra.mxu0 %v1445
        %2211 = vmatpush.bf16.msra.mxu0 %v1441
        %2212 = vmatpush.bf16.msra.mxu0 %v1437
        %2213 = vmatpush.bf16.msra.mxu0 %v1433
        %2214 = vmatpush.bf16.msra.mxu0 %v1429
        %2215 = vmatpush.bf16.msra.mxu0 %v1425
        %2216 = vmatmul.bf16.gmra.mxu0 %v328
        %v2217 = vpop.f32.mrf.mxu0
        %v2218 = vadd.f32 %v2205, %v2217
        %v2219 = vpop.f32.mrf.mxu0
        %2220 = vdwg.mxu0
        %2221 = vmatpush.bf16.msra.mxu0 %v1485
        %2222 = vmatpush.bf16.msra.mxu0 %v1481
        %2223 = vmatpush.bf16.msra.mxu0 %v1477
        %2224 = vmatpush.bf16.msra.mxu0 %v1473
        %2225 = vmatpush.bf16.msra.mxu0 %v1469
        %2226 = vmatpush.bf16.msra.mxu0 %v1465
        %2227 = vmatpush.bf16.msra.mxu0 %v1461
        %2228 = vmatpush.bf16.msra.mxu0 %v1457
        %2229 = vmatmul.bf16.gmra.mxu0 %v329
        %v2230 = vpop.f32.mrf.mxu0
        %v2231 = vadd.f32 %v2218, %v2230
        %v2232 = vpop.f32.mrf.mxu0
        %2233 = vdwg.mxu0
        %2234 = vmatpush.bf16.msra.mxu0 %v1517
        %2235 = vmatpush.bf16.msra.mxu0 %v1513
        %2236 = vmatpush.bf16.msra.mxu0 %v1509
        %2237 = vmatpush.bf16.msra.mxu0 %v1505
        %2238 = vmatpush.bf16.msra.mxu0 %v1501
        %2239 = vmatpush.bf16.msra.mxu0 %v1497
        %2240 = vmatpush.bf16.msra.mxu0 %v1493
        %2241 = vmatpush.bf16.msra.mxu0 %v1489
        %2242 = vmatmul.bf16.gmra.mxu0 %v330
        %v2243 = vpop.f32.mrf.mxu0
        %v2244 = vadd.f32 %v2231, %v2243
        %v2245 = vpop.f32.mrf.mxu0
        %2246 = vdwg.mxu0
        %2247 = vmatpush.bf16.msra.mxu0 %v1549
        %2248 = vmatpush.bf16.msra.mxu0 %v1545
        %2249 = vmatpush.bf16.msra.mxu0 %v1541
        %2250 = vmatpush.bf16.msra.mxu0 %v1537
        %2251 = vmatpush.bf16.msra.mxu0 %v1533
        %2252 = vmatpush.bf16.msra.mxu0 %v1529
        %2253 = vmatpush.bf16.msra.mxu0 %v1525
        %2254 = vmatpush.bf16.msra.mxu0 %v1521
        %2255 = vmatmul.bf16.gmra.mxu0 %v331
        %v2256 = vpop.f32.mrf.mxu0
        %v2257 = vadd.f32 %v2244, %v2256
        %v2258 = vpop.f32.mrf.mxu0
        %2259 = vdwg.mxu0
        %2260 = vmatpush.bf16.msra.mxu0 %v1581
        %2261 = vmatpush.bf16.msra.mxu0 %v1577
        %2262 = vmatpush.bf16.msra.mxu0 %v1573
        %2263 = vmatpush.bf16.msra.mxu0 %v1569
        %2264 = vmatpush.bf16.msra.mxu0 %v1565
        %2265 = vmatpush.bf16.msra.mxu0 %v1561
        %2266 = vmatpush.bf16.msra.mxu0 %v1557
        %2267 = vmatpush.bf16.msra.mxu0 %v1553
        %2268 = vmatmul.bf16.gmra.mxu0 %v332
        %v2269 = vpop.f32.mrf.mxu0
        %v2270 = vadd.f32 %v2257, %v2269
        %v2271 = vpop.f32.mrf.mxu0
        %2272 = vdwg.mxu0
        %2273 = vmatpush.bf16.msra.mxu0 %v1613
        %2274 = vmatpush.bf16.msra.mxu0 %v1609
        %2275 = vmatpush.bf16.msra.mxu0 %v1605
        %2276 = vmatpush.bf16.msra.mxu0 %v1601
        %2277 = vmatpush.bf16.msra.mxu0 %v1597
        %2278 = vmatpush.bf16.msra.mxu0 %v1593
        %2279 = vmatpush.bf16.msra.mxu0 %v1589
        %2280 = vmatpush.bf16.msra.mxu0 %v1585
        %2281 = vmatmul.bf16.gmra.mxu0 %v333
        %v2282 = vpop.f32.mrf.mxu0
        %v2283 = vadd.f32 %v2270, %v2282
        %v2284 = vpop.f32.mrf.mxu0
        %2285 = vdwg.mxu0
        %v2286 = vadd.f32 %v314, %v1971
        %v2287 = vadd.f32 %v315, %v2075
        %v2288 = vadd.f32 %v316, %v2179
        %v2289 = vadd.f32 %v317, %v2283
        %2290 = vst [vmem:[#allocation2] sm:$0xff] %v2286
        %2291 = vst [vmem:[#allocation2 + $0x8] sm:$0xff] %v2287
        %2292 = vst [vmem:[#allocation2 + $0x10] sm:$0xff] %v2288
        %2293 = vst [vmem:[#allocation2 + $0x18] sm:$0xff] %v2289
        %p2294 = scmp.eq.s32.totalorder %s27, 8
        // Predicated region
        $region45: #{camera_param_regressor_forward.4} parent=31 // pred_check
          %p2295 = pneg %p2294
        $region46: #{camera_param_regressor_forward.4} parent=31 // pred_check_branch
          %2297 = sbr.rel (%p2295) target = $region48
        $region47: #{camera_param_regressor_forward.4} parent=31 // pred_region
          %v2298 = vld [vmem:[#allocation2] sm:$0xff]
          %v2299 = vld [vmem:[#allocation2 + $0x8] sm:$0xff]
          %v2300 = vld [vmem:[#allocation2 + $0x10] sm:$0xff]
          %v2301 = vld [vmem:[#allocation2 + $0x18] sm:$0xff]
          %v2302 = vld [vmem:[%s241] sm:$0xf]
          %v2304 = vperm.slane %v2302, 0
          %v2305 = vperm.slane %v2302, 1
          %v2306 = vperm.slane %v2302, 2
          %v2307 = vperm.slane %v2302, 3
          %v2312 = vadd.f32 %v2298, %v2304
          %v2313 = vadd.f32 %v2299, %v2305
          %v2314 = vadd.f32 %v2300, %v2306
          %v2315 = vadd.f32 %v2301, %v2307
          %v2316 = vmax.f32 %v2312, 0.0
          %v2317 = vmax.f32 %v2313, 0.0
          %v2318 = vmax.f32 %v2314, 0.0
          %v2319 = vmax.f32 %v2315, 0.0
          %2320 = vst [vmem:[%s304] sm:$0xff] %v2316
          %2321 = vst [vmem:[%s304 + $0x8] sm:$0xff] %v2317
          %2322 = vst [vmem:[%s304 + $0x10] sm:$0xff] %v2318
          %2323 = vst [vmem:[%s304 + $0x18] sm:$0xff] %v2319
        $region48: #{camera_param_regressor_forward.4} parent=31 // pred_fallthru
          _
        %s2324 = smul.u32 4, %s26
        %p2325 = scmp.lt.s32.totalorder %s25, 0
        %s2326 = scalar_select %p2325, %s25, 0
        %p2327 = scmp.lt.s32.totalorder %s2324, 31
        %s2328 = scalar_select %p2327, %s2324, 31
        %s2329 = smul.addr %s2326, 32
        %s2330 = sadd.s32 %s2328, %s2329
        %s2331 = smul.addr %s2330, 8
        %s2332 = scalar_lea.vmem %s3, %s2331
        // Predicated region
        $region49: #{camera_param_regressor_forward.4} parent=31 // pred_check
          %p2333 = pneg %p141
        $region50: #{camera_param_regressor_forward.4} parent=31 // pred_check_branch
          %2335 = sbr.rel (%p2333) target = $region52
        $region51: #{camera_param_regressor_forward.4} parent=31 // pred_region
          %s2336 = smul.u32 4, %s26
        $region52: #{camera_param_regressor_forward.4} parent=31 // pred_fallthru
          _
      $region32: #{camera_param_regressor_forward.4} parent=5 // pred_fallthru
        _
      %p2337 = scmp.le.s32.totalorder 2, %s15
      // Predicated region
      $region53: #{camera_param_regressor_forward.4} parent=5 // pred_check
        %p2338 = pneg %p2337
      $region54: #{camera_param_regressor_forward.4} parent=5 // pred_check_branch
        %2340 = sbr.rel (%p2338) target = $region56
      $region55: #{camera_param_regressor_forward.4} parent=5 // pred_region
        %s2341 = ssub.s32 %s15, 2
        // Predicated region
        $region57: #{camera_param_regressor_forward.4} parent=55 // pred_check
          %p2342 = pneg %p147
        $region58: #{camera_param_regressor_forward.4} parent=55 // pred_check_branch
          %2344 = sbr.rel (%p2342) target = $region60
        $region59: #{camera_param_regressor_forward.4} parent=55 // pred_region
          %s2345 = smul.u32 4, %s29
          %p2346 = scmp.lt.s32.totalorder %s28, 0
          %s2347 = scalar_select %p2346, %s28, 0
          %p2348 = scmp.lt.s32.totalorder %s2345, 31
          %s2349 = scalar_select %p2348, %s2345, 31
          %s2350 = smul.addr %s2347, 32
          %s2351 = sadd.s32 %s2349, %s2350
          %s2352 = smul.addr %s2351, 8
          %s2353 = scalar_lea.vmem %s3, %s2352
        $region60: #{camera_param_regressor_forward.4} parent=55 // pred_fallthru
          _
      $region56: #{camera_param_regressor_forward.4} parent=5 // pred_fallthru
        _
    $region6: #{camera_param_regressor_forward.4} parent=1 // loop_footer
      %s19 = sadd.s32 1, %s15
    $region7: #{camera_param_regressor_forward.4} parent=1 // loop_footer_branch
      %14 = sbr.rel target = $region3
    $region8: #{camera_param_regressor_forward.4} parent=1 // loop_exit
      _
    %2354 = vsyncpa [#allocation4], 1
    %s2355 = scalar_lea.sflag [#allocation4], 1
    %2356 = vsyncpa %s2355, 1
    %2357 = vsyncpa [#allocation6], 1
    %s2358 = scalar_lea.sflag [#allocation6], 1
    %2359 = vsyncpa %s2358, 1

// kernel: camera_param_regressor_forward.5
$region0: #{camera_param_regressor_forward.5}
  #allocation0 [shape = 'u32[]', space=smem, size = 0x4, offset = 0x4, fixed_abs, tag = 'smem constant byte address 0x4 - core index']
  #allocation1 [shape = 'u32[72,128]{1,0:T(1,128)}', space=vmem, size = 0x9000, scoped, tag = 'internal scratch']
  #allocation2 [shape = 'f32[8,512]{1,0:T(8,128)}', space=vmem, size = 0x4000, scoped, tag = 'scratch operand']
  %s0 = inlined_call_operand.vmem [shape: f32[8,4096], index: 0, kind: input, shape index: {}]
  %s1 = inlined_call_operand.hbm [shape: bf16[4096,1024], index: 1, kind: input, shape index: {}]
  %s2 = inlined_call_operand.hbm [shape: f32[1,1024], index: 2, kind: input, shape index: {}]
  %s3 = inlined_call_operand.vmem [shape: f32[8,1024], index: 3, kind: output, shape index: {}]
  %s4 = sld [smem:[#allocation0]]
  $region61: #{camera_param_regressor_forward.5} parent=0
    _
  %s6 = ssub.s32 1, %s4
  %s7 = scalar_select 0, %s6, %s4
  $region1: #{camera_param_regressor_forward.5} parent=0
    #allocation3 [shape = 'u8[2097152]{0}', space=vmem, size = 0x200000, scoped, tag = 'input window, operand 1']
    #allocation4 [shape = 's32[2]{0}', space=sflag, size = 0x8, scoped, tag = 'scoped memory for camera_param_regressor_forward.5']
    #allocation5 [shape = 'u8[4096]{0}', space=vmem, size = 0x1000, scoped, tag = 'input window, operand 2']
    #allocation6 [shape = 's32[2]{0}', space=sflag, size = 0x8, scoped, tag = 'scoped memory for camera_param_regressor_forward.5']
    %8 = vsyncpa [#allocation4], 0
    %s9 = scalar_lea.sflag [#allocation4], 1
    %10 = vsyncpa %s9, 0
    %11 = vsyncpa [#allocation6], 0
    %s12 = scalar_lea.sflag [#allocation6], 1
    %13 = vsyncpa %s12, 0
    loop: start=0, step=1, limit=10
    $region2: #{camera_param_regressor_forward.5} parent=1 // loop_pre_header
      _
    $region3: #{camera_param_regressor_forward.5} parent=1 // loop_header
      %s15 = sphi 0, %s19
      %p16 = scmp.ge.s32.totalorder %s15, 10
      %s22 = sphi 0, %s41
      %s23 = sphi 0, %s37
      %s24 = sphi 0, %s33
      %s25 = sphi 0, %s22
      %s26 = sphi 0, %s23
      %s27 = sphi 0, %s24
      %s28 = sphi 0, %s25
      %s29 = sphi 0, %s26
      %s30 = sphi 0, %s27
      %s46 = sphi 0, %s48
      %s49 = sphi 0, %s46
      %s50 = sphi 0, %s49
      %s66 = sphi 0, %s50
      %s74 = sphi 0, %s76
      %s77 = sphi 0, %s74
      %s78 = sphi 0, %s77
      %s94 = sphi 0, %s78
      %s100 = sphi 0, %s102
      %s103 = sphi 0, %s100
      %s104 = sphi 0, %s103
      %s120 = sphi 0, %s104
      %s128 = sphi 0, %s130
      %s131 = sphi 0, %s128
      %s132 = sphi 0, %s131
      %s148 = sphi 0, %s132
    $region4: #{camera_param_regressor_forward.5} parent=1 // loop_header_branch
      %18 = sbr.rel (%p16) target = $region8
    $region5: #{camera_param_regressor_forward.5} parent=1 // loop_body
      %s20 = ssub.s32 %s15, 1
      %s21 = ssub.s32 %s15, 2
      %s31 = sadd.s32 1, %s24
      %p32 = scmp.ge.s32.totalorder %s31, 4
      %s33 = scalar_select %p32, 0, %s31
      %s34 = sadd.s32 1, %s23
      %s35 = scalar_select %p32, %s34, %s23
      %p36 = scmp.ge.s32.totalorder %s35, 2
      %s37 = scalar_select %p36, 0, %s35
      %s38 = sadd.s32 1, %s22
      %s39 = scalar_select %p36, %s38, %s22
      %p40 = scmp.ge.s32.totalorder %s39, 1
      %s41 = scalar_select %p40, 0, %s39
      %s42 = ssub.s32 %s22, %s41
      %s43 = ssub.s32 %s24, %s33
      %s44 = sor.u32 %s42, %s43
      %p45 = scmp.eq.s32.totalorder %s44, 0
      %s47 = sadd.s32 %s46, 1
      %s48 = scalar_select %p45, %s46, %s47
      %p51 = pneg %p45
      %p52 = scmp.eq.s32.totalorder %s15, 7
      %p53 = por %p51, %p52
      %p54 = scmp.ne.s32.totalorder %s46, %s49
      %p55 = scmp.eq.s32.totalorder %s15, 0
      %p56 = por %p54, %p55
      %p57 = scmp.ne.s32.totalorder %s46, %s49
      %p58 = scmp.eq.s32.totalorder %s20, 7
      %p59 = por %p57, %p58
      %p60 = scmp.ne.s32.totalorder %s49, %s50
      %p61 = scmp.eq.s32.totalorder %s20, 0
      %p62 = por %p60, %p61
      %p63 = scmp.ne.s32.totalorder %s49, %s50
      %p64 = scmp.eq.s32.totalorder %s21, 7
      %p65 = por %p63, %p64
      %p67 = scmp.ne.s32.totalorder %s50, %s66
      %p68 = scmp.eq.s32.totalorder %s21, 0
      %p69 = por %p67, %p68
      %s70 = ssub.s32 %s24, %s33
      %s71 = ssub.s32 %s23, %s37
      %s72 = sor.u32 %s70, %s71
      %p73 = scmp.eq.s32.totalorder %s72, 0
      %s75 = sadd.s32 %s74, 1
      %s76 = scalar_select %p73, %s74, %s75
      %p79 = pneg %p73
      %p80 = scmp.eq.s32.totalorder %s15, 7
      %p81 = por %p79, %p80
      %p82 = scmp.ne.s32.totalorder %s74, %s77
      %p83 = scmp.eq.s32.totalorder %s15, 0
      %p84 = por %p82, %p83
      %p85 = scmp.ne.s32.totalorder %s74, %s77
      %p86 = scmp.eq.s32.totalorder %s20, 7
      %p87 = por %p85, %p86
      %p88 = scmp.ne.s32.totalorder %s77, %s78
      %p89 = scmp.eq.s32.totalorder %s20, 0
      %p90 = por %p88, %p89
      %p91 = scmp.ne.s32.totalorder %s77, %s78
      %p92 = scmp.eq.s32.totalorder %s21, 7
      %p93 = por %p91, %p92
      %p95 = scmp.ne.s32.totalorder %s78, %s94
      %p96 = scmp.eq.s32.totalorder %s21, 0
      %p97 = por %p95, %p96
      %s98 = ssub.s32 %s23, %s37
      %p99 = scmp.eq.s32.totalorder %s98, 0
      %s101 = sadd.s32 %s100, 1
      %s102 = scalar_select %p99, %s100, %s101
      %p105 = pneg %p99
      %p106 = scmp.eq.s32.totalorder %s15, 7
      %p107 = por %p105, %p106
      %p108 = scmp.ne.s32.totalorder %s100, %s103
      %p109 = scmp.eq.s32.totalorder %s15, 0
      %p110 = por %p108, %p109
      %p111 = scmp.ne.s32.totalorder %s100, %s103
      %p112 = scmp.eq.s32.totalorder %s20, 7
      %p113 = por %p111, %p112
      %p114 = scmp.ne.s32.totalorder %s103, %s104
      %p115 = scmp.eq.s32.totalorder %s20, 0
      %p116 = por %p114, %p115
      %p117 = scmp.ne.s32.totalorder %s103, %s104
      %p118 = scmp.eq.s32.totalorder %s21, 7
      %p119 = por %p117, %p118
      %p121 = scmp.ne.s32.totalorder %s104, %s120
      %p122 = scmp.eq.s32.totalorder %s21, 0
      %p123 = por %p121, %p122
      %s124 = ssub.s32 %s22, %s41
      %s125 = ssub.s32 %s23, %s37
      %s126 = sor.u32 %s124, %s125
      %p127 = scmp.eq.s32.totalorder %s126, 0
      %s129 = sadd.s32 %s128, 1
      %s130 = scalar_select %p127, %s128, %s129
      %p133 = pneg %p127
      %p134 = scmp.eq.s32.totalorder %s15, 7
      %p135 = por %p133, %p134
      %p136 = scmp.ne.s32.totalorder %s128, %s131
      %p137 = scmp.eq.s32.totalorder %s15, 0
      %p138 = por %p136, %p137
      %p139 = scmp.ne.s32.totalorder %s128, %s131
      %p140 = scmp.eq.s32.totalorder %s20, 7
      %p141 = por %p139, %p140
      %p142 = scmp.ne.s32.totalorder %s131, %s132
      %p143 = scmp.eq.s32.totalorder %s20, 0
      %p144 = por %p142, %p143
      %p145 = scmp.ne.s32.totalorder %s131, %s132
      %p146 = scmp.eq.s32.totalorder %s21, 7
      %p147 = por %p145, %p146
      %p149 = scmp.ne.s32.totalorder %s132, %s148
      %p150 = scmp.eq.s32.totalorder %s21, 0
      %p151 = por %p149, %p150
      %p152 = scmp.le.s32.totalorder 1, %s15
      %p153 = scmp.lt.s32.totalorder %s15, 9
      %p154 = pnand %p152, %p153
      %p155 = pneg %p154
      // Predicated region
      $region9: #{camera_param_regressor_forward.5} parent=5 // pred_check
        _
      $region10: #{camera_param_regressor_forward.5} parent=5 // pred_check_branch
        %157 = sbr.rel (%p154) target = $region12
      $region11: #{camera_param_regressor_forward.5} parent=5 // pred_region
        %s158 = ssub.s32 %s15, 1
      $region12: #{camera_param_regressor_forward.5} parent=5 // pred_fallthru
        _
      %p159 = scmp.lt.s32.totalorder %s15, 8
      // Predicated region
      $region13: #{camera_param_regressor_forward.5} parent=5 // pred_check
        %p160 = pneg %p159
      $region14: #{camera_param_regressor_forward.5} parent=5 // pred_check_branch
        %162 = sbr.rel (%p160) target = $region16
      $region15: #{camera_param_regressor_forward.5} parent=5 // pred_region
        // Predicated region
        $region17: #{camera_param_regressor_forward.5} parent=15 // pred_check
          %p163 = pneg %p56
        $region18: #{camera_param_regressor_forward.5} parent=15 // pred_check_branch
          %165 = sbr.rel (%p163) target = $region20
        $region19: #{camera_param_regressor_forward.5} parent=15 // pred_region
          %s166 = smul.u32 8, %s24
          %p167 = scmp.lt.s32.totalorder %s22, 0
          %s168 = scalar_select %p167, %s22, 0
          %p169 = scmp.lt.s32.totalorder %s166, 31
          %s170 = scalar_select %p169, %s166, 31
          %s171 = smul.addr %s168, 32
          %s172 = sadd.s32 %s170, %s171
          %s173 = smul.addr %s172, 8
          %s174 = scalar_lea.vmem %s0, %s173
          %s175 = smul.u32 8, %s24
        $region20: #{camera_param_regressor_forward.5} parent=15 // pred_fallthru
          _
        // Predicated region
        $region21: #{camera_param_regressor_forward.5} parent=15 // pred_check
          %p176 = pneg %p84
        $region22: #{camera_param_regressor_forward.5} parent=15 // pred_check_branch
          %178 = sbr.rel (%p176) target = $region24
        $region23: #{camera_param_regressor_forward.5} parent=15 // pred_region
          %s179 = sand.u32 %s74, 1
          %s180 = scalar_lea.sflag [#allocation4], %s179
          %s181 = sand.u32 %s74, 1
          %s182 = smul.addr %s181, 2048
          %s183 = scalar_lea.vmem [#allocation3], %s182
          %s184 = smul.u32 128, %s24
          %s185 = smul.u32 4, %s23
          %187 = vsyncadd %s180, 0
          %s188 = smul.addr %s184, 8
          %s189 = sadd.s32 %s185, %s188
          %s190 = smul.addr %s189, 4
          %s191 = scalar_lea.hbm %s1, %s190
          %s192 = sshll.u32 %s191, 4
          %s193 = int_to_ptr.hbm [resolvable:$true] %s192
          %s194 = sshll.u32 %s183, 4
          %s195 = int_to_ptr.vmem [resolvable:$true] %s194
          %200 = dma.hbm_to_vmem [thread:$0]  %s193, 32768, %s195, %s180, 512, 256, 16
        $region24: #{camera_param_regressor_forward.5} parent=15 // pred_fallthru
          _
        // Predicated region
        $region25: #{camera_param_regressor_forward.5} parent=15 // pred_check
          %p201 = pneg %p110
        $region26: #{camera_param_regressor_forward.5} parent=15 // pred_check_branch
          %203 = sbr.rel (%p201) target = $region28
        $region27: #{camera_param_regressor_forward.5} parent=15 // pred_region
          %s204 = sand.u32 %s100, 1
          %s205 = scalar_lea.sflag [#allocation6], %s204
          %s206 = sand.u32 %s100, 1
          %s207 = smul.addr %s206, 4
          %s208 = scalar_lea.vmem [#allocation5], %s207
          %s209 = smul.u32 4, %s23
          %211 = vsyncadd %s205, 0
          %s212 = scalar_lea.hbm %s2, %s209
          %s214 = sshll.u32 %s212, 4
          %s215 = int_to_ptr.hbm [resolvable:$true] %s214
          %s216 = sshll.u32 %s208, 4
          %s217 = int_to_ptr.vmem [resolvable:$true] %s216
          %219 = dma.hbm_to_vmem [thread:$0]  %s215, 64, %s217, %s205
        $region28: #{camera_param_regressor_forward.5} parent=15 // pred_fallthru
          _
      $region16: #{camera_param_regressor_forward.5} parent=5 // pred_fallthru
        _
      %p220 = scmp.le.s32.totalorder 1, %s15
      %p221 = scmp.lt.s32.totalorder %s15, 9
      %p222 = pnand %p220, %p221
      %p223 = pneg %p222
      // Predicated region
      $region29: #{camera_param_regressor_forward.5} parent=5 // pred_check
        _
      $region30: #{camera_param_regressor_forward.5} parent=5 // pred_check_branch
        %225 = sbr.rel (%p222) target = $region32
      $region31: #{camera_param_regressor_forward.5} parent=5 // pred_region
        %s226 = ssub.s32 %s15, 1
        %s227 = sand.u32 %s77, 1
        %s228 = scalar_lea.sflag [#allocation4], %s227
        %s229 = sand.u32 %s77, 1
        %s230 = smul.addr %s229, 2048
        %s231 = scalar_lea.vmem [#allocation3], %s230
        // Predicated region
        $region33: #{camera_param_regressor_forward.5} parent=31 // pred_check
          %p232 = pneg %p90
        $region34: #{camera_param_regressor_forward.5} parent=31 // pred_check_branch
          %234 = sbr.rel (%p232) target = $region36
        $region35: #{camera_param_regressor_forward.5} parent=31 // pred_region
          %236 = dma.done %s228, 32768
        $region36: #{camera_param_regressor_forward.5} parent=31 // pred_fallthru
          _
        %s237 = sand.u32 %s103, 1
        %s238 = scalar_lea.sflag [#allocation6], %s237
        %s239 = sand.u32 %s103, 1
        %s240 = smul.addr %s239, 4
        %s241 = scalar_lea.vmem [#allocation5], %s240
        // Predicated region
        $region37: #{camera_param_regressor_forward.5} parent=31 // pred_check
          %p242 = pneg %p116
        $region38: #{camera_param_regressor_forward.5} parent=31 // pred_check_branch
          %244 = sbr.rel (%p242) target = $region40
        $region39: #{camera_param_regressor_forward.5} parent=31 // pred_region
          %246 = dma.done %s238, 64
        $region40: #{camera_param_regressor_forward.5} parent=31 // pred_fallthru
          _
        %s247 = smul.u32 8, %s27
        %p248 = scmp.lt.s32.totalorder %s25, 0
        %s249 = scalar_select %p248, %s25, 0
        %p250 = scmp.lt.s32.totalorder %s247, 31
        %s251 = scalar_select %p250, %s247, 31
        %s252 = smul.addr %s249, 32
        %s253 = sadd.s32 %s251, %s252
        %s254 = smul.addr %s253, 8
        %s255 = scalar_lea.vmem %s0, %s254
        %p256 = pneg %p62
        %p257 = pneg %p59
        %s258 = sand.u32 %s77, 1
        %s259 = scalar_lea.sflag [#allocation4], %s258
        %s260 = sand.u32 %s77, 1
        %s261 = smul.addr %s260, 2048
        %s262 = scalar_lea.vmem [#allocation3], %s261
        %p263 = pneg %p90
        %p264 = pneg %p87
        %s265 = sand.u32 %s103, 1
        %s266 = scalar_lea.sflag [#allocation6], %s265
        %s267 = sand.u32 %s103, 1
        %s268 = smul.addr %s267, 4
        %s269 = scalar_lea.vmem [#allocation5], %s268
        %p270 = pneg %p116
        %p271 = pneg %p113
        %p272 = pneg %p144
        %p273 = pneg %p141
        %s274 = smul.u32 4, %s26
        %p275 = scmp.lt.s32.totalorder %s25, 0
        %s276 = scalar_select %p275, %s25, 0
        %p277 = scmp.lt.s32.totalorder %s274, 7
        %s278 = scalar_select %p277, %s274, 7
        %s279 = smul.addr %s276, 8
        %s280 = sadd.s32 %s278, %s279
        %s281 = smul.addr %s280, 8
        %s282 = scalar_lea.vmem %s3, %s281
        %s283 = smul.u32 8, %s27
        %p284 = scmp.lt.s32.totalorder %s25, 0
        %s285 = scalar_select %p284, %s25, 0
        %p286 = scmp.lt.s32.totalorder %s283, 31
        %s287 = scalar_select %p286, %s283, 31
        %s288 = smul.addr %s285, 32
        %s289 = sadd.s32 %s287, %s288
        %s290 = smul.addr %s289, 8
        %s291 = scalar_lea.vmem %s0, %s290
        %s292 = smul.u32 8, %s27
        %s293 = smul.u32 128, %s27
        %s294 = smul.u32 4, %s26
        %s295 = smul.u32 4, %s26
        %s296 = smul.u32 4, %s26
        %p297 = scmp.lt.s32.totalorder %s25, 0
        %s298 = scalar_select %p297, %s25, 0
        %p299 = scmp.lt.s32.totalorder %s296, 7
        %s300 = scalar_select %p299, %s296, 7
        %s301 = smul.addr %s298, 8
        %s302 = sadd.s32 %s300, %s301
        %s303 = smul.addr %s302, 8
        %s304 = scalar_lea.vmem %s3, %s303
        %s305 = smul.u32 4, %s26
        %p306 = scmp.eq.s32.totalorder %s27, 0
        // Predicated region
        $region41: #{camera_param_regressor_forward.5} parent=31 // pred_check
          %p307 = pneg %p306
        $region42: #{camera_param_regressor_forward.5} parent=31 // pred_check_branch
          %309 = sbr.rel (%p307) target = $region44
        $region43: #{camera_param_regressor_forward.5} parent=31 // pred_region
          %310 = vst [vmem:[#allocation2] sm:$0xff] 0.0
          %311 = vst [vmem:[#allocation2 + $0x8] sm:$0xff] 0.0
          %312 = vst [vmem:[#allocation2 + $0x10] sm:$0xff] 0.0
          %313 = vst [vmem:[#allocation2 + $0x18] sm:$0xff] 0.0
        $region44: #{camera_param_regressor_forward.5} parent=31 // pred_fallthru
          _
        %v314 = vld [vmem:[#allocation2] sm:$0xff]
        %v315 = vld [vmem:[#allocation2 + $0x8] sm:$0xff]
        %v316 = vld [vmem:[#allocation2 + $0x10] sm:$0xff]
        %v317 = vld [vmem:[#allocation2 + $0x18] sm:$0xff]
        %v318 = vld [vmem:[%s291] sm:$0xff]
        %v319 = vld [vmem:[%s291 + $0x8] sm:$0xff]
        %v320 = vld [vmem:[%s291 + $0x10] sm:$0xff]
        %v321 = vld [vmem:[%s291 + $0x18] sm:$0xff]
        %v322 = vld [vmem:[%s291 + $0x20] sm:$0xff]
        %v323 = vld [vmem:[%s291 + $0x28] sm:$0xff]
        %v324 = vld [vmem:[%s291 + $0x30] sm:$0xff]
        %v325 = vld [vmem:[%s291 + $0x38] sm:$0xff]
        %v326 = vpack.c.bf16 %v318, %v318
        %v327 = vpack.c.bf16 %v319, %v319
        %v328 = vpack.c.bf16 %v320, %v320
        %v329 = vpack.c.bf16 %v321, %v321
        %v330 = vpack.c.bf16 %v322, %v322
        %v331 = vpack.c.bf16 %v323, %v323
        %v332 = vpack.c.bf16 %v324, %v324
        %v333 = vpack.c.bf16 %v325, %v325
        %v334 = vld [vmem:[%s231] sm:$0xff]
        %v335 = vld [vmem:[%s231 + $0x8] sm:$0xff]
        %v336 = vld [vmem:[%s231 + $0x10] sm:$0xff]
        %v337 = vld [vmem:[%s231 + $0x18] sm:$0xff]
        %v338 = vld [vmem:[%s231 + $0x20] sm:$0xff]
        %v339 = vld [vmem:[%s231 + $0x28] sm:$0xff]
        %v340 = vld [vmem:[%s231 + $0x30] sm:$0xff]
        %v341 = vld [vmem:[%s231 + $0x38] sm:$0xff]
        %v342 = vld [vmem:[%s231 + $0x40] sm:$0xff]
        %v343 = vld [vmem:[%s231 + $0x48] sm:$0xff]
        %v344 = vld [vmem:[%s231 + $0x50] sm:$0xff]
        %v345 = vld [vmem:[%s231 + $0x58] sm:$0xff]
        %v346 = vld [vmem:[%s231 + $0x60] sm:$0xff]
        %v347 = vld [vmem:[%s231 + $0x68] sm:$0xff]
        %v348 = vld [vmem:[%s231 + $0x70] sm:$0xff]
        %v349 = vld [vmem:[%s231 + $0x78] sm:$0xff]
        %v350 = vld [vmem:[%s231 + $0x80] sm:$0xff]
        %v351 = vld [vmem:[%s231 + $0x88] sm:$0xff]
        %v352 = vld [vmem:[%s231 + $0x90] sm:$0xff]
        %v353 = vld [vmem:[%s231 + $0x98] sm:$0xff]
        %v354 = vld [vmem:[%s231 + $0xa0] sm:$0xff]
        %v355 = vld [vmem:[%s231 + $0xa8] sm:$0xff]
        %v356 = vld [vmem:[%s231 + $0xb0] sm:$0xff]
        %v357 = vld [vmem:[%s231 + $0xb8] sm:$0xff]
        %v358 = vld [vmem:[%s231 + $0xc0] sm:$0xff]
        %v359 = vld [vmem:[%s231 + $0xc8] sm:$0xff]
        %v360 = vld [vmem:[%s231 + $0xd0] sm:$0xff]
        %v361 = vld [vmem:[%s231 + $0xd8] sm:$0xff]
        %v362 = vld [vmem:[%s231 + $0xe0] sm:$0xff]
        %v363 = vld [vmem:[%s231 + $0xe8] sm:$0xff]
        %v364 = vld [vmem:[%s231 + $0xf0] sm:$0xff]
        %v365 = vld [vmem:[%s231 + $0xf8] sm:$0xff]
        %v366 = vld [vmem:[%s231 + $0x100] sm:$0xff]
        %v367 = vld [vmem:[%s231 + $0x108] sm:$0xff]
        %v368 = vld [vmem:[%s231 + $0x110] sm:$0xff]
        %v369 = vld [vmem:[%s231 + $0x118] sm:$0xff]
        %v370 = vld [vmem:[%s231 + $0x120] sm:$0xff]
        %v371 = vld [vmem:[%s231 + $0x128] sm:$0xff]
        %v372 = vld [vmem:[%s231 + $0x130] sm:$0xff]
        %v373 = vld [vmem:[%s231 + $0x138] sm:$0xff]
        %v374 = vld [vmem:[%s231 + $0x140] sm:$0xff]
        %v375 = vld [vmem:[%s231 + $0x148] sm:$0xff]
        %v376 = vld [vmem:[%s231 + $0x150] sm:$0xff]
        %v377 = vld [vmem:[%s231 + $0x158] sm:$0xff]
        %v378 = vld [vmem:[%s231 + $0x160] sm:$0xff]
        %v379 = vld [vmem:[%s231 + $0x168] sm:$0xff]
        %v380 = vld [vmem:[%s231 + $0x170] sm:$0xff]
        %v381 = vld [vmem:[%s231 + $0x178] sm:$0xff]
        %v382 = vld [vmem:[%s231 + $0x180] sm:$0xff]
        %v383 = vld [vmem:[%s231 + $0x188] sm:$0xff]
        %v384 = vld [vmem:[%s231 + $0x190] sm:$0xff]
        %v385 = vld [vmem:[%s231 + $0x198] sm:$0xff]
        %v386 = vld [vmem:[%s231 + $0x1a0] sm:$0xff]
        %v387 = vld [vmem:[%s231 + $0x1a8] sm:$0xff]
        %v388 = vld [vmem:[%s231 + $0x1b0] sm:$0xff]
        %v389 = vld [vmem:[%s231 + $0x1b8] sm:$0xff]
        %v390 = vld [vmem:[%s231 + $0x1c0] sm:$0xff]
        %v391 = vld [vmem:[%s231 + $0x1c8] sm:$0xff]
        %v392 = vld [vmem:[%s231 + $0x1d0] sm:$0xff]
        %v393 = vld [vmem:[%s231 + $0x1d8] sm:$0xff]
        %v394 = vld [vmem:[%s231 + $0x1e0] sm:$0xff]
        %v395 = vld [vmem:[%s231 + $0x1e8] sm:$0xff]
        %v396 = vld [vmem:[%s231 + $0x1f0] sm:$0xff]
        %v397 = vld [vmem:[%s231 + $0x1f8] sm:$0xff]
        %v398 = vld [vmem:[%s231 + $0x200] sm:$0xff]
        %v399 = vld [vmem:[%s231 + $0x208] sm:$0xff]
        %v400 = vld [vmem:[%s231 + $0x210] sm:$0xff]
        %v401 = vld [vmem:[%s231 + $0x218] sm:$0xff]
        %v402 = vld [vmem:[%s231 + $0x220] sm:$0xff]
        %v403 = vld [vmem:[%s231 + $0x228] sm:$0xff]
        %v404 = vld [vmem:[%s231 + $0x230] sm:$0xff]
        %v405 = vld [vmem:[%s231 + $0x238] sm:$0xff]
        %v406 = vld [vmem:[%s231 + $0x240] sm:$0xff]
        %v407 = vld [vmem:[%s231 + $0x248] sm:$0xff]
        %v408 = vld [vmem:[%s231 + $0x250] sm:$0xff]
        %v409 = vld [vmem:[%s231 + $0x258] sm:$0xff]
        %v410 = vld [vmem:[%s231 + $0x260] sm:$0xff]
        %v411 = vld [vmem:[%s231 + $0x268] sm:$0xff]
        %v412 = vld [vmem:[%s231 + $0x270] sm:$0xff]
        %v413 = vld [vmem:[%s231 + $0x278] sm:$0xff]
        %v414 = vld [vmem:[%s231 + $0x280] sm:$0xff]
        %v415 = vld [vmem:[%s231 + $0x288] sm:$0xff]
        %v416 = vld [vmem:[%s231 + $0x290] sm:$0xff]
        %v417 = vld [vmem:[%s231 + $0x298] sm:$0xff]
        %v418 = vld [vmem:[%s231 + $0x2a0] sm:$0xff]
        %v419 = vld [vmem:[%s231 + $0x2a8] sm:$0xff]
        %v420 = vld [vmem:[%s231 + $0x2b0] sm:$0xff]
        %v421 = vld [vmem:[%s231 + $0x2b8] sm:$0xff]
        %v422 = vld [vmem:[%s231 + $0x2c0] sm:$0xff]
        %v423 = vld [vmem:[%s231 + $0x2c8] sm:$0xff]
        %v424 = vld [vmem:[%s231 + $0x2d0] sm:$0xff]
        %v425 = vld [vmem:[%s231 + $0x2d8] sm:$0xff]
        %v426 = vld [vmem:[%s231 + $0x2e0] sm:$0xff]
        %v427 = vld [vmem:[%s231 + $0x2e8] sm:$0xff]
        %v428 = vld [vmem:[%s231 + $0x2f0] sm:$0xff]
        %v429 = vld [vmem:[%s231 + $0x2f8] sm:$0xff]
        %v430 = vld [vmem:[%s231 + $0x300] sm:$0xff]
        %v431 = vld [vmem:[%s231 + $0x308] sm:$0xff]
        %v432 = vld [vmem:[%s231 + $0x310] sm:$0xff]
        %v433 = vld [vmem:[%s231 + $0x318] sm:$0xff]
        %v434 = vld [vmem:[%s231 + $0x320] sm:$0xff]
        %v435 = vld [vmem:[%s231 + $0x328] sm:$0xff]
        %v436 = vld [vmem:[%s231 + $0x330] sm:$0xff]
        %v437 = vld [vmem:[%s231 + $0x338] sm:$0xff]
        %v438 = vld [vmem:[%s231 + $0x340] sm:$0xff]
        %v439 = vld [vmem:[%s231 + $0x348] sm:$0xff]
        %v440 = vld [vmem:[%s231 + $0x350] sm:$0xff]
        %v441 = vld [vmem:[%s231 + $0x358] sm:$0xff]
        %v442 = vld [vmem:[%s231 + $0x360] sm:$0xff]
        %v443 = vld [vmem:[%s231 + $0x368] sm:$0xff]
        %v444 = vld [vmem:[%s231 + $0x370] sm:$0xff]
        %v445 = vld [vmem:[%s231 + $0x378] sm:$0xff]
        %v446 = vld [vmem:[%s231 + $0x380] sm:$0xff]
        %v447 = vld [vmem:[%s231 + $0x388] sm:$0xff]
        %v448 = vld [vmem:[%s231 + $0x390] sm:$0xff]
        %v449 = vld [vmem:[%s231 + $0x398] sm:$0xff]
        %v450 = vld [vmem:[%s231 + $0x3a0] sm:$0xff]
        %v451 = vld [vmem:[%s231 + $0x3a8] sm:$0xff]
        %v452 = vld [vmem:[%s231 + $0x3b0] sm:$0xff]
        %v453 = vld [vmem:[%s231 + $0x3b8] sm:$0xff]
        %v454 = vld [vmem:[%s231 + $0x3c0] sm:$0xff]
        %v455 = vld [vmem:[%s231 + $0x3c8] sm:$0xff]
        %v456 = vld [vmem:[%s231 + $0x3d0] sm:$0xff]
        %v457 = vld [vmem:[%s231 + $0x3d8] sm:$0xff]
        %v458 = vld [vmem:[%s231 + $0x3e0] sm:$0xff]
        %v459 = vld [vmem:[%s231 + $0x3e8] sm:$0xff]
        %v460 = vld [vmem:[%s231 + $0x3f0] sm:$0xff]
        %v461 = vld [vmem:[%s231 + $0x3f8] sm:$0xff]
        %v462 = vld [vmem:[%s231 + $0x400] sm:$0xff]
        %v463 = vld [vmem:[%s231 + $0x408] sm:$0xff]
        %v464 = vld [vmem:[%s231 + $0x410] sm:$0xff]
        %v465 = vld [vmem:[%s231 + $0x418] sm:$0xff]
        %v466 = vld [vmem:[%s231 + $0x420] sm:$0xff]
        %v467 = vld [vmem:[%s231 + $0x428] sm:$0xff]
        %v468 = vld [vmem:[%s231 + $0x430] sm:$0xff]
        %v469 = vld [vmem:[%s231 + $0x438] sm:$0xff]
        %v470 = vld [vmem:[%s231 + $0x440] sm:$0xff]
        %v471 = vld [vmem:[%s231 + $0x448] sm:$0xff]
        %v472 = vld [vmem:[%s231 + $0x450] sm:$0xff]
        %v473 = vld [vmem:[%s231 + $0x458] sm:$0xff]
        %v474 = vld [vmem:[%s231 + $0x460] sm:$0xff]
        %v475 = vld [vmem:[%s231 + $0x468] sm:$0xff]
        %v476 = vld [vmem:[%s231 + $0x470] sm:$0xff]
        %v477 = vld [vmem:[%s231 + $0x478] sm:$0xff]
        %v478 = vld [vmem:[%s231 + $0x480] sm:$0xff]
        %v479 = vld [vmem:[%s231 + $0x488] sm:$0xff]
        %v480 = vld [vmem:[%s231 + $0x490] sm:$0xff]
        %v481 = vld [vmem:[%s231 + $0x498] sm:$0xff]
        %v482 = vld [vmem:[%s231 + $0x4a0] sm:$0xff]
        %v483 = vld [vmem:[%s231 + $0x4a8] sm:$0xff]
        %v484 = vld [vmem:[%s231 + $0x4b0] sm:$0xff]
        %v485 = vld [vmem:[%s231 + $0x4b8] sm:$0xff]
        %v486 = vld [vmem:[%s231 + $0x4c0] sm:$0xff]
        %v487 = vld [vmem:[%s231 + $0x4c8] sm:$0xff]
        %v488 = vld [vmem:[%s231 + $0x4d0] sm:$0xff]
        %v489 = vld [vmem:[%s231 + $0x4d8] sm:$0xff]
        %v490 = vld [vmem:[%s231 + $0x4e0] sm:$0xff]
        %v491 = vld [vmem:[%s231 + $0x4e8] sm:$0xff]
        %v492 = vld [vmem:[%s231 + $0x4f0] sm:$0xff]
        %v493 = vld [vmem:[%s231 + $0x4f8] sm:$0xff]
        %v494 = vld [vmem:[%s231 + $0x500] sm:$0xff]
        %v495 = vld [vmem:[%s231 + $0x508] sm:$0xff]
        %v496 = vld [vmem:[%s231 + $0x510] sm:$0xff]
        %v497 = vld [vmem:[%s231 + $0x518] sm:$0xff]
        %v498 = vld [vmem:[%s231 + $0x520] sm:$0xff]
        %v499 = vld [vmem:[%s231 + $0x528] sm:$0xff]
        %v500 = vld [vmem:[%s231 + $0x530] sm:$0xff]
        %v501 = vld [vmem:[%s231 + $0x538] sm:$0xff]
        %v502 = vld [vmem:[%s231 + $0x540] sm:$0xff]
        %v503 = vld [vmem:[%s231 + $0x548] sm:$0xff]
        %v504 = vld [vmem:[%s231 + $0x550] sm:$0xff]
        %v505 = vld [vmem:[%s231 + $0x558] sm:$0xff]
        %v506 = vld [vmem:[%s231 + $0x560] sm:$0xff]
        %v507 = vld [vmem:[%s231 + $0x568] sm:$0xff]
        %v508 = vld [vmem:[%s231 + $0x570] sm:$0xff]
        %v509 = vld [vmem:[%s231 + $0x578] sm:$0xff]
        %v510 = vld [vmem:[%s231 + $0x580] sm:$0xff]
        %v511 = vld [vmem:[%s231 + $0x588] sm:$0xff]
        %v512 = vld [vmem:[%s231 + $0x590] sm:$0xff]
        %v513 = vld [vmem:[%s231 + $0x598] sm:$0xff]
        %v514 = vld [vmem:[%s231 + $0x5a0] sm:$0xff]
        %v515 = vld [vmem:[%s231 + $0x5a8] sm:$0xff]
        %v516 = vld [vmem:[%s231 + $0x5b0] sm:$0xff]
        %v517 = vld [vmem:[%s231 + $0x5b8] sm:$0xff]
        %v518 = vld [vmem:[%s231 + $0x5c0] sm:$0xff]
        %v519 = vld [vmem:[%s231 + $0x5c8] sm:$0xff]
        %v520 = vld [vmem:[%s231 + $0x5d0] sm:$0xff]
        %v521 = vld [vmem:[%s231 + $0x5d8] sm:$0xff]
        %v522 = vld [vmem:[%s231 + $0x5e0] sm:$0xff]
        %v523 = vld [vmem:[%s231 + $0x5e8] sm:$0xff]
        %v524 = vld [vmem:[%s231 + $0x5f0] sm:$0xff]
        %v525 = vld [vmem:[%s231 + $0x5f8] sm:$0xff]
        %v526 = vld [vmem:[%s231 + $0x600] sm:$0xff]
        %v527 = vld [vmem:[%s231 + $0x608] sm:$0xff]
        %v528 = vld [vmem:[%s231 + $0x610] sm:$0xff]
        %v529 = vld [vmem:[%s231 + $0x618] sm:$0xff]
        %v530 = vld [vmem:[%s231 + $0x620] sm:$0xff]
        %v531 = vld [vmem:[%s231 + $0x628] sm:$0xff]
        %v532 = vld [vmem:[%s231 + $0x630] sm:$0xff]
        %v533 = vld [vmem:[%s231 + $0x638] sm:$0xff]
        %v534 = vld [vmem:[%s231 + $0x640] sm:$0xff]
        %v535 = vld [vmem:[%s231 + $0x648] sm:$0xff]
        %v536 = vld [vmem:[%s231 + $0x650] sm:$0xff]
        %v537 = vld [vmem:[%s231 + $0x658] sm:$0xff]
        %v538 = vld [vmem:[%s231 + $0x660] sm:$0xff]
        %v539 = vld [vmem:[%s231 + $0x668] sm:$0xff]
        %v540 = vld [vmem:[%s231 + $0x670] sm:$0xff]
        %v541 = vld [vmem:[%s231 + $0x678] sm:$0xff]
        %v542 = vld [vmem:[%s231 + $0x680] sm:$0xff]
        %v543 = vld [vmem:[%s231 + $0x688] sm:$0xff]
        %v544 = vld [vmem:[%s231 + $0x690] sm:$0xff]
        %v545 = vld [vmem:[%s231 + $0x698] sm:$0xff]
        %v546 = vld [vmem:[%s231 + $0x6a0] sm:$0xff]
        %v547 = vld [vmem:[%s231 + $0x6a8] sm:$0xff]
        %v548 = vld [vmem:[%s231 + $0x6b0] sm:$0xff]
        %v549 = vld [vmem:[%s231 + $0x6b8] sm:$0xff]
        %v550 = vld [vmem:[%s231 + $0x6c0] sm:$0xff]
        %v551 = vld [vmem:[%s231 + $0x6c8] sm:$0xff]
        %v552 = vld [vmem:[%s231 + $0x6d0] sm:$0xff]
        %v553 = vld [vmem:[%s231 + $0x6d8] sm:$0xff]
        %v554 = vld [vmem:[%s231 + $0x6e0] sm:$0xff]
        %v555 = vld [vmem:[%s231 + $0x6e8] sm:$0xff]
        %v556 = vld [vmem:[%s231 + $0x6f0] sm:$0xff]
        %v557 = vld [vmem:[%s231 + $0x6f8] sm:$0xff]
        %v558 = vld [vmem:[%s231 + $0x700] sm:$0xff]
        %v559 = vld [vmem:[%s231 + $0x708] sm:$0xff]
        %v560 = vld [vmem:[%s231 + $0x710] sm:$0xff]
        %v561 = vld [vmem:[%s231 + $0x718] sm:$0xff]
        %v562 = vld [vmem:[%s231 + $0x720] sm:$0xff]
        %v563 = vld [vmem:[%s231 + $0x728] sm:$0xff]
        %v564 = vld [vmem:[%s231 + $0x730] sm:$0xff]
        %v565 = vld [vmem:[%s231 + $0x738] sm:$0xff]
        %v566 = vld [vmem:[%s231 + $0x740] sm:$0xff]
        %v567 = vld [vmem:[%s231 + $0x748] sm:$0xff]
        %v568 = vld [vmem:[%s231 + $0x750] sm:$0xff]
        %v569 = vld [vmem:[%s231 + $0x758] sm:$0xff]
        %v570 = vld [vmem:[%s231 + $0x760] sm:$0xff]
        %v571 = vld [vmem:[%s231 + $0x768] sm:$0xff]
        %v572 = vld [vmem:[%s231 + $0x770] sm:$0xff]
        %v573 = vld [vmem:[%s231 + $0x778] sm:$0xff]
        %v574 = vld [vmem:[%s231 + $0x780] sm:$0xff]
        %v575 = vld [vmem:[%s231 + $0x788] sm:$0xff]
        %v576 = vld [vmem:[%s231 + $0x790] sm:$0xff]
        %v577 = vld [vmem:[%s231 + $0x798] sm:$0xff]
        %v578 = vld [vmem:[%s231 + $0x7a0] sm:$0xff]
        %v579 = vld [vmem:[%s231 + $0x7a8] sm:$0xff]
        %v580 = vld [vmem:[%s231 + $0x7b0] sm:$0xff]
        %v581 = vld [vmem:[%s231 + $0x7b8] sm:$0xff]
        %v582 = vld [vmem:[%s231 + $0x7c0] sm:$0xff]
        %v583 = vld [vmem:[%s231 + $0x7c8] sm:$0xff]
        %v584 = vld [vmem:[%s231 + $0x7d0] sm:$0xff]
        %v585 = vld [vmem:[%s231 + $0x7d8] sm:$0xff]
        %v586 = vld [vmem:[%s231 + $0x7e0] sm:$0xff]
        %v587 = vld [vmem:[%s231 + $0x7e8] sm:$0xff]
        %v588 = vld [vmem:[%s231 + $0x7f0] sm:$0xff]
        %v589 = vld [vmem:[%s231 + $0x7f8] sm:$0xff]
        %v846 = vunpack.c.l.b16 %v334
        %v847 = vunpack.c.h.b16 %v334
        %v848 = vunpack.c.l.b16 %v335
        %v849 = vunpack.c.h.b16 %v335
        %v850 = vunpack.c.l.b16 %v336
        %v851 = vunpack.c.h.b16 %v336
        %v852 = vunpack.c.l.b16 %v337
        %v853 = vunpack.c.h.b16 %v337
        %v854 = vunpack.c.l.b16 %v338
        %v855 = vunpack.c.h.b16 %v338
        %v856 = vunpack.c.l.b16 %v339
        %v857 = vunpack.c.h.b16 %v339
        %v858 = vunpack.c.l.b16 %v340
        %v859 = vunpack.c.h.b16 %v340
        %v860 = vunpack.c.l.b16 %v341
        %v861 = vunpack.c.h.b16 %v341
        %v862 = vunpack.c.l.b16 %v342
        %v863 = vunpack.c.h.b16 %v342
        %v864 = vunpack.c.l.b16 %v343
        %v865 = vunpack.c.h.b16 %v343
        %v866 = vunpack.c.l.b16 %v344
        %v867 = vunpack.c.h.b16 %v344
        %v868 = vunpack.c.l.b16 %v345
        %v869 = vunpack.c.h.b16 %v345
        %v870 = vunpack.c.l.b16 %v346
        %v871 = vunpack.c.h.b16 %v346
        %v872 = vunpack.c.l.b16 %v347
        %v873 = vunpack.c.h.b16 %v347
        %v874 = vunpack.c.l.b16 %v348
        %v875 = vunpack.c.h.b16 %v348
        %v876 = vunpack.c.l.b16 %v349
        %v877 = vunpack.c.h.b16 %v349
        %v878 = vunpack.c.l.b16 %v350
        %v879 = vunpack.c.h.b16 %v350
        %v880 = vunpack.c.l.b16 %v351
        %v881 = vunpack.c.h.b16 %v351
        %v882 = vunpack.c.l.b16 %v352
        %v883 = vunpack.c.h.b16 %v352
        %v884 = vunpack.c.l.b16 %v353
        %v885 = vunpack.c.h.b16 %v353
        %v886 = vunpack.c.l.b16 %v354
        %v887 = vunpack.c.h.b16 %v354
        %v888 = vunpack.c.l.b16 %v355
        %v889 = vunpack.c.h.b16 %v355
        %v890 = vunpack.c.l.b16 %v356
        %v891 = vunpack.c.h.b16 %v356
        %v892 = vunpack.c.l.b16 %v357
        %v893 = vunpack.c.h.b16 %v357
        %v894 = vunpack.c.l.b16 %v358
        %v895 = vunpack.c.h.b16 %v358
        %v896 = vunpack.c.l.b16 %v359
        %v897 = vunpack.c.h.b16 %v359
        %v898 = vunpack.c.l.b16 %v360
        %v899 = vunpack.c.h.b16 %v360
        %v900 = vunpack.c.l.b16 %v361
        %v901 = vunpack.c.h.b16 %v361
        %v902 = vunpack.c.l.b16 %v362
        %v903 = vunpack.c.h.b16 %v362
        %v904 = vunpack.c.l.b16 %v363
        %v905 = vunpack.c.h.b16 %v363
        %v906 = vunpack.c.l.b16 %v364
        %v907 = vunpack.c.h.b16 %v364
        %v908 = vunpack.c.l.b16 %v365
        %v909 = vunpack.c.h.b16 %v365
        %v910 = vunpack.c.l.b16 %v366
        %v911 = vunpack.c.h.b16 %v366
        %v912 = vunpack.c.l.b16 %v367
        %v913 = vunpack.c.h.b16 %v367
        %v914 = vunpack.c.l.b16 %v368
        %v915 = vunpack.c.h.b16 %v368
        %v916 = vunpack.c.l.b16 %v369
        %v917 = vunpack.c.h.b16 %v369
        %v918 = vunpack.c.l.b16 %v370
        %v919 = vunpack.c.h.b16 %v370
        %v920 = vunpack.c.l.b16 %v371
        %v921 = vunpack.c.h.b16 %v371
        %v922 = vunpack.c.l.b16 %v372
        %v923 = vunpack.c.h.b16 %v372
        %v924 = vunpack.c.l.b16 %v373
        %v925 = vunpack.c.h.b16 %v373
        %v926 = vunpack.c.l.b16 %v374
        %v927 = vunpack.c.h.b16 %v374
        %v928 = vunpack.c.l.b16 %v375
        %v929 = vunpack.c.h.b16 %v375
        %v930 = vunpack.c.l.b16 %v376
        %v931 = vunpack.c.h.b16 %v376
        %v932 = vunpack.c.l.b16 %v377
        %v933 = vunpack.c.h.b16 %v377
        %v934 = vunpack.c.l.b16 %v378
        %v935 = vunpack.c.h.b16 %v378
        %v936 = vunpack.c.l.b16 %v379
        %v937 = vunpack.c.h.b16 %v379
        %v938 = vunpack.c.l.b16 %v380
        %v939 = vunpack.c.h.b16 %v380
        %v940 = vunpack.c.l.b16 %v381
        %v941 = vunpack.c.h.b16 %v381
        %v942 = vunpack.c.l.b16 %v382
        %v943 = vunpack.c.h.b16 %v382
        %v944 = vunpack.c.l.b16 %v383
        %v945 = vunpack.c.h.b16 %v383
        %v946 = vunpack.c.l.b16 %v384
        %v947 = vunpack.c.h.b16 %v384
        %v948 = vunpack.c.l.b16 %v385
        %v949 = vunpack.c.h.b16 %v385
        %v950 = vunpack.c.l.b16 %v386
        %v951 = vunpack.c.h.b16 %v386
        %v952 = vunpack.c.l.b16 %v387
        %v953 = vunpack.c.h.b16 %v387
        %v954 = vunpack.c.l.b16 %v388
        %v955 = vunpack.c.h.b16 %v388
        %v956 = vunpack.c.l.b16 %v389
        %v957 = vunpack.c.h.b16 %v389
        %v958 = vunpack.c.l.b16 %v390
        %v959 = vunpack.c.h.b16 %v390
        %v960 = vunpack.c.l.b16 %v391
        %v961 = vunpack.c.h.b16 %v391
        %v962 = vunpack.c.l.b16 %v392
        %v963 = vunpack.c.h.b16 %v392
        %v964 = vunpack.c.l.b16 %v393
        %v965 = vunpack.c.h.b16 %v393
        %v966 = vunpack.c.l.b16 %v394
        %v967 = vunpack.c.h.b16 %v394
        %v968 = vunpack.c.l.b16 %v395
        %v969 = vunpack.c.h.b16 %v395
        %v970 = vunpack.c.l.b16 %v396
        %v971 = vunpack.c.h.b16 %v396
        %v972 = vunpack.c.l.b16 %v397
        %v973 = vunpack.c.h.b16 %v397
        %v974 = vunpack.c.l.b16 %v398
        %v975 = vunpack.c.h.b16 %v398
        %v976 = vunpack.c.l.b16 %v399
        %v977 = vunpack.c.h.b16 %v399
        %v978 = vunpack.c.l.b16 %v400
        %v979 = vunpack.c.h.b16 %v400
        %v980 = vunpack.c.l.b16 %v401
        %v981 = vunpack.c.h.b16 %v401
        %v982 = vunpack.c.l.b16 %v402
        %v983 = vunpack.c.h.b16 %v402
        %v984 = vunpack.c.l.b16 %v403
        %v985 = vunpack.c.h.b16 %v403
        %v986 = vunpack.c.l.b16 %v404
        %v987 = vunpack.c.h.b16 %v404
        %v988 = vunpack.c.l.b16 %v405
        %v989 = vunpack.c.h.b16 %v405
        %v990 = vunpack.c.l.b16 %v406
        %v991 = vunpack.c.h.b16 %v406
        %v992 = vunpack.c.l.b16 %v407
        %v993 = vunpack.c.h.b16 %v407
        %v994 = vunpack.c.l.b16 %v408
        %v995 = vunpack.c.h.b16 %v408
        %v996 = vunpack.c.l.b16 %v409
        %v997 = vunpack.c.h.b16 %v409
        %v998 = vunpack.c.l.b16 %v410
        %v999 = vunpack.c.h.b16 %v410
        %v1000 = vunpack.c.l.b16 %v411
        %v1001 = vunpack.c.h.b16 %v411
        %v1002 = vunpack.c.l.b16 %v412
        %v1003 = vunpack.c.h.b16 %v412
        %v1004 = vunpack.c.l.b16 %v413
        %v1005 = vunpack.c.h.b16 %v413
        %v1006 = vunpack.c.l.b16 %v414
        %v1007 = vunpack.c.h.b16 %v414
        %v1008 = vunpack.c.l.b16 %v415
        %v1009 = vunpack.c.h.b16 %v415
        %v1010 = vunpack.c.l.b16 %v416
        %v1011 = vunpack.c.h.b16 %v416
        %v1012 = vunpack.c.l.b16 %v417
        %v1013 = vunpack.c.h.b16 %v417
        %v1014 = vunpack.c.l.b16 %v418
        %v1015 = vunpack.c.h.b16 %v418
        %v1016 = vunpack.c.l.b16 %v419
        %v1017 = vunpack.c.h.b16 %v419
        %v1018 = vunpack.c.l.b16 %v420
        %v1019 = vunpack.c.h.b16 %v420
        %v1020 = vunpack.c.l.b16 %v421
        %v1021 = vunpack.c.h.b16 %v421
        %v1022 = vunpack.c.l.b16 %v422
        %v1023 = vunpack.c.h.b16 %v422
        %v1024 = vunpack.c.l.b16 %v423
        %v1025 = vunpack.c.h.b16 %v423
        %v1026 = vunpack.c.l.b16 %v424
        %v1027 = vunpack.c.h.b16 %v424
        %v1028 = vunpack.c.l.b16 %v425
        %v1029 = vunpack.c.h.b16 %v425
        %v1030 = vunpack.c.l.b16 %v426
        %v1031 = vunpack.c.h.b16 %v426
        %v1032 = vunpack.c.l.b16 %v427
        %v1033 = vunpack.c.h.b16 %v427
        %v1034 = vunpack.c.l.b16 %v428
        %v1035 = vunpack.c.h.b16 %v428
        %v1036 = vunpack.c.l.b16 %v429
        %v1037 = vunpack.c.h.b16 %v429
        %v1038 = vunpack.c.l.b16 %v430
        %v1039 = vunpack.c.h.b16 %v430
        %v1040 = vunpack.c.l.b16 %v431
        %v1041 = vunpack.c.h.b16 %v431
        %v1042 = vunpack.c.l.b16 %v432
        %v1043 = vunpack.c.h.b16 %v432
        %v1044 = vunpack.c.l.b16 %v433
        %v1045 = vunpack.c.h.b16 %v433
        %v1046 = vunpack.c.l.b16 %v434
        %v1047 = vunpack.c.h.b16 %v434
        %v1048 = vunpack.c.l.b16 %v435
        %v1049 = vunpack.c.h.b16 %v435
        %v1050 = vunpack.c.l.b16 %v436
        %v1051 = vunpack.c.h.b16 %v436
        %v1052 = vunpack.c.l.b16 %v437
        %v1053 = vunpack.c.h.b16 %v437
        %v1054 = vunpack.c.l.b16 %v438
        %v1055 = vunpack.c.h.b16 %v438
        %v1056 = vunpack.c.l.b16 %v439
        %v1057 = vunpack.c.h.b16 %v439
        %v1058 = vunpack.c.l.b16 %v440
        %v1059 = vunpack.c.h.b16 %v440
        %v1060 = vunpack.c.l.b16 %v441
        %v1061 = vunpack.c.h.b16 %v441
        %v1062 = vunpack.c.l.b16 %v442
        %v1063 = vunpack.c.h.b16 %v442
        %v1064 = vunpack.c.l.b16 %v443
        %v1065 = vunpack.c.h.b16 %v443
        %v1066 = vunpack.c.l.b16 %v444
        %v1067 = vunpack.c.h.b16 %v444
        %v1068 = vunpack.c.l.b16 %v445
        %v1069 = vunpack.c.h.b16 %v445
        %v1070 = vunpack.c.l.b16 %v446
        %v1071 = vunpack.c.h.b16 %v446
        %v1072 = vunpack.c.l.b16 %v447
        %v1073 = vunpack.c.h.b16 %v447
        %v1074 = vunpack.c.l.b16 %v448
        %v1075 = vunpack.c.h.b16 %v448
        %v1076 = vunpack.c.l.b16 %v449
        %v1077 = vunpack.c.h.b16 %v449
        %v1078 = vunpack.c.l.b16 %v450
        %v1079 = vunpack.c.h.b16 %v450
        %v1080 = vunpack.c.l.b16 %v451
        %v1081 = vunpack.c.h.b16 %v451
        %v1082 = vunpack.c.l.b16 %v452
        %v1083 = vunpack.c.h.b16 %v452
        %v1084 = vunpack.c.l.b16 %v453
        %v1085 = vunpack.c.h.b16 %v453
        %v1086 = vunpack.c.l.b16 %v454
        %v1087 = vunpack.c.h.b16 %v454
        %v1088 = vunpack.c.l.b16 %v455
        %v1089 = vunpack.c.h.b16 %v455
        %v1090 = vunpack.c.l.b16 %v456
        %v1091 = vunpack.c.h.b16 %v456
        %v1092 = vunpack.c.l.b16 %v457
        %v1093 = vunpack.c.h.b16 %v457
        %v1094 = vunpack.c.l.b16 %v458
        %v1095 = vunpack.c.h.b16 %v458
        %v1096 = vunpack.c.l.b16 %v459
        %v1097 = vunpack.c.h.b16 %v459
        %v1098 = vunpack.c.l.b16 %v460
        %v1099 = vunpack.c.h.b16 %v460
        %v1100 = vunpack.c.l.b16 %v461
        %v1101 = vunpack.c.h.b16 %v461
        %v1102 = vunpack.c.l.b16 %v462
        %v1103 = vunpack.c.h.b16 %v462
        %v1104 = vunpack.c.l.b16 %v463
        %v1105 = vunpack.c.h.b16 %v463
        %v1106 = vunpack.c.l.b16 %v464
        %v1107 = vunpack.c.h.b16 %v464
        %v1108 = vunpack.c.l.b16 %v465
        %v1109 = vunpack.c.h.b16 %v465
        %v1110 = vunpack.c.l.b16 %v466
        %v1111 = vunpack.c.h.b16 %v466
        %v1112 = vunpack.c.l.b16 %v467
        %v1113 = vunpack.c.h.b16 %v467
        %v1114 = vunpack.c.l.b16 %v468
        %v1115 = vunpack.c.h.b16 %v468
        %v1116 = vunpack.c.l.b16 %v469
        %v1117 = vunpack.c.h.b16 %v469
        %v1118 = vunpack.c.l.b16 %v470
        %v1119 = vunpack.c.h.b16 %v470
        %v1120 = vunpack.c.l.b16 %v471
        %v1121 = vunpack.c.h.b16 %v471
        %v1122 = vunpack.c.l.b16 %v472
        %v1123 = vunpack.c.h.b16 %v472
        %v1124 = vunpack.c.l.b16 %v473
        %v1125 = vunpack.c.h.b16 %v473
        %v1126 = vunpack.c.l.b16 %v474
        %v1127 = vunpack.c.h.b16 %v474
        %v1128 = vunpack.c.l.b16 %v475
        %v1129 = vunpack.c.h.b16 %v475
        %v1130 = vunpack.c.l.b16 %v476
        %v1131 = vunpack.c.h.b16 %v476
        %v1132 = vunpack.c.l.b16 %v477
        %v1133 = vunpack.c.h.b16 %v477
        %v1134 = vunpack.c.l.b16 %v478
        %v1135 = vunpack.c.h.b16 %v478
        %v1136 = vunpack.c.l.b16 %v479
        %v1137 = vunpack.c.h.b16 %v479
        %v1138 = vunpack.c.l.b16 %v480
        %v1139 = vunpack.c.h.b16 %v480
        %v1140 = vunpack.c.l.b16 %v481
        %v1141 = vunpack.c.h.b16 %v481
        %v1142 = vunpack.c.l.b16 %v482
        %v1143 = vunpack.c.h.b16 %v482
        %v1144 = vunpack.c.l.b16 %v483
        %v1145 = vunpack.c.h.b16 %v483
        %v1146 = vunpack.c.l.b16 %v484
        %v1147 = vunpack.c.h.b16 %v484
        %v1148 = vunpack.c.l.b16 %v485
        %v1149 = vunpack.c.h.b16 %v485
        %v1150 = vunpack.c.l.b16 %v486
        %v1151 = vunpack.c.h.b16 %v486
        %v1152 = vunpack.c.l.b16 %v487
        %v1153 = vunpack.c.h.b16 %v487
        %v1154 = vunpack.c.l.b16 %v488
        %v1155 = vunpack.c.h.b16 %v488
        %v1156 = vunpack.c.l.b16 %v489
        %v1157 = vunpack.c.h.b16 %v489
        %v1158 = vunpack.c.l.b16 %v490
        %v1159 = vunpack.c.h.b16 %v490
        %v1160 = vunpack.c.l.b16 %v491
        %v1161 = vunpack.c.h.b16 %v491
        %v1162 = vunpack.c.l.b16 %v492
        %v1163 = vunpack.c.h.b16 %v492
        %v1164 = vunpack.c.l.b16 %v493
        %v1165 = vunpack.c.h.b16 %v493
        %v1166 = vunpack.c.l.b16 %v494
        %v1167 = vunpack.c.h.b16 %v494
        %v1168 = vunpack.c.l.b16 %v495
        %v1169 = vunpack.c.h.b16 %v495
        %v1170 = vunpack.c.l.b16 %v496
        %v1171 = vunpack.c.h.b16 %v496
        %v1172 = vunpack.c.l.b16 %v497
        %v1173 = vunpack.c.h.b16 %v497
        %v1174 = vunpack.c.l.b16 %v498
        %v1175 = vunpack.c.h.b16 %v498
        %v1176 = vunpack.c.l.b16 %v499
        %v1177 = vunpack.c.h.b16 %v499
        %v1178 = vunpack.c.l.b16 %v500
        %v1179 = vunpack.c.h.b16 %v500
        %v1180 = vunpack.c.l.b16 %v501
        %v1181 = vunpack.c.h.b16 %v501
        %v1182 = vunpack.c.l.b16 %v502
        %v1183 = vunpack.c.h.b16 %v502
        %v1184 = vunpack.c.l.b16 %v503
        %v1185 = vunpack.c.h.b16 %v503
        %v1186 = vunpack.c.l.b16 %v504
        %v1187 = vunpack.c.h.b16 %v504
        %v1188 = vunpack.c.l.b16 %v505
        %v1189 = vunpack.c.h.b16 %v505
        %v1190 = vunpack.c.l.b16 %v506
        %v1191 = vunpack.c.h.b16 %v506
        %v1192 = vunpack.c.l.b16 %v507
        %v1193 = vunpack.c.h.b16 %v507
        %v1194 = vunpack.c.l.b16 %v508
        %v1195 = vunpack.c.h.b16 %v508
        %v1196 = vunpack.c.l.b16 %v509
        %v1197 = vunpack.c.h.b16 %v509
        %v1198 = vunpack.c.l.b16 %v510
        %v1199 = vunpack.c.h.b16 %v510
        %v1200 = vunpack.c.l.b16 %v511
        %v1201 = vunpack.c.h.b16 %v511
        %v1202 = vunpack.c.l.b16 %v512
        %v1203 = vunpack.c.h.b16 %v512
        %v1204 = vunpack.c.l.b16 %v513
        %v1205 = vunpack.c.h.b16 %v513
        %v1206 = vunpack.c.l.b16 %v514
        %v1207 = vunpack.c.h.b16 %v514
        %v1208 = vunpack.c.l.b16 %v515
        %v1209 = vunpack.c.h.b16 %v515
        %v1210 = vunpack.c.l.b16 %v516
        %v1211 = vunpack.c.h.b16 %v516
        %v1212 = vunpack.c.l.b16 %v517
        %v1213 = vunpack.c.h.b16 %v517
        %v1214 = vunpack.c.l.b16 %v518
        %v1215 = vunpack.c.h.b16 %v518
        %v1216 = vunpack.c.l.b16 %v519
        %v1217 = vunpack.c.h.b16 %v519
        %v1218 = vunpack.c.l.b16 %v520
        %v1219 = vunpack.c.h.b16 %v520
        %v1220 = vunpack.c.l.b16 %v521
        %v1221 = vunpack.c.h.b16 %v521
        %v1222 = vunpack.c.l.b16 %v522
        %v1223 = vunpack.c.h.b16 %v522
        %v1224 = vunpack.c.l.b16 %v523
        %v1225 = vunpack.c.h.b16 %v523
        %v1226 = vunpack.c.l.b16 %v524
        %v1227 = vunpack.c.h.b16 %v524
        %v1228 = vunpack.c.l.b16 %v525
        %v1229 = vunpack.c.h.b16 %v525
        %v1230 = vunpack.c.l.b16 %v526
        %v1231 = vunpack.c.h.b16 %v526
        %v1232 = vunpack.c.l.b16 %v527
        %v1233 = vunpack.c.h.b16 %v527
        %v1234 = vunpack.c.l.b16 %v528
        %v1235 = vunpack.c.h.b16 %v528
        %v1236 = vunpack.c.l.b16 %v529
        %v1237 = vunpack.c.h.b16 %v529
        %v1238 = vunpack.c.l.b16 %v530
        %v1239 = vunpack.c.h.b16 %v530
        %v1240 = vunpack.c.l.b16 %v531
        %v1241 = vunpack.c.h.b16 %v531
        %v1242 = vunpack.c.l.b16 %v532
        %v1243 = vunpack.c.h.b16 %v532
        %v1244 = vunpack.c.l.b16 %v533
        %v1245 = vunpack.c.h.b16 %v533
        %v1246 = vunpack.c.l.b16 %v534
        %v1247 = vunpack.c.h.b16 %v534
        %v1248 = vunpack.c.l.b16 %v535
        %v1249 = vunpack.c.h.b16 %v535
        %v1250 = vunpack.c.l.b16 %v536
        %v1251 = vunpack.c.h.b16 %v536
        %v1252 = vunpack.c.l.b16 %v537
        %v1253 = vunpack.c.h.b16 %v537
        %v1254 = vunpack.c.l.b16 %v538
        %v1255 = vunpack.c.h.b16 %v538
        %v1256 = vunpack.c.l.b16 %v539
        %v1257 = vunpack.c.h.b16 %v539
        %v1258 = vunpack.c.l.b16 %v540
        %v1259 = vunpack.c.h.b16 %v540
        %v1260 = vunpack.c.l.b16 %v541
        %v1261 = vunpack.c.h.b16 %v541
        %v1262 = vunpack.c.l.b16 %v542
        %v1263 = vunpack.c.h.b16 %v542
        %v1264 = vunpack.c.l.b16 %v543
        %v1265 = vunpack.c.h.b16 %v543
        %v1266 = vunpack.c.l.b16 %v544
        %v1267 = vunpack.c.h.b16 %v544
        %v1268 = vunpack.c.l.b16 %v545
        %v1269 = vunpack.c.h.b16 %v545
        %v1270 = vunpack.c.l.b16 %v546
        %v1271 = vunpack.c.h.b16 %v546
        %v1272 = vunpack.c.l.b16 %v547
        %v1273 = vunpack.c.h.b16 %v547
        %v1274 = vunpack.c.l.b16 %v548
        %v1275 = vunpack.c.h.b16 %v548
        %v1276 = vunpack.c.l.b16 %v549
        %v1277 = vunpack.c.h.b16 %v549
        %v1278 = vunpack.c.l.b16 %v550
        %v1279 = vunpack.c.h.b16 %v550
        %v1280 = vunpack.c.l.b16 %v551
        %v1281 = vunpack.c.h.b16 %v551
        %v1282 = vunpack.c.l.b16 %v552
        %v1283 = vunpack.c.h.b16 %v552
        %v1284 = vunpack.c.l.b16 %v553
        %v1285 = vunpack.c.h.b16 %v553
        %v1286 = vunpack.c.l.b16 %v554
        %v1287 = vunpack.c.h.b16 %v554
        %v1288 = vunpack.c.l.b16 %v555
        %v1289 = vunpack.c.h.b16 %v555
        %v1290 = vunpack.c.l.b16 %v556
        %v1291 = vunpack.c.h.b16 %v556
        %v1292 = vunpack.c.l.b16 %v557
        %v1293 = vunpack.c.h.b16 %v557
        %v1294 = vunpack.c.l.b16 %v558
        %v1295 = vunpack.c.h.b16 %v558
        %v1296 = vunpack.c.l.b16 %v559
        %v1297 = vunpack.c.h.b16 %v559
        %v1298 = vunpack.c.l.b16 %v560
        %v1299 = vunpack.c.h.b16 %v560
        %v1300 = vunpack.c.l.b16 %v561
        %v1301 = vunpack.c.h.b16 %v561
        %v1302 = vunpack.c.l.b16 %v562
        %v1303 = vunpack.c.h.b16 %v562
        %v1304 = vunpack.c.l.b16 %v563
        %v1305 = vunpack.c.h.b16 %v563
        %v1306 = vunpack.c.l.b16 %v564
        %v1307 = vunpack.c.h.b16 %v564
        %v1308 = vunpack.c.l.b16 %v565
        %v1309 = vunpack.c.h.b16 %v565
        %v1310 = vunpack.c.l.b16 %v566
        %v1311 = vunpack.c.h.b16 %v566
        %v1312 = vunpack.c.l.b16 %v567
        %v1313 = vunpack.c.h.b16 %v567
        %v1314 = vunpack.c.l.b16 %v568
        %v1315 = vunpack.c.h.b16 %v568
        %v1316 = vunpack.c.l.b16 %v569
        %v1317 = vunpack.c.h.b16 %v569
        %v1318 = vunpack.c.l.b16 %v570
        %v1319 = vunpack.c.h.b16 %v570
        %v1320 = vunpack.c.l.b16 %v571
        %v1321 = vunpack.c.h.b16 %v571
        %v1322 = vunpack.c.l.b16 %v572
        %v1323 = vunpack.c.h.b16 %v572
        %v1324 = vunpack.c.l.b16 %v573
        %v1325 = vunpack.c.h.b16 %v573
        %v1326 = vunpack.c.l.b16 %v574
        %v1327 = vunpack.c.h.b16 %v574
        %v1328 = vunpack.c.l.b16 %v575
        %v1329 = vunpack.c.h.b16 %v575
        %v1330 = vunpack.c.l.b16 %v576
        %v1331 = vunpack.c.h.b16 %v576
        %v1332 = vunpack.c.l.b16 %v577
        %v1333 = vunpack.c.h.b16 %v577
        %v1334 = vunpack.c.l.b16 %v578
        %v1335 = vunpack.c.h.b16 %v578
        %v1336 = vunpack.c.l.b16 %v579
        %v1337 = vunpack.c.h.b16 %v579
        %v1338 = vunpack.c.l.b16 %v580
        %v1339 = vunpack.c.h.b16 %v580
        %v1340 = vunpack.c.l.b16 %v581
        %v1341 = vunpack.c.h.b16 %v581
        %v1342 = vunpack.c.l.b16 %v582
        %v1343 = vunpack.c.h.b16 %v582
        %v1344 = vunpack.c.l.b16 %v583
        %v1345 = vunpack.c.h.b16 %v583
        %v1346 = vunpack.c.l.b16 %v584
        %v1347 = vunpack.c.h.b16 %v584
        %v1348 = vunpack.c.l.b16 %v585
        %v1349 = vunpack.c.h.b16 %v585
        %v1350 = vunpack.c.l.b16 %v586
        %v1351 = vunpack.c.h.b16 %v586
        %v1352 = vunpack.c.l.b16 %v587
        %v1353 = vunpack.c.h.b16 %v587
        %v1354 = vunpack.c.l.b16 %v588
        %v1355 = vunpack.c.h.b16 %v588
        %v1356 = vunpack.c.l.b16 %v589
        %v1357 = vunpack.c.h.b16 %v589
        %v1358 = vpack.c.b16 %v850, %v846
        %v1359 = vpack.c.b16 %v851, %v847
        %v1360 = vpack.c.b16 %v852, %v848
        %v1361 = vpack.c.b16 %v853, %v849
        %v1362 = vpack.c.b16 %v858, %v854
        %v1363 = vpack.c.b16 %v859, %v855
        %v1364 = vpack.c.b16 %v860, %v856
        %v1365 = vpack.c.b16 %v861, %v857
        %v1366 = vpack.c.b16 %v866, %v862
        %v1367 = vpack.c.b16 %v867, %v863
        %v1368 = vpack.c.b16 %v868, %v864
        %v1369 = vpack.c.b16 %v869, %v865
        %v1370 = vpack.c.b16 %v874, %v870
        %v1371 = vpack.c.b16 %v875, %v871
        %v1372 = vpack.c.b16 %v876, %v872
        %v1373 = vpack.c.b16 %v877, %v873
        %v1374 = vpack.c.b16 %v882, %v878
        %v1375 = vpack.c.b16 %v883, %v879
        %v1376 = vpack.c.b16 %v884, %v880
        %v1377 = vpack.c.b16 %v885, %v881
        %v1378 = vpack.c.b16 %v890, %v886
        %v1379 = vpack.c.b16 %v891, %v887
        %v1380 = vpack.c.b16 %v892, %v888
        %v1381 = vpack.c.b16 %v893, %v889
        %v1382 = vpack.c.b16 %v898, %v894
        %v1383 = vpack.c.b16 %v899, %v895
        %v1384 = vpack.c.b16 %v900, %v896
        %v1385 = vpack.c.b16 %v901, %v897
        %v1386 = vpack.c.b16 %v906, %v902
        %v1387 = vpack.c.b16 %v907, %v903
        %v1388 = vpack.c.b16 %v908, %v904
        %v1389 = vpack.c.b16 %v909, %v905
        %v1390 = vpack.c.b16 %v914, %v910
        %v1391 = vpack.c.b16 %v915, %v911
        %v1392 = vpack.c.b16 %v916, %v912
        %v1393 = vpack.c.b16 %v917, %v913
        %v1394 = vpack.c.b16 %v922, %v918
        %v1395 = vpack.c.b16 %v923, %v919
        %v1396 = vpack.c.b16 %v924, %v920
        %v1397 = vpack.c.b16 %v925, %v921
        %v1398 = vpack.c.b16 %v930, %v926
        %v1399 = vpack.c.b16 %v931, %v927
        %v1400 = vpack.c.b16 %v932, %v928
        %v1401 = vpack.c.b16 %v933, %v929
        %v1402 = vpack.c.b16 %v938, %v934
        %v1403 = vpack.c.b16 %v939, %v935
        %v1404 = vpack.c.b16 %v940, %v936
        %v1405 = vpack.c.b16 %v941, %v937
        %v1406 = vpack.c.b16 %v946, %v942
        %v1407 = vpack.c.b16 %v947, %v943
        %v1408 = vpack.c.b16 %v948, %v944
        %v1409 = vpack.c.b16 %v949, %v945
        %v1410 = vpack.c.b16 %v954, %v950
        %v1411 = vpack.c.b16 %v955, %v951
        %v1412 = vpack.c.b16 %v956, %v952
        %v1413 = vpack.c.b16 %v957, %v953
        %v1414 = vpack.c.b16 %v962, %v958
        %v1415 = vpack.c.b16 %v963, %v959
        %v1416 = vpack.c.b16 %v964, %v960
        %v1417 = vpack.c.b16 %v965, %v961
        %v1418 = vpack.c.b16 %v970, %v966
        %v1419 = vpack.c.b16 %v971, %v967
        %v1420 = vpack.c.b16 %v972, %v968
        %v1421 = vpack.c.b16 %v973, %v969
        %v1422 = vpack.c.b16 %v978, %v974
        %v1423 = vpack.c.b16 %v979, %v975
        %v1424 = vpack.c.b16 %v980, %v976
        %v1425 = vpack.c.b16 %v981, %v977
        %v1426 = vpack.c.b16 %v986, %v982
        %v1427 = vpack.c.b16 %v987, %v983
        %v1428 = vpack.c.b16 %v988, %v984
        %v1429 = vpack.c.b16 %v989, %v985
        %v1430 = vpack.c.b16 %v994, %v990
        %v1431 = vpack.c.b16 %v995, %v991
        %v1432 = vpack.c.b16 %v996, %v992
        %v1433 = vpack.c.b16 %v997, %v993
        %v1434 = vpack.c.b16 %v1002, %v998
        %v1435 = vpack.c.b16 %v1003, %v999
        %v1436 = vpack.c.b16 %v1004, %v1000
        %v1437 = vpack.c.b16 %v1005, %v1001
        %v1438 = vpack.c.b16 %v1010, %v1006
        %v1439 = vpack.c.b16 %v1011, %v1007
        %v1440 = vpack.c.b16 %v1012, %v1008
        %v1441 = vpack.c.b16 %v1013, %v1009
        %v1442 = vpack.c.b16 %v1018, %v1014
        %v1443 = vpack.c.b16 %v1019, %v1015
        %v1444 = vpack.c.b16 %v1020, %v1016
        %v1445 = vpack.c.b16 %v1021, %v1017
        %v1446 = vpack.c.b16 %v1026, %v1022
        %v1447 = vpack.c.b16 %v1027, %v1023
        %v1448 = vpack.c.b16 %v1028, %v1024
        %v1449 = vpack.c.b16 %v1029, %v1025
        %v1450 = vpack.c.b16 %v1034, %v1030
        %v1451 = vpack.c.b16 %v1035, %v1031
        %v1452 = vpack.c.b16 %v1036, %v1032
        %v1453 = vpack.c.b16 %v1037, %v1033
        %v1454 = vpack.c.b16 %v1042, %v1038
        %v1455 = vpack.c.b16 %v1043, %v1039
        %v1456 = vpack.c.b16 %v1044, %v1040
        %v1457 = vpack.c.b16 %v1045, %v1041
        %v1458 = vpack.c.b16 %v1050, %v1046
        %v1459 = vpack.c.b16 %v1051, %v1047
        %v1460 = vpack.c.b16 %v1052, %v1048
        %v1461 = vpack.c.b16 %v1053, %v1049
        %v1462 = vpack.c.b16 %v1058, %v1054
        %v1463 = vpack.c.b16 %v1059, %v1055
        %v1464 = vpack.c.b16 %v1060, %v1056
        %v1465 = vpack.c.b16 %v1061, %v1057
        %v1466 = vpack.c.b16 %v1066, %v1062
        %v1467 = vpack.c.b16 %v1067, %v1063
        %v1468 = vpack.c.b16 %v1068, %v1064
        %v1469 = vpack.c.b16 %v1069, %v1065
        %v1470 = vpack.c.b16 %v1074, %v1070
        %v1471 = vpack.c.b16 %v1075, %v1071
        %v1472 = vpack.c.b16 %v1076, %v1072
        %v1473 = vpack.c.b16 %v1077, %v1073
        %v1474 = vpack.c.b16 %v1082, %v1078
        %v1475 = vpack.c.b16 %v1083, %v1079
        %v1476 = vpack.c.b16 %v1084, %v1080
        %v1477 = vpack.c.b16 %v1085, %v1081
        %v1478 = vpack.c.b16 %v1090, %v1086
        %v1479 = vpack.c.b16 %v1091, %v1087
        %v1480 = vpack.c.b16 %v1092, %v1088
        %v1481 = vpack.c.b16 %v1093, %v1089
        %v1482 = vpack.c.b16 %v1098, %v1094
        %v1483 = vpack.c.b16 %v1099, %v1095
        %v1484 = vpack.c.b16 %v1100, %v1096
        %v1485 = vpack.c.b16 %v1101, %v1097
        %v1486 = vpack.c.b16 %v1106, %v1102
        %v1487 = vpack.c.b16 %v1107, %v1103
        %v1488 = vpack.c.b16 %v1108, %v1104
        %v1489 = vpack.c.b16 %v1109, %v1105
        %v1490 = vpack.c.b16 %v1114, %v1110
        %v1491 = vpack.c.b16 %v1115, %v1111
        %v1492 = vpack.c.b16 %v1116, %v1112
        %v1493 = vpack.c.b16 %v1117, %v1113
        %v1494 = vpack.c.b16 %v1122, %v1118
        %v1495 = vpack.c.b16 %v1123, %v1119
        %v1496 = vpack.c.b16 %v1124, %v1120
        %v1497 = vpack.c.b16 %v1125, %v1121
        %v1498 = vpack.c.b16 %v1130, %v1126
        %v1499 = vpack.c.b16 %v1131, %v1127
        %v1500 = vpack.c.b16 %v1132, %v1128
        %v1501 = vpack.c.b16 %v1133, %v1129
        %v1502 = vpack.c.b16 %v1138, %v1134
        %v1503 = vpack.c.b16 %v1139, %v1135
        %v1504 = vpack.c.b16 %v1140, %v1136
        %v1505 = vpack.c.b16 %v1141, %v1137
        %v1506 = vpack.c.b16 %v1146, %v1142
        %v1507 = vpack.c.b16 %v1147, %v1143
        %v1508 = vpack.c.b16 %v1148, %v1144
        %v1509 = vpack.c.b16 %v1149, %v1145
        %v1510 = vpack.c.b16 %v1154, %v1150
        %v1511 = vpack.c.b16 %v1155, %v1151
        %v1512 = vpack.c.b16 %v1156, %v1152
        %v1513 = vpack.c.b16 %v1157, %v1153
        %v1514 = vpack.c.b16 %v1162, %v1158
        %v1515 = vpack.c.b16 %v1163, %v1159
        %v1516 = vpack.c.b16 %v1164, %v1160
        %v1517 = vpack.c.b16 %v1165, %v1161
        %v1518 = vpack.c.b16 %v1170, %v1166
        %v1519 = vpack.c.b16 %v1171, %v1167
        %v1520 = vpack.c.b16 %v1172, %v1168
        %v1521 = vpack.c.b16 %v1173, %v1169
        %v1522 = vpack.c.b16 %v1178, %v1174
        %v1523 = vpack.c.b16 %v1179, %v1175
        %v1524 = vpack.c.b16 %v1180, %v1176
        %v1525 = vpack.c.b16 %v1181, %v1177
        %v1526 = vpack.c.b16 %v1186, %v1182
        %v1527 = vpack.c.b16 %v1187, %v1183
        %v1528 = vpack.c.b16 %v1188, %v1184
        %v1529 = vpack.c.b16 %v1189, %v1185
        %v1530 = vpack.c.b16 %v1194, %v1190
        %v1531 = vpack.c.b16 %v1195, %v1191
        %v1532 = vpack.c.b16 %v1196, %v1192
        %v1533 = vpack.c.b16 %v1197, %v1193
        %v1534 = vpack.c.b16 %v1202, %v1198
        %v1535 = vpack.c.b16 %v1203, %v1199
        %v1536 = vpack.c.b16 %v1204, %v1200
        %v1537 = vpack.c.b16 %v1205, %v1201
        %v1538 = vpack.c.b16 %v1210, %v1206
        %v1539 = vpack.c.b16 %v1211, %v1207
        %v1540 = vpack.c.b16 %v1212, %v1208
        %v1541 = vpack.c.b16 %v1213, %v1209
        %v1542 = vpack.c.b16 %v1218, %v1214
        %v1543 = vpack.c.b16 %v1219, %v1215
        %v1544 = vpack.c.b16 %v1220, %v1216
        %v1545 = vpack.c.b16 %v1221, %v1217
        %v1546 = vpack.c.b16 %v1226, %v1222
        %v1547 = vpack.c.b16 %v1227, %v1223
        %v1548 = vpack.c.b16 %v1228, %v1224
        %v1549 = vpack.c.b16 %v1229, %v1225
        %v1550 = vpack.c.b16 %v1234, %v1230
        %v1551 = vpack.c.b16 %v1235, %v1231
        %v1552 = vpack.c.b16 %v1236, %v1232
        %v1553 = vpack.c.b16 %v1237, %v1233
        %v1554 = vpack.c.b16 %v1242, %v1238
        %v1555 = vpack.c.b16 %v1243, %v1239
        %v1556 = vpack.c.b16 %v1244, %v1240
        %v1557 = vpack.c.b16 %v1245, %v1241
        %v1558 = vpack.c.b16 %v1250, %v1246
        %v1559 = vpack.c.b16 %v1251, %v1247
        %v1560 = vpack.c.b16 %v1252, %v1248
        %v1561 = vpack.c.b16 %v1253, %v1249
        %v1562 = vpack.c.b16 %v1258, %v1254
        %v1563 = vpack.c.b16 %v1259, %v1255
        %v1564 = vpack.c.b16 %v1260, %v1256
        %v1565 = vpack.c.b16 %v1261, %v1257
        %v1566 = vpack.c.b16 %v1266, %v1262
        %v1567 = vpack.c.b16 %v1267, %v1263
        %v1568 = vpack.c.b16 %v1268, %v1264
        %v1569 = vpack.c.b16 %v1269, %v1265
        %v1570 = vpack.c.b16 %v1274, %v1270
        %v1571 = vpack.c.b16 %v1275, %v1271
        %v1572 = vpack.c.b16 %v1276, %v1272
        %v1573 = vpack.c.b16 %v1277, %v1273
        %v1574 = vpack.c.b16 %v1282, %v1278
        %v1575 = vpack.c.b16 %v1283, %v1279
        %v1576 = vpack.c.b16 %v1284, %v1280
        %v1577 = vpack.c.b16 %v1285, %v1281
        %v1578 = vpack.c.b16 %v1290, %v1286
        %v1579 = vpack.c.b16 %v1291, %v1287
        %v1580 = vpack.c.b16 %v1292, %v1288
        %v1581 = vpack.c.b16 %v1293, %v1289
        %v1582 = vpack.c.b16 %v1298, %v1294
        %v1583 = vpack.c.b16 %v1299, %v1295
        %v1584 = vpack.c.b16 %v1300, %v1296
        %v1585 = vpack.c.b16 %v1301, %v1297
        %v1586 = vpack.c.b16 %v1306, %v1302
        %v1587 = vpack.c.b16 %v1307, %v1303
        %v1588 = vpack.c.b16 %v1308, %v1304
        %v1589 = vpack.c.b16 %v1309, %v1305
        %v1590 = vpack.c.b16 %v1314, %v1310
        %v1591 = vpack.c.b16 %v1315, %v1311
        %v1592 = vpack.c.b16 %v1316, %v1312
        %v1593 = vpack.c.b16 %v1317, %v1313
        %v1594 = vpack.c.b16 %v1322, %v1318
        %v1595 = vpack.c.b16 %v1323, %v1319
        %v1596 = vpack.c.b16 %v1324, %v1320
        %v1597 = vpack.c.b16 %v1325, %v1321
        %v1598 = vpack.c.b16 %v1330, %v1326
        %v1599 = vpack.c.b16 %v1331, %v1327
        %v1600 = vpack.c.b16 %v1332, %v1328
        %v1601 = vpack.c.b16 %v1333, %v1329
        %v1602 = vpack.c.b16 %v1338, %v1334
        %v1603 = vpack.c.b16 %v1339, %v1335
        %v1604 = vpack.c.b16 %v1340, %v1336
        %v1605 = vpack.c.b16 %v1341, %v1337
        %v1606 = vpack.c.b16 %v1346, %v1342
        %v1607 = vpack.c.b16 %v1347, %v1343
        %v1608 = vpack.c.b16 %v1348, %v1344
        %v1609 = vpack.c.b16 %v1349, %v1345
        %v1610 = vpack.c.b16 %v1354, %v1350
        %v1611 = vpack.c.b16 %v1355, %v1351
        %v1612 = vpack.c.b16 %v1356, %v1352
        %v1613 = vpack.c.b16 %v1357, %v1353
        %1870 = vmatpush.bf16.msra.mxu0 %v1386
        %1871 = vmatpush.bf16.msra.mxu0 %v1382
        %1872 = vmatpush.bf16.msra.mxu0 %v1378
        %1873 = vmatpush.bf16.msra.mxu0 %v1374
        %1874 = vmatpush.bf16.msra.mxu0 %v1370
        %1875 = vmatpush.bf16.msra.mxu0 %v1366
        %1876 = vmatpush.bf16.msra.mxu0 %v1362
        %1877 = vmatpush.bf16.msra.mxu0 %v1358
        %1878 = vmatmul.bf16.gmra.mxu0 %v326
        %v1879 = vpop.f32.mrf.mxu0
        %v1880 = vadd.f32 0.0, %v1879
        %v1881 = vpop.f32.mrf.mxu0
        %1882 = vdwg.mxu0
        %1883 = vmatpush.bf16.msra.mxu0 %v1418
        %1884 = vmatpush.bf16.msra.mxu0 %v1414
        %1885 = vmatpush.bf16.msra.mxu0 %v1410
        %1886 = vmatpush.bf16.msra.mxu0 %v1406
        %1887 = vmatpush.bf16.msra.mxu0 %v1402
        %1888 = vmatpush.bf16.msra.mxu0 %v1398
        %1889 = vmatpush.bf16.msra.mxu0 %v1394
        %1890 = vmatpush.bf16.msra.mxu0 %v1390
        %1891 = vmatmul.bf16.gmra.mxu0 %v327
        %v1892 = vpop.f32.mrf.mxu0
        %v1893 = vadd.f32 %v1880, %v1892
        %v1894 = vpop.f32.mrf.mxu0
        %1895 = vdwg.mxu0
        %1896 = vmatpush.bf16.msra.mxu0 %v1450
        %1897 = vmatpush.bf16.msra.mxu0 %v1446
        %1898 = vmatpush.bf16.msra.mxu0 %v1442
        %1899 = vmatpush.bf16.msra.mxu0 %v1438
        %1900 = vmatpush.bf16.msra.mxu0 %v1434
        %1901 = vmatpush.bf16.msra.mxu0 %v1430
        %1902 = vmatpush.bf16.msra.mxu0 %v1426
        %1903 = vmatpush.bf16.msra.mxu0 %v1422
        %1904 = vmatmul.bf16.gmra.mxu0 %v328
        %v1905 = vpop.f32.mrf.mxu0
        %v1906 = vadd.f32 %v1893, %v1905
        %v1907 = vpop.f32.mrf.mxu0
        %1908 = vdwg.mxu0
        %1909 = vmatpush.bf16.msra.mxu0 %v1482
        %1910 = vmatpush.bf16.msra.mxu0 %v1478
        %1911 = vmatpush.bf16.msra.mxu0 %v1474
        %1912 = vmatpush.bf16.msra.mxu0 %v1470
        %1913 = vmatpush.bf16.msra.mxu0 %v1466
        %1914 = vmatpush.bf16.msra.mxu0 %v1462
        %1915 = vmatpush.bf16.msra.mxu0 %v1458
        %1916 = vmatpush.bf16.msra.mxu0 %v1454
        %1917 = vmatmul.bf16.gmra.mxu0 %v329
        %v1918 = vpop.f32.mrf.mxu0
        %v1919 = vadd.f32 %v1906, %v1918
        %v1920 = vpop.f32.mrf.mxu0
        %1921 = vdwg.mxu0
        %1922 = vmatpush.bf16.msra.mxu0 %v1514
        %1923 = vmatpush.bf16.msra.mxu0 %v1510
        %1924 = vmatpush.bf16.msra.mxu0 %v1506
        %1925 = vmatpush.bf16.msra.mxu0 %v1502
        %1926 = vmatpush.bf16.msra.mxu0 %v1498
        %1927 = vmatpush.bf16.msra.mxu0 %v1494
        %1928 = vmatpush.bf16.msra.mxu0 %v1490
        %1929 = vmatpush.bf16.msra.mxu0 %v1486
        %1930 = vmatmul.bf16.gmra.mxu0 %v330
        %v1931 = vpop.f32.mrf.mxu0
        %v1932 = vadd.f32 %v1919, %v1931
        %v1933 = vpop.f32.mrf.mxu0
        %1934 = vdwg.mxu0
        %1935 = vmatpush.bf16.msra.mxu0 %v1546
        %1936 = vmatpush.bf16.msra.mxu0 %v1542
        %1937 = vmatpush.bf16.msra.mxu0 %v1538
        %1938 = vmatpush.bf16.msra.mxu0 %v1534
        %1939 = vmatpush.bf16.msra.mxu0 %v1530
        %1940 = vmatpush.bf16.msra.mxu0 %v1526
        %1941 = vmatpush.bf16.msra.mxu0 %v1522
        %1942 = vmatpush.bf16.msra.mxu0 %v1518
        %1943 = vmatmul.bf16.gmra.mxu0 %v331
        %v1944 = vpop.f32.mrf.mxu0
        %v1945 = vadd.f32 %v1932, %v1944
        %v1946 = vpop.f32.mrf.mxu0
        %1947 = vdwg.mxu0
        %1948 = vmatpush.bf16.msra.mxu0 %v1578
        %1949 = vmatpush.bf16.msra.mxu0 %v1574
        %1950 = vmatpush.bf16.msra.mxu0 %v1570
        %1951 = vmatpush.bf16.msra.mxu0 %v1566
        %1952 = vmatpush.bf16.msra.mxu0 %v1562
        %1953 = vmatpush.bf16.msra.mxu0 %v1558
        %1954 = vmatpush.bf16.msra.mxu0 %v1554
        %1955 = vmatpush.bf16.msra.mxu0 %v1550
        %1956 = vmatmul.bf16.gmra.mxu0 %v332
        %v1957 = vpop.f32.mrf.mxu0
        %v1958 = vadd.f32 %v1945, %v1957
        %v1959 = vpop.f32.mrf.mxu0
        %1960 = vdwg.mxu0
        %1961 = vmatpush.bf16.msra.mxu0 %v1610
        %1962 = vmatpush.bf16.msra.mxu0 %v1606
        %1963 = vmatpush.bf16.msra.mxu0 %v1602
        %1964 = vmatpush.bf16.msra.mxu0 %v1598
        %1965 = vmatpush.bf16.msra.mxu0 %v1594
        %1966 = vmatpush.bf16.msra.mxu0 %v1590
        %1967 = vmatpush.bf16.msra.mxu0 %v1586
        %1968 = vmatpush.bf16.msra.mxu0 %v1582
        %1969 = vmatmul.bf16.gmra.mxu0 %v333
        %v1970 = vpop.f32.mrf.mxu0
        %v1971 = vadd.f32 %v1958, %v1970
        %v1972 = vpop.f32.mrf.mxu0
        %1973 = vdwg.mxu0
        %1974 = vmatpush.bf16.msra.mxu0 %v1387
        %1975 = vmatpush.bf16.msra.mxu0 %v1383
        %1976 = vmatpush.bf16.msra.mxu0 %v1379
        %1977 = vmatpush.bf16.msra.mxu0 %v1375
        %1978 = vmatpush.bf16.msra.mxu0 %v1371
        %1979 = vmatpush.bf16.msra.mxu0 %v1367
        %1980 = vmatpush.bf16.msra.mxu0 %v1363
        %1981 = vmatpush.bf16.msra.mxu0 %v1359
        %1982 = vmatmul.bf16.gmra.mxu0 %v326
        %v1983 = vpop.f32.mrf.mxu0
        %v1984 = vadd.f32 0.0, %v1983
        %v1985 = vpop.f32.mrf.mxu0
        %1986 = vdwg.mxu0
        %1987 = vmatpush.bf16.msra.mxu0 %v1419
        %1988 = vmatpush.bf16.msra.mxu0 %v1415
        %1989 = vmatpush.bf16.msra.mxu0 %v1411
        %1990 = vmatpush.bf16.msra.mxu0 %v1407
        %1991 = vmatpush.bf16.msra.mxu0 %v1403
        %1992 = vmatpush.bf16.msra.mxu0 %v1399
        %1993 = vmatpush.bf16.msra.mxu0 %v1395
        %1994 = vmatpush.bf16.msra.mxu0 %v1391
        %1995 = vmatmul.bf16.gmra.mxu0 %v327
        %v1996 = vpop.f32.mrf.mxu0
        %v1997 = vadd.f32 %v1984, %v1996
        %v1998 = vpop.f32.mrf.mxu0
        %1999 = vdwg.mxu0
        %2000 = vmatpush.bf16.msra.mxu0 %v1451
        %2001 = vmatpush.bf16.msra.mxu0 %v1447
        %2002 = vmatpush.bf16.msra.mxu0 %v1443
        %2003 = vmatpush.bf16.msra.mxu0 %v1439
        %2004 = vmatpush.bf16.msra.mxu0 %v1435
        %2005 = vmatpush.bf16.msra.mxu0 %v1431
        %2006 = vmatpush.bf16.msra.mxu0 %v1427
        %2007 = vmatpush.bf16.msra.mxu0 %v1423
        %2008 = vmatmul.bf16.gmra.mxu0 %v328
        %v2009 = vpop.f32.mrf.mxu0
        %v2010 = vadd.f32 %v1997, %v2009
        %v2011 = vpop.f32.mrf.mxu0
        %2012 = vdwg.mxu0
        %2013 = vmatpush.bf16.msra.mxu0 %v1483
        %2014 = vmatpush.bf16.msra.mxu0 %v1479
        %2015 = vmatpush.bf16.msra.mxu0 %v1475
        %2016 = vmatpush.bf16.msra.mxu0 %v1471
        %2017 = vmatpush.bf16.msra.mxu0 %v1467
        %2018 = vmatpush.bf16.msra.mxu0 %v1463
        %2019 = vmatpush.bf16.msra.mxu0 %v1459
        %2020 = vmatpush.bf16.msra.mxu0 %v1455
        %2021 = vmatmul.bf16.gmra.mxu0 %v329
        %v2022 = vpop.f32.mrf.mxu0
        %v2023 = vadd.f32 %v2010, %v2022
        %v2024 = vpop.f32.mrf.mxu0
        %2025 = vdwg.mxu0
        %2026 = vmatpush.bf16.msra.mxu0 %v1515
        %2027 = vmatpush.bf16.msra.mxu0 %v1511
        %2028 = vmatpush.bf16.msra.mxu0 %v1507
        %2029 = vmatpush.bf16.msra.mxu0 %v1503
        %2030 = vmatpush.bf16.msra.mxu0 %v1499
        %2031 = vmatpush.bf16.msra.mxu0 %v1495
        %2032 = vmatpush.bf16.msra.mxu0 %v1491
        %2033 = vmatpush.bf16.msra.mxu0 %v1487
        %2034 = vmatmul.bf16.gmra.mxu0 %v330
        %v2035 = vpop.f32.mrf.mxu0
        %v2036 = vadd.f32 %v2023, %v2035
        %v2037 = vpop.f32.mrf.mxu0
        %2038 = vdwg.mxu0
        %2039 = vmatpush.bf16.msra.mxu0 %v1547
        %2040 = vmatpush.bf16.msra.mxu0 %v1543
        %2041 = vmatpush.bf16.msra.mxu0 %v1539
        %2042 = vmatpush.bf16.msra.mxu0 %v1535
        %2043 = vmatpush.bf16.msra.mxu0 %v1531
        %2044 = vmatpush.bf16.msra.mxu0 %v1527
        %2045 = vmatpush.bf16.msra.mxu0 %v1523
        %2046 = vmatpush.bf16.msra.mxu0 %v1519
        %2047 = vmatmul.bf16.gmra.mxu0 %v331
        %v2048 = vpop.f32.mrf.mxu0
        %v2049 = vadd.f32 %v2036, %v2048
        %v2050 = vpop.f32.mrf.mxu0
        %2051 = vdwg.mxu0
        %2052 = vmatpush.bf16.msra.mxu0 %v1579
        %2053 = vmatpush.bf16.msra.mxu0 %v1575
        %2054 = vmatpush.bf16.msra.mxu0 %v1571
        %2055 = vmatpush.bf16.msra.mxu0 %v1567
        %2056 = vmatpush.bf16.msra.mxu0 %v1563
        %2057 = vmatpush.bf16.msra.mxu0 %v1559
        %2058 = vmatpush.bf16.msra.mxu0 %v1555
        %2059 = vmatpush.bf16.msra.mxu0 %v1551
        %2060 = vmatmul.bf16.gmra.mxu0 %v332
        %v2061 = vpop.f32.mrf.mxu0
        %v2062 = vadd.f32 %v2049, %v2061
        %v2063 = vpop.f32.mrf.mxu0
        %2064 = vdwg.mxu0
        %2065 = vmatpush.bf16.msra.mxu0 %v1611
        %2066 = vmatpush.bf16.msra.mxu0 %v1607
        %2067 = vmatpush.bf16.msra.mxu0 %v1603
        %2068 = vmatpush.bf16.msra.mxu0 %v1599
        %2069 = vmatpush.bf16.msra.mxu0 %v1595
        %2070 = vmatpush.bf16.msra.mxu0 %v1591
        %2071 = vmatpush.bf16.msra.mxu0 %v1587
        %2072 = vmatpush.bf16.msra.mxu0 %v1583
        %2073 = vmatmul.bf16.gmra.mxu0 %v333
        %v2074 = vpop.f32.mrf.mxu0
        %v2075 = vadd.f32 %v2062, %v2074
        %v2076 = vpop.f32.mrf.mxu0
        %2077 = vdwg.mxu0
        %2078 = vmatpush.bf16.msra.mxu0 %v1388
        %2079 = vmatpush.bf16.msra.mxu0 %v1384
        %2080 = vmatpush.bf16.msra.mxu0 %v1380
        %2081 = vmatpush.bf16.msra.mxu0 %v1376
        %2082 = vmatpush.bf16.msra.mxu0 %v1372
        %2083 = vmatpush.bf16.msra.mxu0 %v1368
        %2084 = vmatpush.bf16.msra.mxu0 %v1364
        %2085 = vmatpush.bf16.msra.mxu0 %v1360
        %2086 = vmatmul.bf16.gmra.mxu0 %v326
        %v2087 = vpop.f32.mrf.mxu0
        %v2088 = vadd.f32 0.0, %v2087
        %v2089 = vpop.f32.mrf.mxu0
        %2090 = vdwg.mxu0
        %2091 = vmatpush.bf16.msra.mxu0 %v1420
        %2092 = vmatpush.bf16.msra.mxu0 %v1416
        %2093 = vmatpush.bf16.msra.mxu0 %v1412
        %2094 = vmatpush.bf16.msra.mxu0 %v1408
        %2095 = vmatpush.bf16.msra.mxu0 %v1404
        %2096 = vmatpush.bf16.msra.mxu0 %v1400
        %2097 = vmatpush.bf16.msra.mxu0 %v1396
        %2098 = vmatpush.bf16.msra.mxu0 %v1392
        %2099 = vmatmul.bf16.gmra.mxu0 %v327
        %v2100 = vpop.f32.mrf.mxu0
        %v2101 = vadd.f32 %v2088, %v2100
        %v2102 = vpop.f32.mrf.mxu0
        %2103 = vdwg.mxu0
        %2104 = vmatpush.bf16.msra.mxu0 %v1452
        %2105 = vmatpush.bf16.msra.mxu0 %v1448
        %2106 = vmatpush.bf16.msra.mxu0 %v1444
        %2107 = vmatpush.bf16.msra.mxu0 %v1440
        %2108 = vmatpush.bf16.msra.mxu0 %v1436
        %2109 = vmatpush.bf16.msra.mxu0 %v1432
        %2110 = vmatpush.bf16.msra.mxu0 %v1428
        %2111 = vmatpush.bf16.msra.mxu0 %v1424
        %2112 = vmatmul.bf16.gmra.mxu0 %v328
        %v2113 = vpop.f32.mrf.mxu0
        %v2114 = vadd.f32 %v2101, %v2113
        %v2115 = vpop.f32.mrf.mxu0
        %2116 = vdwg.mxu0
        %2117 = vmatpush.bf16.msra.mxu0 %v1484
        %2118 = vmatpush.bf16.msra.mxu0 %v1480
        %2119 = vmatpush.bf16.msra.mxu0 %v1476
        %2120 = vmatpush.bf16.msra.mxu0 %v1472
        %2121 = vmatpush.bf16.msra.mxu0 %v1468
        %2122 = vmatpush.bf16.msra.mxu0 %v1464
        %2123 = vmatpush.bf16.msra.mxu0 %v1460
        %2124 = vmatpush.bf16.msra.mxu0 %v1456
        %2125 = vmatmul.bf16.gmra.mxu0 %v329
        %v2126 = vpop.f32.mrf.mxu0
        %v2127 = vadd.f32 %v2114, %v2126
        %v2128 = vpop.f32.mrf.mxu0
        %2129 = vdwg.mxu0
        %2130 = vmatpush.bf16.msra.mxu0 %v1516
        %2131 = vmatpush.bf16.msra.mxu0 %v1512
        %2132 = vmatpush.bf16.msra.mxu0 %v1508
        %2133 = vmatpush.bf16.msra.mxu0 %v1504
        %2134 = vmatpush.bf16.msra.mxu0 %v1500
        %2135 = vmatpush.bf16.msra.mxu0 %v1496
        %2136 = vmatpush.bf16.msra.mxu0 %v1492
        %2137 = vmatpush.bf16.msra.mxu0 %v1488
        %2138 = vmatmul.bf16.gmra.mxu0 %v330
        %v2139 = vpop.f32.mrf.mxu0
        %v2140 = vadd.f32 %v2127, %v2139
        %v2141 = vpop.f32.mrf.mxu0
        %2142 = vdwg.mxu0
        %2143 = vmatpush.bf16.msra.mxu0 %v1548
        %2144 = vmatpush.bf16.msra.mxu0 %v1544
        %2145 = vmatpush.bf16.msra.mxu0 %v1540
        %2146 = vmatpush.bf16.msra.mxu0 %v1536
        %2147 = vmatpush.bf16.msra.mxu0 %v1532
        %2148 = vmatpush.bf16.msra.mxu0 %v1528
        %2149 = vmatpush.bf16.msra.mxu0 %v1524
        %2150 = vmatpush.bf16.msra.mxu0 %v1520
        %2151 = vmatmul.bf16.gmra.mxu0 %v331
        %v2152 = vpop.f32.mrf.mxu0
        %v2153 = vadd.f32 %v2140, %v2152
        %v2154 = vpop.f32.mrf.mxu0
        %2155 = vdwg.mxu0
        %2156 = vmatpush.bf16.msra.mxu0 %v1580
        %2157 = vmatpush.bf16.msra.mxu0 %v1576
        %2158 = vmatpush.bf16.msra.mxu0 %v1572
        %2159 = vmatpush.bf16.msra.mxu0 %v1568
        %2160 = vmatpush.bf16.msra.mxu0 %v1564
        %2161 = vmatpush.bf16.msra.mxu0 %v1560
        %2162 = vmatpush.bf16.msra.mxu0 %v1556
        %2163 = vmatpush.bf16.msra.mxu0 %v1552
        %2164 = vmatmul.bf16.gmra.mxu0 %v332
        %v2165 = vpop.f32.mrf.mxu0
        %v2166 = vadd.f32 %v2153, %v2165
        %v2167 = vpop.f32.mrf.mxu0
        %2168 = vdwg.mxu0
        %2169 = vmatpush.bf16.msra.mxu0 %v1612
        %2170 = vmatpush.bf16.msra.mxu0 %v1608
        %2171 = vmatpush.bf16.msra.mxu0 %v1604
        %2172 = vmatpush.bf16.msra.mxu0 %v1600
        %2173 = vmatpush.bf16.msra.mxu0 %v1596
        %2174 = vmatpush.bf16.msra.mxu0 %v1592
        %2175 = vmatpush.bf16.msra.mxu0 %v1588
        %2176 = vmatpush.bf16.msra.mxu0 %v1584
        %2177 = vmatmul.bf16.gmra.mxu0 %v333
        %v2178 = vpop.f32.mrf.mxu0
        %v2179 = vadd.f32 %v2166, %v2178
        %v2180 = vpop.f32.mrf.mxu0
        %2181 = vdwg.mxu0
        %2182 = vmatpush.bf16.msra.mxu0 %v1389
        %2183 = vmatpush.bf16.msra.mxu0 %v1385
        %2184 = vmatpush.bf16.msra.mxu0 %v1381
        %2185 = vmatpush.bf16.msra.mxu0 %v1377
        %2186 = vmatpush.bf16.msra.mxu0 %v1373
        %2187 = vmatpush.bf16.msra.mxu0 %v1369
        %2188 = vmatpush.bf16.msra.mxu0 %v1365
        %2189 = vmatpush.bf16.msra.mxu0 %v1361
        %2190 = vmatmul.bf16.gmra.mxu0 %v326
        %v2191 = vpop.f32.mrf.mxu0
        %v2192 = vadd.f32 0.0, %v2191
        %v2193 = vpop.f32.mrf.mxu0
        %2194 = vdwg.mxu0
        %2195 = vmatpush.bf16.msra.mxu0 %v1421
        %2196 = vmatpush.bf16.msra.mxu0 %v1417
        %2197 = vmatpush.bf16.msra.mxu0 %v1413
        %2198 = vmatpush.bf16.msra.mxu0 %v1409
        %2199 = vmatpush.bf16.msra.mxu0 %v1405
        %2200 = vmatpush.bf16.msra.mxu0 %v1401
        %2201 = vmatpush.bf16.msra.mxu0 %v1397
        %2202 = vmatpush.bf16.msra.mxu0 %v1393
        %2203 = vmatmul.bf16.gmra.mxu0 %v327
        %v2204 = vpop.f32.mrf.mxu0
        %v2205 = vadd.f32 %v2192, %v2204
        %v2206 = vpop.f32.mrf.mxu0
        %2207 = vdwg.mxu0
        %2208 = vmatpush.bf16.msra.mxu0 %v1453
        %2209 = vmatpush.bf16.msra.mxu0 %v1449
        %2210 = vmatpush.bf16.msra.mxu0 %v1445
        %2211 = vmatpush.bf16.msra.mxu0 %v1441
        %2212 = vmatpush.bf16.msra.mxu0 %v1437
        %2213 = vmatpush.bf16.msra.mxu0 %v1433
        %2214 = vmatpush.bf16.msra.mxu0 %v1429
        %2215 = vmatpush.bf16.msra.mxu0 %v1425
        %2216 = vmatmul.bf16.gmra.mxu0 %v328
        %v2217 = vpop.f32.mrf.mxu0
        %v2218 = vadd.f32 %v2205, %v2217
        %v2219 = vpop.f32.mrf.mxu0
        %2220 = vdwg.mxu0
        %2221 = vmatpush.bf16.msra.mxu0 %v1485
        %2222 = vmatpush.bf16.msra.mxu0 %v1481
        %2223 = vmatpush.bf16.msra.mxu0 %v1477
        %2224 = vmatpush.bf16.msra.mxu0 %v1473
        %2225 = vmatpush.bf16.msra.mxu0 %v1469
        %2226 = vmatpush.bf16.msra.mxu0 %v1465
        %2227 = vmatpush.bf16.msra.mxu0 %v1461
        %2228 = vmatpush.bf16.msra.mxu0 %v1457
        %2229 = vmatmul.bf16.gmra.mxu0 %v329
        %v2230 = vpop.f32.mrf.mxu0
        %v2231 = vadd.f32 %v2218, %v2230
        %v2232 = vpop.f32.mrf.mxu0
        %2233 = vdwg.mxu0
        %2234 = vmatpush.bf16.msra.mxu0 %v1517
        %2235 = vmatpush.bf16.msra.mxu0 %v1513
        %2236 = vmatpush.bf16.msra.mxu0 %v1509
        %2237 = vmatpush.bf16.msra.mxu0 %v1505
        %2238 = vmatpush.bf16.msra.mxu0 %v1501
        %2239 = vmatpush.bf16.msra.mxu0 %v1497
        %2240 = vmatpush.bf16.msra.mxu0 %v1493
        %2241 = vmatpush.bf16.msra.mxu0 %v1489
        %2242 = vmatmul.bf16.gmra.mxu0 %v330
        %v2243 = vpop.f32.mrf.mxu0
        %v2244 = vadd.f32 %v2231, %v2243
        %v2245 = vpop.f32.mrf.mxu0
        %2246 = vdwg.mxu0
        %2247 = vmatpush.bf16.msra.mxu0 %v1549
        %2248 = vmatpush.bf16.msra.mxu0 %v1545
        %2249 = vmatpush.bf16.msra.mxu0 %v1541
        %2250 = vmatpush.bf16.msra.mxu0 %v1537
        %2251 = vmatpush.bf16.msra.mxu0 %v1533
        %2252 = vmatpush.bf16.msra.mxu0 %v1529
        %2253 = vmatpush.bf16.msra.mxu0 %v1525
        %2254 = vmatpush.bf16.msra.mxu0 %v1521
        %2255 = vmatmul.bf16.gmra.mxu0 %v331
        %v2256 = vpop.f32.mrf.mxu0
        %v2257 = vadd.f32 %v2244, %v2256
        %v2258 = vpop.f32.mrf.mxu0
        %2259 = vdwg.mxu0
        %2260 = vmatpush.bf16.msra.mxu0 %v1581
        %2261 = vmatpush.bf16.msra.mxu0 %v1577
        %2262 = vmatpush.bf16.msra.mxu0 %v1573
        %2263 = vmatpush.bf16.msra.mxu0 %v1569
        %2264 = vmatpush.bf16.msra.mxu0 %v1565
        %2265 = vmatpush.bf16.msra.mxu0 %v1561
        %2266 = vmatpush.bf16.msra.mxu0 %v1557
        %2267 = vmatpush.bf16.msra.mxu0 %v1553
        %2268 = vmatmul.bf16.gmra.mxu0 %v332
        %v2269 = vpop.f32.mrf.mxu0
        %v2270 = vadd.f32 %v2257, %v2269
        %v2271 = vpop.f32.mrf.mxu0
        %2272 = vdwg.mxu0
        %2273 = vmatpush.bf16.msra.mxu0 %v1613
        %2274 = vmatpush.bf16.msra.mxu0 %v1609
        %2275 = vmatpush.bf16.msra.mxu0 %v1605
        %2276 = vmatpush.bf16.msra.mxu0 %v1601
        %2277 = vmatpush.bf16.msra.mxu0 %v1597
        %2278 = vmatpush.bf16.msra.mxu0 %v1593
        %2279 = vmatpush.bf16.msra.mxu0 %v1589
        %2280 = vmatpush.bf16.msra.mxu0 %v1585
        %2281 = vmatmul.bf16.gmra.mxu0 %v333
        %v2282 = vpop.f32.mrf.mxu0
        %v2283 = vadd.f32 %v2270, %v2282
        %v2284 = vpop.f32.mrf.mxu0
        %2285 = vdwg.mxu0
        %v2286 = vadd.f32 %v314, %v1971
        %v2287 = vadd.f32 %v315, %v2075
        %v2288 = vadd.f32 %v316, %v2179
        %v2289 = vadd.f32 %v317, %v2283
        %2290 = vst [vmem:[#allocation2] sm:$0xff] %v2286
        %2291 = vst [vmem:[#allocation2 + $0x8] sm:$0xff] %v2287
        %2292 = vst [vmem:[#allocation2 + $0x10] sm:$0xff] %v2288
        %2293 = vst [vmem:[#allocation2 + $0x18] sm:$0xff] %v2289
        %p2294 = scmp.eq.s32.totalorder %s27, 3
        // Predicated region
        $region45: #{camera_param_regressor_forward.5} parent=31 // pred_check
          %p2295 = pneg %p2294
        $region46: #{camera_param_regressor_forward.5} parent=31 // pred_check_branch
          %2297 = sbr.rel (%p2295) target = $region48
        $region47: #{camera_param_regressor_forward.5} parent=31 // pred_region
          %v2298 = vld [vmem:[#allocation2] sm:$0xff]
          %v2299 = vld [vmem:[#allocation2 + $0x8] sm:$0xff]
          %v2300 = vld [vmem:[#allocation2 + $0x10] sm:$0xff]
          %v2301 = vld [vmem:[#allocation2 + $0x18] sm:$0xff]
          %v2302 = vld [vmem:[%s241] sm:$0xf]
          %v2304 = vperm.slane %v2302, 0
          %v2305 = vperm.slane %v2302, 1
          %v2306 = vperm.slane %v2302, 2
          %v2307 = vperm.slane %v2302, 3
          %v2312 = vadd.f32 %v2298, %v2304
          %v2313 = vadd.f32 %v2299, %v2305
          %v2314 = vadd.f32 %v2300, %v2306
          %v2315 = vadd.f32 %v2301, %v2307
          %v2316 = vmax.f32 %v2312, 0.0
          %v2317 = vmax.f32 %v2313, 0.0
          %v2318 = vmax.f32 %v2314, 0.0
          %v2319 = vmax.f32 %v2315, 0.0
          %2320 = vst [vmem:[%s304] sm:$0xff] %v2316
          %2321 = vst [vmem:[%s304 + $0x8] sm:$0xff] %v2317
          %2322 = vst [vmem:[%s304 + $0x10] sm:$0xff] %v2318
          %2323 = vst [vmem:[%s304 + $0x18] sm:$0xff] %v2319
        $region48: #{camera_param_regressor_forward.5} parent=31 // pred_fallthru
          _
        %s2324 = smul.u32 4, %s26
        %p2325 = scmp.lt.s32.totalorder %s25, 0
        %s2326 = scalar_select %p2325, %s25, 0
        %p2327 = scmp.lt.s32.totalorder %s2324, 7
        %s2328 = scalar_select %p2327, %s2324, 7
        %s2329 = smul.addr %s2326, 8
        %s2330 = sadd.s32 %s2328, %s2329
        %s2331 = smul.addr %s2330, 8
        %s2332 = scalar_lea.vmem %s3, %s2331
        // Predicated region
        $region49: #{camera_param_regressor_forward.5} parent=31 // pred_check
          %p2333 = pneg %p141
        $region50: #{camera_param_regressor_forward.5} parent=31 // pred_check_branch
          %2335 = sbr.rel (%p2333) target = $region52
        $region51: #{camera_param_regressor_forward.5} parent=31 // pred_region
          %s2336 = smul.u32 4, %s26
        $region52: #{camera_param_regressor_forward.5} parent=31 // pred_fallthru
          _
      $region32: #{camera_param_regressor_forward.5} parent=5 // pred_fallthru
        _
      %p2337 = scmp.le.s32.totalorder 2, %s15
      // Predicated region
      $region53: #{camera_param_regressor_forward.5} parent=5 // pred_check
        %p2338 = pneg %p2337
      $region54: #{camera_param_regressor_forward.5} parent=5 // pred_check_branch
        %2340 = sbr.rel (%p2338) target = $region56
      $region55: #{camera_param_regressor_forward.5} parent=5 // pred_region
        %s2341 = ssub.s32 %s15, 2
        // Predicated region
        $region57: #{camera_param_regressor_forward.5} parent=55 // pred_check
          %p2342 = pneg %p147
        $region58: #{camera_param_regressor_forward.5} parent=55 // pred_check_branch
          %2344 = sbr.rel (%p2342) target = $region60
        $region59: #{camera_param_regressor_forward.5} parent=55 // pred_region
          %s2345 = smul.u32 4, %s29
          %p2346 = scmp.lt.s32.totalorder %s28, 0
          %s2347 = scalar_select %p2346, %s28, 0
          %p2348 = scmp.lt.s32.totalorder %s2345, 7
          %s2349 = scalar_select %p2348, %s2345, 7
          %s2350 = smul.addr %s2347, 8
          %s2351 = sadd.s32 %s2349, %s2350
          %s2352 = smul.addr %s2351, 8
          %s2353 = scalar_lea.vmem %s3, %s2352
        $region60: #{camera_param_regressor_forward.5} parent=55 // pred_fallthru
          _
      $region56: #{camera_param_regressor_forward.5} parent=5 // pred_fallthru
        _
    $region6: #{camera_param_regressor_forward.5} parent=1 // loop_footer
      %s19 = sadd.s32 1, %s15
    $region7: #{camera_param_regressor_forward.5} parent=1 // loop_footer_branch
      %14 = sbr.rel target = $region3
    $region8: #{camera_param_regressor_forward.5} parent=1 // loop_exit
      _
    %2354 = vsyncpa [#allocation4], 1
    %s2355 = scalar_lea.sflag [#allocation4], 1
    %2356 = vsyncpa %s2355, 1
    %2357 = vsyncpa [#allocation6], 1
    %s2358 = scalar_lea.sflag [#allocation6], 1
    %2359 = vsyncpa %s2358, 1

// kernel: camera_param_regressor_forward.6
$region0: #{camera_param_regressor_forward.6}
  #allocation0 [shape = 'u32[]', space=smem, size = 0x4, offset = 0x4, fixed_abs, tag = 'smem constant byte address 0x4 - core index']
  #allocation1 [shape = 'u32[72,128]{1,0:T(1,128)}', space=vmem, size = 0x9000, scoped, tag = 'internal scratch']
  #allocation2 [shape = 'f32[8,128]{1,0:T(8,128)}', space=vmem, size = 0x1000, scoped, tag = 'scratch operand']
  %s0 = inlined_call_operand.vmem [shape: f32[8,1024], index: 0, kind: input, shape index: {}]
  %s1 = inlined_call_operand.hbm [shape: bf16[1024,128], index: 1, kind: input, shape index: {}]
  %s2 = inlined_call_operand.hbm [shape: f32[1,128], index: 2, kind: input, shape index: {}]
  %s3 = inlined_call_operand.vmem [shape: f32[8,128], index: 3, kind: output, shape index: {}]
  %s4 = sld [smem:[#allocation0]]
  $region38: #{camera_param_regressor_forward.6} parent=0
    _
  %s6 = ssub.s32 1, %s4
  %s7 = scalar_select 0, %s6, %s4
  $region1: #{camera_param_regressor_forward.6} parent=0
    #allocation3 [shape = 'u8[262144]{0}', space=vmem, size = 0x40000, scoped, tag = 'input window, operand 1, single buffered']
    #allocation4 [shape = 's32[1]{0}', space=sflag, size = 0x4, scoped, tag = 'scoped memory for camera_param_regressor_forward.6']
    #allocation5 [shape = 'u8[512]{0}', space=vmem, size = 0x400, scoped, tag = 'input window, operand 2, single buffered']
    #allocation6 [shape = 's32[1]{0}', space=sflag, size = 0x4, scoped, tag = 'scoped memory for camera_param_regressor_forward.6']
    %8 = vsyncpa [#allocation4], 0
    %9 = vsyncpa [#allocation6], 0
    // Predicated region
    $region2: #{camera_param_regressor_forward.6} parent=1 // pred_check
      _
    $region3: #{camera_param_regressor_forward.6} parent=1 // pred_check_branch
      %11 = sbr.rel (0) target = $region5
    $region4: #{camera_param_regressor_forward.6} parent=1 // pred_region
      _
    $region5: #{camera_param_regressor_forward.6} parent=1 // pred_fallthru
      _
    // Predicated region
    $region6: #{camera_param_regressor_forward.6} parent=1 // pred_check
      _
    $region7: #{camera_param_regressor_forward.6} parent=1 // pred_check_branch
      %13 = sbr.rel (0) target = $region9
    $region8: #{camera_param_regressor_forward.6} parent=1 // pred_region
      %15 = vsyncadd [#allocation4], 0
      %s16 = sshll.u32 %s1, 4
      %s17 = int_to_ptr.hbm [resolvable:$true] %s16
      %s18 = sshll.u32 [#allocation3], 4
      %s19 = int_to_ptr.vmem [resolvable:$true] %s18
      %24 = dma.hbm_to_vmem [thread:$0]  %s17, 8192, %s19, [#allocation4], 64, 64, 4
    $region9: #{camera_param_regressor_forward.6} parent=1 // pred_fallthru
      _
    // Predicated region
    $region10: #{camera_param_regressor_forward.6} parent=1 // pred_check
      _
    $region11: #{camera_param_regressor_forward.6} parent=1 // pred_check_branch
      %26 = sbr.rel (0) target = $region13
    $region12: #{camera_param_regressor_forward.6} parent=1 // pred_region
      %28 = vsyncadd [#allocation6], 0
      %s30 = sshll.u32 %s2, 4
      %s31 = int_to_ptr.hbm [resolvable:$true] %s30
      %s32 = sshll.u32 [#allocation5], 4
      %s33 = int_to_ptr.vmem [resolvable:$true] %s32
      %35 = dma.hbm_to_vmem [thread:$0]  %s31, 16, %s33, [#allocation6]
    $region13: #{camera_param_regressor_forward.6} parent=1 // pred_fallthru
      _
    // Predicated region
    $region14: #{camera_param_regressor_forward.6} parent=1 // pred_check
      _
    $region15: #{camera_param_regressor_forward.6} parent=1 // pred_check_branch
      %37 = sbr.rel (0) target = $region17
    $region16: #{camera_param_regressor_forward.6} parent=1 // pred_region
      %39 = dma.done [#allocation4], 8192
    $region17: #{camera_param_regressor_forward.6} parent=1 // pred_fallthru
      _
    // Predicated region
    $region18: #{camera_param_regressor_forward.6} parent=1 // pred_check
      _
    $region19: #{camera_param_regressor_forward.6} parent=1 // pred_check_branch
      %41 = sbr.rel (0) target = $region21
    $region20: #{camera_param_regressor_forward.6} parent=1 // pred_region
      %43 = dma.done [#allocation6], 16
    $region21: #{camera_param_regressor_forward.6} parent=1 // pred_fallthru
      _
    %p44 = scmp.eq.s32.totalorder 0, 0
    // Predicated region
    $region22: #{camera_param_regressor_forward.6} parent=1 // pred_check
      %p45 = pneg %p44
    $region23: #{camera_param_regressor_forward.6} parent=1 // pred_check_branch
      %47 = sbr.rel (%p45) target = $region25
    $region24: #{camera_param_regressor_forward.6} parent=1 // pred_region
      %48 = vst [vmem:[#allocation2] sm:$0xff] 0.0
    $region25: #{camera_param_regressor_forward.6} parent=1 // pred_fallthru
      _
    %v49 = vld [vmem:[#allocation2] sm:$0xff]
    %v50 = vld [vmem:[%s0] sm:$0xff]
    %v51 = vld [vmem:[%s0 + $0x8] sm:$0xff]
    %v52 = vld [vmem:[%s0 + $0x10] sm:$0xff]
    %v53 = vld [vmem:[%s0 + $0x18] sm:$0xff]
    %v54 = vld [vmem:[%s0 + $0x20] sm:$0xff]
    %v55 = vld [vmem:[%s0 + $0x28] sm:$0xff]
    %v56 = vld [vmem:[%s0 + $0x30] sm:$0xff]
    %v57 = vld [vmem:[%s0 + $0x38] sm:$0xff]
    %v58 = vpack.c.bf16 %v50, %v50
    %v59 = vpack.c.bf16 %v51, %v51
    %v60 = vpack.c.bf16 %v52, %v52
    %v61 = vpack.c.bf16 %v53, %v53
    %v62 = vpack.c.bf16 %v54, %v54
    %v63 = vpack.c.bf16 %v55, %v55
    %v64 = vpack.c.bf16 %v56, %v56
    %v65 = vpack.c.bf16 %v57, %v57
    %v66 = vld [vmem:[#allocation3] sm:$0xf]
    %v67 = vld [vmem:[#allocation3 + $0x4] sm:$0xf]
    %v68 = vld [vmem:[#allocation3 + $0x8] sm:$0xf]
    %v69 = vld [vmem:[#allocation3 + $0xc] sm:$0xf]
    %v70 = vld [vmem:[#allocation3 + $0x10] sm:$0xf]
    %v71 = vld [vmem:[#allocation3 + $0x14] sm:$0xf]
    %v72 = vld [vmem:[#allocation3 + $0x18] sm:$0xf]
    %v73 = vld [vmem:[#allocation3 + $0x1c] sm:$0xf]
    %v74 = vld [vmem:[#allocation3 + $0x20] sm:$0xf]
    %v75 = vld [vmem:[#allocation3 + $0x24] sm:$0xf]
    %v76 = vld [vmem:[#allocation3 + $0x28] sm:$0xf]
    %v77 = vld [vmem:[#allocation3 + $0x2c] sm:$0xf]
    %v78 = vld [vmem:[#allocation3 + $0x30] sm:$0xf]
    %v79 = vld [vmem:[#allocation3 + $0x34] sm:$0xf]
    %v80 = vld [vmem:[#allocation3 + $0x38] sm:$0xf]
    %v81 = vld [vmem:[#allocation3 + $0x3c] sm:$0xf]
    %v82 = vld [vmem:[#allocation3 + $0x40] sm:$0xf]
    %v83 = vld [vmem:[#allocation3 + $0x44] sm:$0xf]
    %v84 = vld [vmem:[#allocation3 + $0x48] sm:$0xf]
    %v85 = vld [vmem:[#allocation3 + $0x4c] sm:$0xf]
    %v86 = vld [vmem:[#allocation3 + $0x50] sm:$0xf]
    %v87 = vld [vmem:[#allocation3 + $0x54] sm:$0xf]
    %v88 = vld [vmem:[#allocation3 + $0x58] sm:$0xf]
    %v89 = vld [vmem:[#allocation3 + $0x5c] sm:$0xf]
    %v90 = vld [vmem:[#allocation3 + $0x60] sm:$0xf]
    %v91 = vld [vmem:[#allocation3 + $0x64] sm:$0xf]
    %v92 = vld [vmem:[#allocation3 + $0x68] sm:$0xf]
    %v93 = vld [vmem:[#allocation3 + $0x6c] sm:$0xf]
    %v94 = vld [vmem:[#allocation3 + $0x70] sm:$0xf]
    %v95 = vld [vmem:[#allocation3 + $0x74] sm:$0xf]
    %v96 = vld [vmem:[#allocation3 + $0x78] sm:$0xf]
    %v97 = vld [vmem:[#allocation3 + $0x7c] sm:$0xf]
    %v98 = vld [vmem:[#allocation3 + $0x80] sm:$0xf]
    %v99 = vld [vmem:[#allocation3 + $0x84] sm:$0xf]
    %v100 = vld [vmem:[#allocation3 + $0x88] sm:$0xf]
    %v101 = vld [vmem:[#allocation3 + $0x8c] sm:$0xf]
    %v102 = vld [vmem:[#allocation3 + $0x90] sm:$0xf]
    %v103 = vld [vmem:[#allocation3 + $0x94] sm:$0xf]
    %v104 = vld [vmem:[#allocation3 + $0x98] sm:$0xf]
    %v105 = vld [vmem:[#allocation3 + $0x9c] sm:$0xf]
    %v106 = vld [vmem:[#allocation3 + $0xa0] sm:$0xf]
    %v107 = vld [vmem:[#allocation3 + $0xa4] sm:$0xf]
    %v108 = vld [vmem:[#allocation3 + $0xa8] sm:$0xf]
    %v109 = vld [vmem:[#allocation3 + $0xac] sm:$0xf]
    %v110 = vld [vmem:[#allocation3 + $0xb0] sm:$0xf]
    %v111 = vld [vmem:[#allocation3 + $0xb4] sm:$0xf]
    %v112 = vld [vmem:[#allocation3 + $0xb8] sm:$0xf]
    %v113 = vld [vmem:[#allocation3 + $0xbc] sm:$0xf]
    %v114 = vld [vmem:[#allocation3 + $0xc0] sm:$0xf]
    %v115 = vld [vmem:[#allocation3 + $0xc4] sm:$0xf]
    %v116 = vld [vmem:[#allocation3 + $0xc8] sm:$0xf]
    %v117 = vld [vmem:[#allocation3 + $0xcc] sm:$0xf]
    %v118 = vld [vmem:[#allocation3 + $0xd0] sm:$0xf]
    %v119 = vld [vmem:[#allocation3 + $0xd4] sm:$0xf]
    %v120 = vld [vmem:[#allocation3 + $0xd8] sm:$0xf]
    %v121 = vld [vmem:[#allocation3 + $0xdc] sm:$0xf]
    %v122 = vld [vmem:[#allocation3 + $0xe0] sm:$0xf]
    %v123 = vld [vmem:[#allocation3 + $0xe4] sm:$0xf]
    %v124 = vld [vmem:[#allocation3 + $0xe8] sm:$0xf]
    %v125 = vld [vmem:[#allocation3 + $0xec] sm:$0xf]
    %v126 = vld [vmem:[#allocation3 + $0xf0] sm:$0xf]
    %v127 = vld [vmem:[#allocation3 + $0xf4] sm:$0xf]
    %v128 = vld [vmem:[#allocation3 + $0xf8] sm:$0xf]
    %v129 = vld [vmem:[#allocation3 + $0xfc] sm:$0xf]
    %v130 = vld [vmem:[#allocation3 + $0x100] sm:$0xf]
    %v131 = vld [vmem:[#allocation3 + $0x104] sm:$0xf]
    %v132 = vld [vmem:[#allocation3 + $0x108] sm:$0xf]
    %v133 = vld [vmem:[#allocation3 + $0x10c] sm:$0xf]
    %v134 = vld [vmem:[#allocation3 + $0x110] sm:$0xf]
    %v135 = vld [vmem:[#allocation3 + $0x114] sm:$0xf]
    %v136 = vld [vmem:[#allocation3 + $0x118] sm:$0xf]
    %v137 = vld [vmem:[#allocation3 + $0x11c] sm:$0xf]
    %v138 = vld [vmem:[#allocation3 + $0x120] sm:$0xf]
    %v139 = vld [vmem:[#allocation3 + $0x124] sm:$0xf]
    %v140 = vld [vmem:[#allocation3 + $0x128] sm:$0xf]
    %v141 = vld [vmem:[#allocation3 + $0x12c] sm:$0xf]
    %v142 = vld [vmem:[#allocation3 + $0x130] sm:$0xf]
    %v143 = vld [vmem:[#allocation3 + $0x134] sm:$0xf]
    %v144 = vld [vmem:[#allocation3 + $0x138] sm:$0xf]
    %v145 = vld [vmem:[#allocation3 + $0x13c] sm:$0xf]
    %v146 = vld [vmem:[#allocation3 + $0x140] sm:$0xf]
    %v147 = vld [vmem:[#allocation3 + $0x144] sm:$0xf]
    %v148 = vld [vmem:[#allocation3 + $0x148] sm:$0xf]
    %v149 = vld [vmem:[#allocation3 + $0x14c] sm:$0xf]
    %v150 = vld [vmem:[#allocation3 + $0x150] sm:$0xf]
    %v151 = vld [vmem:[#allocation3 + $0x154] sm:$0xf]
    %v152 = vld [vmem:[#allocation3 + $0x158] sm:$0xf]
    %v153 = vld [vmem:[#allocation3 + $0x15c] sm:$0xf]
    %v154 = vld [vmem:[#allocation3 + $0x160] sm:$0xf]
    %v155 = vld [vmem:[#allocation3 + $0x164] sm:$0xf]
    %v156 = vld [vmem:[#allocation3 + $0x168] sm:$0xf]
    %v157 = vld [vmem:[#allocation3 + $0x16c] sm:$0xf]
    %v158 = vld [vmem:[#allocation3 + $0x170] sm:$0xf]
    %v159 = vld [vmem:[#allocation3 + $0x174] sm:$0xf]
    %v160 = vld [vmem:[#allocation3 + $0x178] sm:$0xf]
    %v161 = vld [vmem:[#allocation3 + $0x17c] sm:$0xf]
    %v162 = vld [vmem:[#allocation3 + $0x180] sm:$0xf]
    %v163 = vld [vmem:[#allocation3 + $0x184] sm:$0xf]
    %v164 = vld [vmem:[#allocation3 + $0x188] sm:$0xf]
    %v165 = vld [vmem:[#allocation3 + $0x18c] sm:$0xf]
    %v166 = vld [vmem:[#allocation3 + $0x190] sm:$0xf]
    %v167 = vld [vmem:[#allocation3 + $0x194] sm:$0xf]
    %v168 = vld [vmem:[#allocation3 + $0x198] sm:$0xf]
    %v169 = vld [vmem:[#allocation3 + $0x19c] sm:$0xf]
    %v170 = vld [vmem:[#allocation3 + $0x1a0] sm:$0xf]
    %v171 = vld [vmem:[#allocation3 + $0x1a4] sm:$0xf]
    %v172 = vld [vmem:[#allocation3 + $0x1a8] sm:$0xf]
    %v173 = vld [vmem:[#allocation3 + $0x1ac] sm:$0xf]
    %v174 = vld [vmem:[#allocation3 + $0x1b0] sm:$0xf]
    %v175 = vld [vmem:[#allocation3 + $0x1b4] sm:$0xf]
    %v176 = vld [vmem:[#allocation3 + $0x1b8] sm:$0xf]
    %v177 = vld [vmem:[#allocation3 + $0x1bc] sm:$0xf]
    %v178 = vld [vmem:[#allocation3 + $0x1c0] sm:$0xf]
    %v179 = vld [vmem:[#allocation3 + $0x1c4] sm:$0xf]
    %v180 = vld [vmem:[#allocation3 + $0x1c8] sm:$0xf]
    %v181 = vld [vmem:[#allocation3 + $0x1cc] sm:$0xf]
    %v182 = vld [vmem:[#allocation3 + $0x1d0] sm:$0xf]
    %v183 = vld [vmem:[#allocation3 + $0x1d4] sm:$0xf]
    %v184 = vld [vmem:[#allocation3 + $0x1d8] sm:$0xf]
    %v185 = vld [vmem:[#allocation3 + $0x1dc] sm:$0xf]
    %v186 = vld [vmem:[#allocation3 + $0x1e0] sm:$0xf]
    %v187 = vld [vmem:[#allocation3 + $0x1e4] sm:$0xf]
    %v188 = vld [vmem:[#allocation3 + $0x1e8] sm:$0xf]
    %v189 = vld [vmem:[#allocation3 + $0x1ec] sm:$0xf]
    %v190 = vld [vmem:[#allocation3 + $0x1f0] sm:$0xf]
    %v191 = vld [vmem:[#allocation3 + $0x1f4] sm:$0xf]
    %v192 = vld [vmem:[#allocation3 + $0x1f8] sm:$0xf]
    %v193 = vld [vmem:[#allocation3 + $0x1fc] sm:$0xf]
    %v322 = vunpack.c.l.b16 %v66
    %v323 = vunpack.c.l.b16 %v67
    %v324 = vunpack.c.l.b16 %v68
    %v325 = vunpack.c.l.b16 %v69
    %v326 = vunpack.c.l.b16 %v70
    %v327 = vunpack.c.l.b16 %v71
    %v328 = vunpack.c.l.b16 %v72
    %v329 = vunpack.c.l.b16 %v73
    %v330 = vunpack.c.l.b16 %v74
    %v331 = vunpack.c.l.b16 %v75
    %v332 = vunpack.c.l.b16 %v76
    %v333 = vunpack.c.l.b16 %v77
    %v334 = vunpack.c.l.b16 %v78
    %v335 = vunpack.c.l.b16 %v79
    %v336 = vunpack.c.l.b16 %v80
    %v337 = vunpack.c.l.b16 %v81
    %v338 = vunpack.c.l.b16 %v82
    %v339 = vunpack.c.l.b16 %v83
    %v340 = vunpack.c.l.b16 %v84
    %v341 = vunpack.c.l.b16 %v85
    %v342 = vunpack.c.l.b16 %v86
    %v343 = vunpack.c.l.b16 %v87
    %v344 = vunpack.c.l.b16 %v88
    %v345 = vunpack.c.l.b16 %v89
    %v346 = vunpack.c.l.b16 %v90
    %v347 = vunpack.c.l.b16 %v91
    %v348 = vunpack.c.l.b16 %v92
    %v349 = vunpack.c.l.b16 %v93
    %v350 = vunpack.c.l.b16 %v94
    %v351 = vunpack.c.l.b16 %v95
    %v352 = vunpack.c.l.b16 %v96
    %v353 = vunpack.c.l.b16 %v97
    %v354 = vunpack.c.l.b16 %v98
    %v355 = vunpack.c.l.b16 %v99
    %v356 = vunpack.c.l.b16 %v100
    %v357 = vunpack.c.l.b16 %v101
    %v358 = vunpack.c.l.b16 %v102
    %v359 = vunpack.c.l.b16 %v103
    %v360 = vunpack.c.l.b16 %v104
    %v361 = vunpack.c.l.b16 %v105
    %v362 = vunpack.c.l.b16 %v106
    %v363 = vunpack.c.l.b16 %v107
    %v364 = vunpack.c.l.b16 %v108
    %v365 = vunpack.c.l.b16 %v109
    %v366 = vunpack.c.l.b16 %v110
    %v367 = vunpack.c.l.b16 %v111
    %v368 = vunpack.c.l.b16 %v112
    %v369 = vunpack.c.l.b16 %v113
    %v370 = vunpack.c.l.b16 %v114
    %v371 = vunpack.c.l.b16 %v115
    %v372 = vunpack.c.l.b16 %v116
    %v373 = vunpack.c.l.b16 %v117
    %v374 = vunpack.c.l.b16 %v118
    %v375 = vunpack.c.l.b16 %v119
    %v376 = vunpack.c.l.b16 %v120
    %v377 = vunpack.c.l.b16 %v121
    %v378 = vunpack.c.l.b16 %v122
    %v379 = vunpack.c.l.b16 %v123
    %v380 = vunpack.c.l.b16 %v124
    %v381 = vunpack.c.l.b16 %v125
    %v382 = vunpack.c.l.b16 %v126
    %v383 = vunpack.c.l.b16 %v127
    %v384 = vunpack.c.l.b16 %v128
    %v385 = vunpack.c.l.b16 %v129
    %v386 = vunpack.c.l.b16 %v130
    %v387 = vunpack.c.l.b16 %v131
    %v388 = vunpack.c.l.b16 %v132
    %v389 = vunpack.c.l.b16 %v133
    %v390 = vunpack.c.l.b16 %v134
    %v391 = vunpack.c.l.b16 %v135
    %v392 = vunpack.c.l.b16 %v136
    %v393 = vunpack.c.l.b16 %v137
    %v394 = vunpack.c.l.b16 %v138
    %v395 = vunpack.c.l.b16 %v139
    %v396 = vunpack.c.l.b16 %v140
    %v397 = vunpack.c.l.b16 %v141
    %v398 = vunpack.c.l.b16 %v142
    %v399 = vunpack.c.l.b16 %v143
    %v400 = vunpack.c.l.b16 %v144
    %v401 = vunpack.c.l.b16 %v145
    %v402 = vunpack.c.l.b16 %v146
    %v403 = vunpack.c.l.b16 %v147
    %v404 = vunpack.c.l.b16 %v148
    %v405 = vunpack.c.l.b16 %v149
    %v406 = vunpack.c.l.b16 %v150
    %v407 = vunpack.c.l.b16 %v151
    %v408 = vunpack.c.l.b16 %v152
    %v409 = vunpack.c.l.b16 %v153
    %v410 = vunpack.c.l.b16 %v154
    %v411 = vunpack.c.l.b16 %v155
    %v412 = vunpack.c.l.b16 %v156
    %v413 = vunpack.c.l.b16 %v157
    %v414 = vunpack.c.l.b16 %v158
    %v415 = vunpack.c.l.b16 %v159
    %v416 = vunpack.c.l.b16 %v160
    %v417 = vunpack.c.l.b16 %v161
    %v418 = vunpack.c.l.b16 %v162
    %v419 = vunpack.c.l.b16 %v163
    %v420 = vunpack.c.l.b16 %v164
    %v421 = vunpack.c.l.b16 %v165
    %v422 = vunpack.c.l.b16 %v166
    %v423 = vunpack.c.l.b16 %v167
    %v424 = vunpack.c.l.b16 %v168
    %v425 = vunpack.c.l.b16 %v169
    %v426 = vunpack.c.l.b16 %v170
    %v427 = vunpack.c.l.b16 %v171
    %v428 = vunpack.c.l.b16 %v172
    %v429 = vunpack.c.l.b16 %v173
    %v430 = vunpack.c.l.b16 %v174
    %v431 = vunpack.c.l.b16 %v175
    %v432 = vunpack.c.l.b16 %v176
    %v433 = vunpack.c.l.b16 %v177
    %v434 = vunpack.c.l.b16 %v178
    %v435 = vunpack.c.l.b16 %v179
    %v436 = vunpack.c.l.b16 %v180
    %v437 = vunpack.c.l.b16 %v181
    %v438 = vunpack.c.l.b16 %v182
    %v439 = vunpack.c.l.b16 %v183
    %v440 = vunpack.c.l.b16 %v184
    %v441 = vunpack.c.l.b16 %v185
    %v442 = vunpack.c.l.b16 %v186
    %v443 = vunpack.c.l.b16 %v187
    %v444 = vunpack.c.l.b16 %v188
    %v445 = vunpack.c.l.b16 %v189
    %v446 = vunpack.c.l.b16 %v190
    %v447 = vunpack.c.l.b16 %v191
    %v448 = vunpack.c.l.b16 %v192
    %v449 = vunpack.c.l.b16 %v193
    %v450 = vpack.c.b16 %v323, %v322
    %v451 = vpack.c.b16 %v325, %v324
    %v452 = vpack.c.b16 %v327, %v326
    %v453 = vpack.c.b16 %v329, %v328
    %v454 = vpack.c.b16 %v331, %v330
    %v455 = vpack.c.b16 %v333, %v332
    %v456 = vpack.c.b16 %v335, %v334
    %v457 = vpack.c.b16 %v337, %v336
    %v458 = vpack.c.b16 %v339, %v338
    %v459 = vpack.c.b16 %v341, %v340
    %v460 = vpack.c.b16 %v343, %v342
    %v461 = vpack.c.b16 %v345, %v344
    %v462 = vpack.c.b16 %v347, %v346
    %v463 = vpack.c.b16 %v349, %v348
    %v464 = vpack.c.b16 %v351, %v350
    %v465 = vpack.c.b16 %v353, %v352
    %v466 = vpack.c.b16 %v355, %v354
    %v467 = vpack.c.b16 %v357, %v356
    %v468 = vpack.c.b16 %v359, %v358
    %v469 = vpack.c.b16 %v361, %v360
    %v470 = vpack.c.b16 %v363, %v362
    %v471 = vpack.c.b16 %v365, %v364
    %v472 = vpack.c.b16 %v367, %v366
    %v473 = vpack.c.b16 %v369, %v368
    %v474 = vpack.c.b16 %v371, %v370
    %v475 = vpack.c.b16 %v373, %v372
    %v476 = vpack.c.b16 %v375, %v374
    %v477 = vpack.c.b16 %v377, %v376
    %v478 = vpack.c.b16 %v379, %v378
    %v479 = vpack.c.b16 %v381, %v380
    %v480 = vpack.c.b16 %v383, %v382
    %v481 = vpack.c.b16 %v385, %v384
    %v482 = vpack.c.b16 %v387, %v386
    %v483 = vpack.c.b16 %v389, %v388
    %v484 = vpack.c.b16 %v391, %v390
    %v485 = vpack.c.b16 %v393, %v392
    %v486 = vpack.c.b16 %v395, %v394
    %v487 = vpack.c.b16 %v397, %v396
    %v488 = vpack.c.b16 %v399, %v398
    %v489 = vpack.c.b16 %v401, %v400
    %v490 = vpack.c.b16 %v403, %v402
    %v491 = vpack.c.b16 %v405, %v404
    %v492 = vpack.c.b16 %v407, %v406
    %v493 = vpack.c.b16 %v409, %v408
    %v494 = vpack.c.b16 %v411, %v410
    %v495 = vpack.c.b16 %v413, %v412
    %v496 = vpack.c.b16 %v415, %v414
    %v497 = vpack.c.b16 %v417, %v416
    %v498 = vpack.c.b16 %v419, %v418
    %v499 = vpack.c.b16 %v421, %v420
    %v500 = vpack.c.b16 %v423, %v422
    %v501 = vpack.c.b16 %v425, %v424
    %v502 = vpack.c.b16 %v427, %v426
    %v503 = vpack.c.b16 %v429, %v428
    %v504 = vpack.c.b16 %v431, %v430
    %v505 = vpack.c.b16 %v433, %v432
    %v506 = vpack.c.b16 %v435, %v434
    %v507 = vpack.c.b16 %v437, %v436
    %v508 = vpack.c.b16 %v439, %v438
    %v509 = vpack.c.b16 %v441, %v440
    %v510 = vpack.c.b16 %v443, %v442
    %v511 = vpack.c.b16 %v445, %v444
    %v512 = vpack.c.b16 %v447, %v446
    %v513 = vpack.c.b16 %v449, %v448
    %578 = vmatpush.bf16.msra.mxu0 %v457
    %579 = vmatpush.bf16.msra.mxu0 %v456
    %580 = vmatpush.bf16.msra.mxu0 %v455
    %581 = vmatpush.bf16.msra.mxu0 %v454
    %582 = vmatpush.bf16.msra.mxu0 %v453
    %583 = vmatpush.bf16.msra.mxu0 %v452
    %584 = vmatpush.bf16.msra.mxu0 %v451
    %585 = vmatpush.bf16.msra.mxu0 %v450
    %586 = vmatmul.bf16.gmra.mxu0 %v58
    %v587 = vpop.f32.mrf.mxu0
    %v588 = vadd.f32 0.0, %v587
    %v589 = vpop.f32.mrf.mxu0
    %590 = vdwg.mxu0
    %591 = vmatpush.bf16.msra.mxu0 %v465
    %592 = vmatpush.bf16.msra.mxu0 %v464
    %593 = vmatpush.bf16.msra.mxu0 %v463
    %594 = vmatpush.bf16.msra.mxu0 %v462
    %595 = vmatpush.bf16.msra.mxu0 %v461
    %596 = vmatpush.bf16.msra.mxu0 %v460
    %597 = vmatpush.bf16.msra.mxu0 %v459
    %598 = vmatpush.bf16.msra.mxu0 %v458
    %599 = vmatmul.bf16.gmra.mxu0 %v59
    %v600 = vpop.f32.mrf.mxu0
    %v601 = vadd.f32 %v588, %v600
    %v602 = vpop.f32.mrf.mxu0
    %603 = vdwg.mxu0
    %604 = vmatpush.bf16.msra.mxu0 %v473
    %605 = vmatpush.bf16.msra.mxu0 %v472
    %606 = vmatpush.bf16.msra.mxu0 %v471
    %607 = vmatpush.bf16.msra.mxu0 %v470
    %608 = vmatpush.bf16.msra.mxu0 %v469
    %609 = vmatpush.bf16.msra.mxu0 %v468
    %610 = vmatpush.bf16.msra.mxu0 %v467
    %611 = vmatpush.bf16.msra.mxu0 %v466
    %612 = vmatmul.bf16.gmra.mxu0 %v60
    %v613 = vpop.f32.mrf.mxu0
    %v614 = vadd.f32 %v601, %v613
    %v615 = vpop.f32.mrf.mxu0
    %616 = vdwg.mxu0
    %617 = vmatpush.bf16.msra.mxu0 %v481
    %618 = vmatpush.bf16.msra.mxu0 %v480
    %619 = vmatpush.bf16.msra.mxu0 %v479
    %620 = vmatpush.bf16.msra.mxu0 %v478
    %621 = vmatpush.bf16.msra.mxu0 %v477
    %622 = vmatpush.bf16.msra.mxu0 %v476
    %623 = vmatpush.bf16.msra.mxu0 %v475
    %624 = vmatpush.bf16.msra.mxu0 %v474
    %625 = vmatmul.bf16.gmra.mxu0 %v61
    %v626 = vpop.f32.mrf.mxu0
    %v627 = vadd.f32 %v614, %v626
    %v628 = vpop.f32.mrf.mxu0
    %629 = vdwg.mxu0
    %630 = vmatpush.bf16.msra.mxu0 %v489
    %631 = vmatpush.bf16.msra.mxu0 %v488
    %632 = vmatpush.bf16.msra.mxu0 %v487
    %633 = vmatpush.bf16.msra.mxu0 %v486
    %634 = vmatpush.bf16.msra.mxu0 %v485
    %635 = vmatpush.bf16.msra.mxu0 %v484
    %636 = vmatpush.bf16.msra.mxu0 %v483
    %637 = vmatpush.bf16.msra.mxu0 %v482
    %638 = vmatmul.bf16.gmra.mxu0 %v62
    %v639 = vpop.f32.mrf.mxu0
    %v640 = vadd.f32 %v627, %v639
    %v641 = vpop.f32.mrf.mxu0
    %642 = vdwg.mxu0
    %643 = vmatpush.bf16.msra.mxu0 %v497
    %644 = vmatpush.bf16.msra.mxu0 %v496
    %645 = vmatpush.bf16.msra.mxu0 %v495
    %646 = vmatpush.bf16.msra.mxu0 %v494
    %647 = vmatpush.bf16.msra.mxu0 %v493
    %648 = vmatpush.bf16.msra.mxu0 %v492
    %649 = vmatpush.bf16.msra.mxu0 %v491
    %650 = vmatpush.bf16.msra.mxu0 %v490
    %651 = vmatmul.bf16.gmra.mxu0 %v63
    %v652 = vpop.f32.mrf.mxu0
    %v653 = vadd.f32 %v640, %v652
    %v654 = vpop.f32.mrf.mxu0
    %655 = vdwg.mxu0
    %656 = vmatpush.bf16.msra.mxu0 %v505
    %657 = vmatpush.bf16.msra.mxu0 %v504
    %658 = vmatpush.bf16.msra.mxu0 %v503
    %659 = vmatpush.bf16.msra.mxu0 %v502
    %660 = vmatpush.bf16.msra.mxu0 %v501
    %661 = vmatpush.bf16.msra.mxu0 %v500
    %662 = vmatpush.bf16.msra.mxu0 %v499
    %663 = vmatpush.bf16.msra.mxu0 %v498
    %664 = vmatmul.bf16.gmra.mxu0 %v64
    %v665 = vpop.f32.mrf.mxu0
    %v666 = vadd.f32 %v653, %v665
    %v667 = vpop.f32.mrf.mxu0
    %668 = vdwg.mxu0
    %669 = vmatpush.bf16.msra.mxu0 %v513
    %670 = vmatpush.bf16.msra.mxu0 %v512
    %671 = vmatpush.bf16.msra.mxu0 %v511
    %672 = vmatpush.bf16.msra.mxu0 %v510
    %673 = vmatpush.bf16.msra.mxu0 %v509
    %674 = vmatpush.bf16.msra.mxu0 %v508
    %675 = vmatpush.bf16.msra.mxu0 %v507
    %676 = vmatpush.bf16.msra.mxu0 %v506
    %677 = vmatmul.bf16.gmra.mxu0 %v65
    %v678 = vpop.f32.mrf.mxu0
    %v679 = vadd.f32 %v666, %v678
    %v680 = vpop.f32.mrf.mxu0
    %681 = vdwg.mxu0
    %v682 = vadd.f32 %v49, %v679
    %683 = vst [vmem:[#allocation2] sm:$0xff] %v682
    // Predicated region
    $region26: #{camera_param_regressor_forward.6} parent=1 // pred_check
      %p684 = pneg %p44
    $region27: #{camera_param_regressor_forward.6} parent=1 // pred_check_branch
      %686 = sbr.rel (%p684) target = $region29
    $region28: #{camera_param_regressor_forward.6} parent=1 // pred_region
      %v687 = vld [vmem:[#allocation2] sm:$0xff]
      %v688 = vld [vmem:[#allocation5] sm:$0x1]
      %v690 = vperm.slane %v688, 0
      %v692 = vadd.f32 %v687, %v690
      %v693 = vmax.f32 %v692, 0.0
      %694 = vst [vmem:[%s3] sm:$0xff] %v693
    $region29: #{camera_param_regressor_forward.6} parent=1 // pred_fallthru
      _
    // Predicated region
    $region30: #{camera_param_regressor_forward.6} parent=1 // pred_check
      _
    $region31: #{camera_param_regressor_forward.6} parent=1 // pred_check_branch
      %696 = sbr.rel (0) target = $region33
    $region32: #{camera_param_regressor_forward.6} parent=1 // pred_region
      _
    $region33: #{camera_param_regressor_forward.6} parent=1 // pred_fallthru
      _
    // Predicated region
    $region34: #{camera_param_regressor_forward.6} parent=1 // pred_check
      _
    $region35: #{camera_param_regressor_forward.6} parent=1 // pred_check_branch
      %698 = sbr.rel (0) target = $region37
    $region36: #{camera_param_regressor_forward.6} parent=1 // pred_region
      _
    $region37: #{camera_param_regressor_forward.6} parent=1 // pred_fallthru
      _
    %699 = vsyncpa [#allocation4], 1
    %700 = vsyncpa [#allocation6], 1

// kernel: camera_param_regressor_forward.7
$region0: #{camera_param_regressor_forward.7}
  #allocation0 [shape = 'u32[]', space=smem, size = 0x4, offset = 0x4, fixed_abs, tag = 'smem constant byte address 0x4 - core index']
  #allocation1 [shape = 'u32[72,128]{1,0:T(1,128)}', space=vmem, size = 0x9000, scoped, tag = 'internal scratch']
  #allocation2 [shape = 'f32[8,128]{1,0:T(8,128)}', space=vmem, size = 0x1000, scoped, tag = 'scratch operand']
  %s0 = inlined_call_operand.vmem [shape: f32[8,128], index: 0, kind: input, shape index: {}]
  %s1 = inlined_call_operand.vmem [shape: bf16[128,128], index: 1, kind: input, shape index: {}]
  %s2 = inlined_call_operand.vmem [shape: f32[1,128], index: 2, kind: input, shape index: {}]
  %s3 = inlined_call_operand.vmem [shape: f32[8,128], index: 3, kind: output, shape index: {}]
  %s4 = sld [smem:[#allocation0]]
  $region30: #{camera_param_regressor_forward.7} parent=0
    _
  %s6 = ssub.s32 1, %s4
  %s7 = scalar_select 0, %s6, %s4
  // Predicated region
  $region2: #{camera_param_regressor_forward.7} parent=0 // pred_check
    _
  $region3: #{camera_param_regressor_forward.7} parent=0 // pred_check_branch
    %9 = sbr.rel (0) target = $region5
  $region4: #{camera_param_regressor_forward.7} parent=0 // pred_region
    _
  $region5: #{camera_param_regressor_forward.7} parent=0 // pred_fallthru
    _
  // Predicated region
  $region6: #{camera_param_regressor_forward.7} parent=0 // pred_check
    _
  $region7: #{camera_param_regressor_forward.7} parent=0 // pred_check_branch
    %11 = sbr.rel (0) target = $region9
  $region8: #{camera_param_regressor_forward.7} parent=0 // pred_region
    _
  $region9: #{camera_param_regressor_forward.7} parent=0 // pred_fallthru
    _
  // Predicated region
  $region10: #{camera_param_regressor_forward.7} parent=0 // pred_check
    _
  $region11: #{camera_param_regressor_forward.7} parent=0 // pred_check_branch
    %13 = sbr.rel (0) target = $region13
  $region12: #{camera_param_regressor_forward.7} parent=0 // pred_region
    _
  $region13: #{camera_param_regressor_forward.7} parent=0 // pred_fallthru
    _
  %p14 = scmp.eq.s32.totalorder 0, 0
  // Predicated region
  $region14: #{camera_param_regressor_forward.7} parent=0 // pred_check
    %p15 = pneg %p14
  $region15: #{camera_param_regressor_forward.7} parent=0 // pred_check_branch
    %17 = sbr.rel (%p15) target = $region17
  $region16: #{camera_param_regressor_forward.7} parent=0 // pred_region
    %18 = vst [vmem:[#allocation2] sm:$0xff] 0.0
  $region17: #{camera_param_regressor_forward.7} parent=0 // pred_fallthru
    _
  %v19 = vld [vmem:[#allocation2] sm:$0xff]
  %v20 = vld [vmem:[%s0] sm:$0xff]
  %v21 = vpack.c.bf16 %v20, %v20
  %v22 = vld [vmem:[%s1] sm:$0xf]
  %v23 = vld [vmem:[%s1 + $0x4] sm:$0xf]
  %v24 = vld [vmem:[%s1 + $0x8] sm:$0xf]
  %v25 = vld [vmem:[%s1 + $0xc] sm:$0xf]
  %v26 = vld [vmem:[%s1 + $0x10] sm:$0xf]
  %v27 = vld [vmem:[%s1 + $0x14] sm:$0xf]
  %v28 = vld [vmem:[%s1 + $0x18] sm:$0xf]
  %v29 = vld [vmem:[%s1 + $0x1c] sm:$0xf]
  %v30 = vld [vmem:[%s1 + $0x20] sm:$0xf]
  %v31 = vld [vmem:[%s1 + $0x24] sm:$0xf]
  %v32 = vld [vmem:[%s1 + $0x28] sm:$0xf]
  %v33 = vld [vmem:[%s1 + $0x2c] sm:$0xf]
  %v34 = vld [vmem:[%s1 + $0x30] sm:$0xf]
  %v35 = vld [vmem:[%s1 + $0x34] sm:$0xf]
  %v36 = vld [vmem:[%s1 + $0x38] sm:$0xf]
  %v37 = vld [vmem:[%s1 + $0x3c] sm:$0xf]
  %v54 = vunpack.c.l.b16 %v22
  %v55 = vunpack.c.l.b16 %v23
  %v56 = vunpack.c.l.b16 %v24
  %v57 = vunpack.c.l.b16 %v25
  %v58 = vunpack.c.l.b16 %v26
  %v59 = vunpack.c.l.b16 %v27
  %v60 = vunpack.c.l.b16 %v28
  %v61 = vunpack.c.l.b16 %v29
  %v62 = vunpack.c.l.b16 %v30
  %v63 = vunpack.c.l.b16 %v31
  %v64 = vunpack.c.l.b16 %v32
  %v65 = vunpack.c.l.b16 %v33
  %v66 = vunpack.c.l.b16 %v34
  %v67 = vunpack.c.l.b16 %v35
  %v68 = vunpack.c.l.b16 %v36
  %v69 = vunpack.c.l.b16 %v37
  %v70 = vpack.c.b16 %v55, %v54
  %v71 = vpack.c.b16 %v57, %v56
  %v72 = vpack.c.b16 %v59, %v58
  %v73 = vpack.c.b16 %v61, %v60
  %v74 = vpack.c.b16 %v63, %v62
  %v75 = vpack.c.b16 %v65, %v64
  %v76 = vpack.c.b16 %v67, %v66
  %v77 = vpack.c.b16 %v69, %v68
  %86 = vmatpush.bf16.msra.mxu0 %v77
  %87 = vmatpush.bf16.msra.mxu0 %v76
  %88 = vmatpush.bf16.msra.mxu0 %v75
  %89 = vmatpush.bf16.msra.mxu0 %v74
  %90 = vmatpush.bf16.msra.mxu0 %v73
  %91 = vmatpush.bf16.msra.mxu0 %v72
  %92 = vmatpush.bf16.msra.mxu0 %v71
  %93 = vmatpush.bf16.msra.mxu0 %v70
  %94 = vmatmul.bf16.gmra.mxu0 %v21
  %v95 = vpop.f32.mrf.mxu0
  %v96 = vadd.f32 0.0, %v95
  %v97 = vpop.f32.mrf.mxu0
  %98 = vdwg.mxu0
  %v99 = vadd.f32 %v19, %v96
  %100 = vst [vmem:[#allocation2] sm:$0xff] %v99
  // Predicated region
  $region18: #{camera_param_regressor_forward.7} parent=0 // pred_check
    %p101 = pneg %p14
  $region19: #{camera_param_regressor_forward.7} parent=0 // pred_check_branch
    %103 = sbr.rel (%p101) target = $region21
  $region20: #{camera_param_regressor_forward.7} parent=0 // pred_region
    %v104 = vld [vmem:[#allocation2] sm:$0xff]
    %v105 = vld [vmem:[%s2] sm:$0x1]
    %v107 = vperm.slane %v105, 0
    %v109 = vadd.f32 %v104, %v107
    %110 = vst [vmem:[%s3] sm:$0xff] %v109
  $region21: #{camera_param_regressor_forward.7} parent=0 // pred_fallthru
    _
  // Predicated region
  $region22: #{camera_param_regressor_forward.7} parent=0 // pred_check
    _
  $region23: #{camera_param_regressor_forward.7} parent=0 // pred_check_branch
    %112 = sbr.rel (0) target = $region25
  $region24: #{camera_param_regressor_forward.7} parent=0 // pred_region
    _
  $region25: #{camera_param_regressor_forward.7} parent=0 // pred_fallthru
    _
  // Predicated region
  $region26: #{camera_param_regressor_forward.7} parent=0 // pred_check
    _
  $region27: #{camera_param_regressor_forward.7} parent=0 // pred_check_branch
    %114 = sbr.rel (0) target = $region29
  $region28: #{camera_param_regressor_forward.7} parent=0 // pred_region
    _
  $region29: #{camera_param_regressor_forward.7} parent=0 // pred_fallthru
    _

</llo_original>
